<compile_context>
chip_gen: v7x
topology: tpu7x:2x2x1
jax: 0.10.0
libtpu: 0.0.40
codegen_flags: <defaults>
</compile_context>

<pallas_src>
import jax
import jax.numpy as jnp
import numpy as np
from jax.experimental import pallas as pl
from jax.experimental.pallas import tpu as pltpu

EPS = 1e-5          # BatchNorm eps
NEG_SLOPE = 0.01    # LeakyReLU negative slope
LANE = 128


def _round_up(x, m):
    return (x + m - 1) // m * m


def _make_conv_stats_kernel(D, H, W, Cin, Cout_pad, m_total):
    """Pass A: conv3x3x3 + bias, write y, accumulate BN stats, finalize scale/shift."""
    HW = H * W

    def kernel(x_ref, w_ref, b_ref, g_ref, beta_ref, y_ref, stats_ref):
        d = pl.program_id(1)

        @pl.when((pl.program_id(0) == 0) & (pl.program_id(1) == 0))
        def _init():
            stats_ref[...] = jnp.zeros_like(stats_ref)

        # Conv3d(k=3, s=1, p=1) as 27 accumulated MXU matmuls over shifted windows of
        # the VMEM-resident padded input tile (no im2col ever touches HBM).
        acc = jnp.zeros((HW, Cout_pad), jnp.float32)
        for kd in range(3):
            for kh in range(3):
                for kw in range(3):
                    tap = (kd * 3 + kh) * 3 + kw
                    win = x_ref[0, d + kd, kh:kh + H, kw:kw + W, :]      # (H, W, Cin)
                    acc = acc + jnp.dot(win.reshape(HW, Cin), w_ref[tap],
                                        preferred_element_type=jnp.float32)
        acc = acc + b_ref[...]                                           # conv bias
        # TODO(synk): Dropout3d is a no-op because dropout_p == 0.0 (module default).
        y_ref[0] = acc

        # BatchNorm batch statistics: single pass, f32 accumulation of sum / sum-of-squares.
        stats_ref[0:1, :] = stats_ref[0:1, :] + jnp.sum(acc, axis=0, keepdims=True)
        stats_ref[1:2, :] = stats_ref[1:2, :] + jnp.sum(acc * acc, axis=0, keepdims=True)

        @pl.when((pl.program_id(0) == pl.num_programs(0) - 1)
                 & (pl.program_id(1) == pl.num_programs(1) - 1))
        def _finalize():
            inv_m = 1.0 / float(m_total)
            mean = stats_ref[0:1, :] * inv_m
            var = stats_ref[1:2, :] * inv_m - mean * mean                # biased variance
            scale = g_ref[...] * jax.lax.rsqrt(var + EPS)                # rsqrt -> EUP slot
            shift = beta_ref[...] - mean * scale
            stats_ref[0:1, :] = scale
            stats_ref[1:2, :] = shift

    return kernel


def _bn_act_kernel(ss_ref, y_ref, o_ref):
    """Pass B: fused BN affine (one FMA) + LeakyReLU(0.01)."""
    z = y_ref[...] * ss_ref[0:1, :] + ss_ref[1:2, :]
    o_ref[...] = jnp.where(z >= 0, z, NEG_SLOPE * z)


@jax.jit
def conv_dropout_norm_nonlin(x_ncdhw, weight, bias, gamma, beta):
    """x: (N, Cin, D, H, W) f32; weight: (Cout, Cin, 3, 3, 3); bias/gamma/beta: (Cout,)."""
    N, Cin, D, H, W = x_ncdhw.shape
    Cout = weight.shape[0]
    Cout_pad = _round_up(Cout, LANE)
    HW = H * W
    M = N * D * HW

    # ---- layout glue (no 27x im2col; just a halo pad + channels-last transpose) ----
    x = jnp.transpose(x_ncdhw, (0, 2, 3, 4, 1)).astype(jnp.float32)      # NDHWC
    x_pad = jnp.pad(x, ((0, 0), (1, 1), (1, 1), (1, 1), (0, 0)))         # halo of 1

    # weight -> (27, Cin, Cout_pad), tap order (kd, kh, kw); zero-pad Cout to 128 lanes.
    w_taps = jnp.transpose(weight, (2, 3, 4, 1, 0)).reshape(27, Cin, Cout)
    w_taps = jnp.pad(w_taps.astype(jnp.float32), ((0, 0), (0, 0), (0, Cout_pad - Cout)))
    pad_row = lambda v: jnp.pad(v.reshape(1, Cout).astype(jnp.float32),
                                ((0, 0), (0, Cout_pad - Cout)))
    b_row, g_row, beta_row = pad_row(bias), pad_row(gamma), pad_row(beta)

    # ---- pass A: conv + bias + batch-stat accumulation (sequential grid) ----
    y, scale_shift = pl.pallas_call(
        _make_conv_stats_kernel(D, H, W, Cin, Cout_pad, M),
        out_shape=(jax.ShapeDtypeStruct((N * D, HW, Cout_pad), jnp.float32),
                   jax.ShapeDtypeStruct((8, Cout_pad), jnp.float32)),
        grid=(N, D),
        in_specs=[
            pl.BlockSpec((1, D + 2, H + 2, W + 2, Cin), lambda n, d: (n, 0, 0, 0, 0)),
            pl.BlockSpec((27, Cin, Cout_pad), lambda n, d: (0, 0, 0)),
            pl.BlockSpec((1, Cout_pad), lambda n, d: (0, 0)),
            pl.BlockSpec((1, Cout_pad), lambda n, d: (0, 0)),
            pl.BlockSpec((1, Cout_pad), lambda n, d: (0, 0)),
        ],
        out_specs=(
            pl.BlockSpec((1, HW, Cout_pad), lambda n, d: (n * D + d, 0, 0)),
            pl.BlockSpec((8, Cout_pad), lambda n, d: (0, 0)),
        ),
        compiler_params=pltpu.CompilerParams(
            dimension_semantics=("arbitrary", "arbitrary")),   # stats accumulate across grid
    )(x_pad, w_taps, b_row, g_row, beta_row)

    # ---- pass B: y*scale + shift, LeakyReLU (tiled over M, megacore-parallel) ----
    y_flat = y.reshape(M, Cout_pad)
    TM = next((t for t in (512, 256, 128, 64, 32, 16, 8) if M % t == 0), M)
    out_flat = pl.pallas_call(
        _bn_act_kernel,
        out_shape=jax.ShapeDtypeStruct((M, Cout_pad), jnp.float32),
        grid=(M // TM,),
        in_specs=[pl.BlockSpec((8, Cout_pad), lambda i: (0, 0)),
                  pl.BlockSpec((TM, Cout_pad), lambda i: (i, 0))],
        out_specs=pl.BlockSpec((TM, Cout_pad), lambda i: (i, 0)),
        compiler_params=pltpu.CompilerParams(dimension_semantics=("parallel",)),
    )(scale_shift, y_flat)

    # back to PyTorch NCDHW output layout, dropping the Cout padding
    out = out_flat[:, :Cout].reshape(N, D, H, W, Cout)
    return jnp.transpose(out, (0, 4, 1, 2, 3))


def _reference(x, weight, bias, gamma, beta):
    """Pure-JAX reference with identical semantics (for verification)."""
    y = jax.lax.conv_general_dilated(
        x, weight, window_strides=(1, 1, 1), padding=[(1, 1)] * 3,
        dimension_numbers=("NCDHW", "OIDHW", "NCDHW"))
    y = y + bias.reshape(1, -1, 1, 1, 1)
    mean = jnp.mean(y, axis=(0, 2, 3, 4), keepdims=True)
    var = jnp.mean((y - mean) ** 2, axis=(0, 2, 3, 4), keepdims=True)
    y = (y - mean) / jnp.sqrt(var + EPS)
    y = y * gamma.reshape(1, -1, 1, 1, 1) + beta.reshape(1, -1, 1, 1, 1)
    return jnp.where(y >= 0, y, NEG_SLOPE * y)


if __name__ == "__main__":
    key = jax.random.PRNGKey(0)
    kx, kw, kb = jax.random.split(key, 3)

    N, Cin, Cout, D, H, W = 2, 4, 8, 8, 8, 8
    x = jax.random.normal(kx, (N, Cin, D, H, W), jnp.float32)

    # Deterministic synthetic parameters (PyTorch-style shapes / init ranges).
    fan_in = Cin * 3 * 3 * 3
    bound = 1.0 / np.sqrt(fan_in)
    weight = jax.random.uniform(kw, (Cout, Cin, 3, 3, 3), jnp.float32, -bound, bound)
    bias = jax.random.uniform(kb, (Cout,), jnp.float32, -bound, bound)
    gamma = jnp.ones((Cout,), jnp.float32)   # BatchNorm affine init
    beta = jnp.zeros((Cout,), jnp.float32)

    out = jax.block_until_ready(conv_dropout_norm_nonlin(x, weight, bias, gamma, beta))
    ref = _reference(x, weight, bias, gamma, beta)
    np.testing.assert_allclose(np.asarray(out), np.asarray(ref), rtol=2e-3, atol=2e-3)
    print("KERNEL_OK")
</pallas_src>

<mosaic_0001>
module attributes {stable_mosaic.version = 11 : i64} {
  func.func @kernel(%arg0: i32, %arg1: i32, %arg2: memref<1x10x10x10x4xf32, #tpu.memory_space<vmem>>, %arg3: memref<27x4x128xf32, #tpu.memory_space<vmem>>, %arg4: memref<1x128xf32, #tpu.memory_space<vmem>>, %arg5: memref<1x128xf32, #tpu.memory_space<vmem>>, %arg6: memref<1x128xf32, #tpu.memory_space<vmem>>, %arg7: memref<1x64x128xf32, #tpu.memory_space<vmem>>, %arg8: memref<8x128xf32, #tpu.memory_space<vmem>>) attributes {dimension_semantics = [#tpu.dimension_semantics<arbitrary>, #tpu.dimension_semantics<arbitrary>], iteration_bounds = array<i64: 2, 8>, scalar_prefetch = 0 : i64, scratch_operands = 0 : i64, tpu.core_type = #tpu.core_type<tc>, window_params = [{transform_indices = @transform_0, window_bounds = array<i64: 1, 10, 10, 10, 4>}, {pipeline_mode = #tpu.pipeline_mode<synchronous>, transform_indices = @transform_1, window_bounds = array<i64: 27, 4, 128>}, {pipeline_mode = #tpu.pipeline_mode<synchronous>, transform_indices = @transform_2, window_bounds = array<i64: 1, 128>}, {pipeline_mode = #tpu.pipeline_mode<synchronous>, transform_indices = @transform_3, window_bounds = array<i64: 1, 128>}, {pipeline_mode = #tpu.pipeline_mode<synchronous>, transform_indices = @transform_4, window_bounds = array<i64: 1, 128>}, {transform_indices = @transform_5, window_bounds = array<i64: 1, 64, 128>}, {pipeline_mode = #tpu.pipeline_mode<synchronous>, transform_indices = @transform_6, window_bounds = array<i64: 8, 128>}]} {
    %c0_i32 = arith.constant 0 : i32
    %0 = arith.cmpi eq, %arg0, %c0_i32 : i32
    %c0_i32_0 = arith.constant 0 : i32
    %1 = arith.cmpi eq, %arg1, %c0_i32_0 : i32
    %2 = arith.andi %0, %1 : i1
    %3 = arith.extui %2 : i1 to i32
    %c0_i32_1 = arith.constant 0 : i32
    %4 = arith.cmpi ne, %3, %c0_i32_1 : i32
    scf.if %4 {
      %cst_233 = arith.constant 0.000000e+00 : f32
      %271 = vector.broadcast %cst_233 : f32 to vector<8x128xf32>
      %c0_234 = arith.constant 0 : index
      %c0_235 = arith.constant 0 : index
      %272 = vector.load %arg8[%c0_234, %c0_235] : memref<8x128xf32, #tpu.memory_space<vmem>>, vector<8x128xf32>
      tpu.vector_store %arg8[%c0_234, %c0_235], %271 {strides = array<i32>} : memref<8x128xf32, #tpu.memory_space<vmem>>, vector<8x128xf32>,
    } else {
    }
    %cst = arith.constant 0.000000e+00 : f32
    %5 = vector.broadcast %cst : f32 to vector<64x128xf32>
    %c0_i32_2 = arith.constant 0 : i32
    %6 = arith.addi %arg1, %c0_i32_2 : i32
    %c0 = arith.constant 0 : index
    %7 = arith.index_cast %6 : i32 to index
    %c0_3 = arith.constant 0 : index
    %c0_4 = arith.constant 0 : index
    %c0_5 = arith.constant 0 : index
    %8 = vector.load %arg2[%c0, %7, %c0_3, %c0_4, %c0_5] : memref<1x10x10x10x4xf32, #tpu.memory_space<vmem>>, vector<1x1x8x8x4xf32>
    %9 = vector.shape_cast %8 : vector<1x1x8x8x4xf32> to vector<8x8x4xf32>
    %10 = vector.shape_cast %9 : vector<8x8x4xf32> to vector<64x4xf32>
    %c0_6 = arith.constant 0 : index
    %c0_7 = arith.constant 0 : index
    %c0_8 = arith.constant 0 : index
    %11 = vector.load %arg3[%c0_6, %c0_7, %c0_8] : memref<27x4x128xf32, #tpu.memory_space<vmem>>, vector<1x4x128xf32>
    %12 = vector.shape_cast %11 : vector<1x4x128xf32> to vector<4x128xf32>
    %cst_9 = arith.constant dense<0.000000e+00> : vector<64x128xf32>
    %13 = tpu.matmul %10, %12, %cst_9 {dimension_numbers = #tpu.dot_dimension_numbers<[1], [0], [0], [1], [0, 0, 1, 1], [], []>} : vector<64x4xf32>, vector<4x128xf32>, vector<64x128xf32> -> vector<64x128xf32>
    %14 = arith.addf %5, %13 : vector<64x128xf32>
    %c0_i32_10 = arith.constant 0 : i32
    %15 = arith.addi %arg1, %c0_i32_10 : i32
    %c0_11 = arith.constant 0 : index
    %16 = arith.index_cast %15 : i32 to index
    %c0_12 = arith.constant 0 : index
    %c1 = arith.constant 1 : index
    %c0_13 = arith.constant 0 : index
    %17 = vector.load %arg2[%c0_11, %16, %c0_12, %c1, %c0_13] : memref<1x10x10x10x4xf32, #tpu.memory_space<vmem>>, vector<1x1x8x8x4xf32>
    %18 = vector.shape_cast %17 : vector<1x1x8x8x4xf32> to vector<8x8x4xf32>
    %19 = vector.shape_cast %18 : vector<8x8x4xf32> to vector<64x4xf32>
    %c1_14 = arith.constant 1 : index
    %c0_15 = arith.constant 0 : index
    %c0_16 = arith.constant 0 : index
    %20 = vector.load %arg3[%c1_14, %c0_15, %c0_16] : memref<27x4x128xf32, #tpu.memory_space<vmem>>, vector<1x4x128xf32>
    %21 = vector.shape_cast %20 : vector<1x4x128xf32> to vector<4x128xf32>
    %cst_17 = arith.constant dense<0.000000e+00> : vector<64x128xf32>
    %22 = tpu.matmul %19, %21, %cst_17 {dimension_numbers = #tpu.dot_dimension_numbers<[1], [0], [0], [1], [0, 0, 1, 1], [], []>} : vector<64x4xf32>, vector<4x128xf32>, vector<64x128xf32> -> vector<64x128xf32>
    %23 = arith.addf %14, %22 : vector<64x128xf32>
    %c0_i32_18 = arith.constant 0 : i32
    %24 = arith.addi %arg1, %c0_i32_18 : i32
    %c0_19 = arith.constant 0 : index
    %25 = arith.index_cast %24 : i32 to index
    %c0_20 = arith.constant 0 : index
    %c2 = arith.constant 2 : index
    %c0_21 = arith.constant 0 : index
    %26 = vector.load %arg2[%c0_19, %25, %c0_20, %c2, %c0_21] : memref<1x10x10x10x4xf32, #tpu.memory_space<vmem>>, vector<1x1x8x8x4xf32>
    %27 = vector.shape_cast %26 : vector<1x1x8x8x4xf32> to vector<8x8x4xf32>
    %28 = vector.shape_cast %27 : vector<8x8x4xf32> to vector<64x4xf32>
    %c2_22 = arith.constant 2 : index
    %c0_23 = arith.constant 0 : index
    %c0_24 = arith.constant 0 : index
    %29 = vector.load %arg3[%c2_22, %c0_23, %c0_24] : memref<27x4x128xf32, #tpu.memory_space<vmem>>, vector<1x4x128xf32>
    %30 = vector.shape_cast %29 : vector<1x4x128xf32> to vector<4x128xf32>
    %cst_25 = arith.constant dense<0.000000e+00> : vector<64x128xf32>
    %31 = tpu.matmul %28, %30, %cst_25 {dimension_numbers = #tpu.dot_dimension_numbers<[1], [0], [0], [1], [0, 0, 1, 1], [], []>} : vector<64x4xf32>, vector<4x128xf32>, vector<64x128xf32> -> vector<64x128xf32>
    %32 = arith.addf %23, %31 : vector<64x128xf32>
    %c0_i32_26 = arith.constant 0 : i32
    %33 = arith.addi %arg1, %c0_i32_26 : i32
    %c0_27 = arith.constant 0 : index
    %34 = arith.index_cast %33 : i32 to index
    %c1_28 = arith.constant 1 : index
    %c0_29 = arith.constant 0 : index
    %c0_30 = arith.constant 0 : index
    %35 = vector.load %arg2[%c0_27, %34, %c1_28, %c0_29, %c0_30] : memref<1x10x10x10x4xf32, #tpu.memory_space<vmem>>, vector<1x1x8x8x4xf32>
    %36 = vector.shape_cast %35 : vector<1x1x8x8x4xf32> to vector<8x8x4xf32>
    %37 = vector.shape_cast %36 : vector<8x8x4xf32> to vector<64x4xf32>
    %c3 = arith.constant 3 : index
    %c0_31 = arith.constant 0 : index
    %c0_32 = arith.constant 0 : index
    %38 = vector.load %arg3[%c3, %c0_31, %c0_32] : memref<27x4x128xf32, #tpu.memory_space<vmem>>, vector<1x4x128xf32>
    %39 = vector.shape_cast %38 : vector<1x4x128xf32> to vector<4x128xf32>
    %cst_33 = arith.constant dense<0.000000e+00> : vector<64x128xf32>
    %40 = tpu.matmul %37, %39, %cst_33 {dimension_numbers = #tpu.dot_dimension_numbers<[1], [0], [0], [1], [0, 0, 1, 1], [], []>} : vector<64x4xf32>, vector<4x128xf32>, vector<64x128xf32> -> vector<64x128xf32>
    %41 = arith.addf %32, %40 : vector<64x128xf32>
    %c0_i32_34 = arith.constant 0 : i32
    %42 = arith.addi %arg1, %c0_i32_34 : i32
    %c0_35 = arith.constant 0 : index
    %43 = arith.index_cast %42 : i32 to index
    %c1_36 = arith.constant 1 : index
    %c1_37 = arith.constant 1 : index
    %c0_38 = arith.constant 0 : index
    %44 = vector.load %arg2[%c0_35, %43, %c1_36, %c1_37, %c0_38] : memref<1x10x10x10x4xf32, #tpu.memory_space<vmem>>, vector<1x1x8x8x4xf32>
    %45 = vector.shape_cast %44 : vector<1x1x8x8x4xf32> to vector<8x8x4xf32>
    %46 = vector.shape_cast %45 : vector<8x8x4xf32> to vector<64x4xf32>
    %c4 = arith.constant 4 : index
    %c0_39 = arith.constant 0 : index
    %c0_40 = arith.constant 0 : index
    %47 = vector.load %arg3[%c4, %c0_39, %c0_40] : memref<27x4x128xf32, #tpu.memory_space<vmem>>, vector<1x4x128xf32>
    %48 = vector.shape_cast %47 : vector<1x4x128xf32> to vector<4x128xf32>
    %cst_41 = arith.constant dense<0.000000e+00> : vector<64x128xf32>
    %49 = tpu.matmul %46, %48, %cst_41 {dimension_numbers = #tpu.dot_dimension_numbers<[1], [0], [0], [1], [0, 0, 1, 1], [], []>} : vector<64x4xf32>, vector<4x128xf32>, vector<64x128xf32> -> vector<64x128xf32>
    %50 = arith.addf %41, %49 : vector<64x128xf32>
    %c0_i32_42 = arith.constant 0 : i32
    %51 = arith.addi %arg1, %c0_i32_42 : i32
    %c0_43 = arith.constant 0 : index
    %52 = arith.index_cast %51 : i32 to index
    %c1_44 = arith.constant 1 : index
    %c2_45 = arith.constant 2 : index
    %c0_46 = arith.constant 0 : index
    %53 = vector.load %arg2[%c0_43, %52, %c1_44, %c2_45, %c0_46] : memref<1x10x10x10x4xf32, #tpu.memory_space<vmem>>, vector<1x1x8x8x4xf32>
    %54 = vector.shape_cast %53 : vector<1x1x8x8x4xf32> to vector<8x8x4xf32>
    %55 = vector.shape_cast %54 : vector<8x8x4xf32> to vector<64x4xf32>
    %c5 = arith.constant 5 : index
    %c0_47 = arith.constant 0 : index
    %c0_48 = arith.constant 0 : index
    %56 = vector.load %arg3[%c5, %c0_47, %c0_48] : memref<27x4x128xf32, #tpu.memory_space<vmem>>, vector<1x4x128xf32>
    %57 = vector.shape_cast %56 : vector<1x4x128xf32> to vector<4x128xf32>
    %cst_49 = arith.constant dense<0.000000e+00> : vector<64x128xf32>
    %58 = tpu.matmul %55, %57, %cst_49 {dimension_numbers = #tpu.dot_dimension_numbers<[1], [0], [0], [1], [0, 0, 1, 1], [], []>} : vector<64x4xf32>, vector<4x128xf32>, vector<64x128xf32> -> vector<64x128xf32>
    %59 = arith.addf %50, %58 : vector<64x128xf32>
    %c0_i32_50 = arith.constant 0 : i32
    %60 = arith.addi %arg1, %c0_i32_50 : i32
    %c0_51 = arith.constant 0 : index
    %61 = arith.index_cast %60 : i32 to index
    %c2_52 = arith.constant 2 : index
    %c0_53 = arith.constant 0 : index
    %c0_54 = arith.constant 0 : index
    %62 = vector.load %arg2[%c0_51, %61, %c2_52, %c0_53, %c0_54] : memref<1x10x10x10x4xf32, #tpu.memory_space<vmem>>, vector<1x1x8x8x4xf32>
    %63 = vector.shape_cast %62 : vector<1x1x8x8x4xf32> to vector<8x8x4xf32>
    %64 = vector.shape_cast %63 : vector<8x8x4xf32> to vector<64x4xf32>
    %c6 = arith.constant 6 : index
    %c0_55 = arith.constant 0 : index
    %c0_56 = arith.constant 0 : index
    %65 = vector.load %arg3[%c6, %c0_55, %c0_56] : memref<27x4x128xf32, #tpu.memory_space<vmem>>, vector<1x4x128xf32>
    %66 = vector.shape_cast %65 : vector<1x4x128xf32> to vector<4x128xf32>
    %cst_57 = arith.constant dense<0.000000e+00> : vector<64x128xf32>
    %67 = tpu.matmul %64, %66, %cst_57 {dimension_numbers = #tpu.dot_dimension_numbers<[1], [0], [0], [1], [0, 0, 1, 1], [], []>} : vector<64x4xf32>, vector<4x128xf32>, vector<64x128xf32> -> vector<64x128xf32>
    %68 = arith.addf %59, %67 : vector<64x128xf32>
    %c0_i32_58 = arith.constant 0 : i32
    %69 = arith.addi %arg1, %c0_i32_58 : i32
    %c0_59 = arith.constant 0 : index
    %70 = arith.index_cast %69 : i32 to index
    %c2_60 = arith.constant 2 : index
    %c1_61 = arith.constant 1 : index
    %c0_62 = arith.constant 0 : index
    %71 = vector.load %arg2[%c0_59, %70, %c2_60, %c1_61, %c0_62] : memref<1x10x10x10x4xf32, #tpu.memory_space<vmem>>, vector<1x1x8x8x4xf32>
    %72 = vector.shape_cast %71 : vector<1x1x8x8x4xf32> to vector<8x8x4xf32>
    %73 = vector.shape_cast %72 : vector<8x8x4xf32> to vector<64x4xf32>
    %c7 = arith.constant 7 : index
    %c0_63 = arith.constant 0 : index
    %c0_64 = arith.constant 0 : index
    %74 = vector.load %arg3[%c7, %c0_63, %c0_64] : memref<27x4x128xf32, #tpu.memory_space<vmem>>, vector<1x4x128xf32>
    %75 = vector.shape_cast %74 : vector<1x4x128xf32> to vector<4x128xf32>
    %cst_65 = arith.constant dense<0.000000e+00> : vector<64x128xf32>
    %76 = tpu.matmul %73, %75, %cst_65 {dimension_numbers = #tpu.dot_dimension_numbers<[1], [0], [0], [1], [0, 0, 1, 1], [], []>} : vector<64x4xf32>, vector<4x128xf32>, vector<64x128xf32> -> vector<64x128xf32>
    %77 = arith.addf %68, %76 : vector<64x128xf32>
    %c0_i32_66 = arith.constant 0 : i32
    %78 = arith.addi %arg1, %c0_i32_66 : i32
    %c0_67 = arith.constant 0 : index
    %79 = arith.index_cast %78 : i32 to index
    %c2_68 = arith.constant 2 : index
    %c2_69 = arith.constant 2 : index
    %c0_70 = arith.constant 0 : index
    %80 = vector.load %arg2[%c0_67, %79, %c2_68, %c2_69, %c0_70] : memref<1x10x10x10x4xf32, #tpu.memory_space<vmem>>, vector<1x1x8x8x4xf32>
    %81 = vector.shape_cast %80 : vector<1x1x8x8x4xf32> to vector<8x8x4xf32>
    %82 = vector.shape_cast %81 : vector<8x8x4xf32> to vector<64x4xf32>
    %c8 = arith.constant 8 : index
    %c0_71 = arith.constant 0 : index
    %c0_72 = arith.constant 0 : index
    %83 = vector.load %arg3[%c8, %c0_71, %c0_72] : memref<27x4x128xf32, #tpu.memory_space<vmem>>, vector<1x4x128xf32>
    %84 = vector.shape_cast %83 : vector<1x4x128xf32> to vector<4x128xf32>
    %cst_73 = arith.constant dense<0.000000e+00> : vector<64x128xf32>
    %85 = tpu.matmul %82, %84, %cst_73 {dimension_numbers = #tpu.dot_dimension_numbers<[1], [0], [0], [1], [0, 0, 1, 1], [], []>} : vector<64x4xf32>, vector<4x128xf32>, vector<64x128xf32> -> vector<64x128xf32>
    %86 = arith.addf %77, %85 : vector<64x128xf32>
    %c1_i32 = arith.constant 1 : i32
    %87 = arith.addi %arg1, %c1_i32 : i32
    %c0_74 = arith.constant 0 : index
    %88 = arith.index_cast %87 : i32 to index
    %c0_75 = arith.constant 0 : index
    %c0_76 = arith.constant 0 : index
    %c0_77 = arith.constant 0 : index
    %89 = vector.load %arg2[%c0_74, %88, %c0_75, %c0_76, %c0_77] : memref<1x10x10x10x4xf32, #tpu.memory_space<vmem>>, vector<1x1x8x8x4xf32>
    %90 = vector.shape_cast %89 : vector<1x1x8x8x4xf32> to vector<8x8x4xf32>
    %91 = vector.shape_cast %90 : vector<8x8x4xf32> to vector<64x4xf32>
    %c9 = arith.constant 9 : index
    %c0_78 = arith.constant 0 : index
    %c0_79 = arith.constant 0 : index
    %92 = vector.load %arg3[%c9, %c0_78, %c0_79] : memref<27x4x128xf32, #tpu.memory_space<vmem>>, vector<1x4x128xf32>
    %93 = vector.shape_cast %92 : vector<1x4x128xf32> to vector<4x128xf32>
    %cst_80 = arith.constant dense<0.000000e+00> : vector<64x128xf32>
    %94 = tpu.matmul %91, %93, %cst_80 {dimension_numbers = #tpu.dot_dimension_numbers<[1], [0], [0], [1], [0, 0, 1, 1], [], []>} : vector<64x4xf32>, vector<4x128xf32>, vector<64x128xf32> -> vector<64x128xf32>
    %95 = arith.addf %86, %94 : vector<64x128xf32>
    %c1_i32_81 = arith.constant 1 : i32
    %96 = arith.addi %arg1, %c1_i32_81 : i32
    %c0_82 = arith.constant 0 : index
    %97 = arith.index_cast %96 : i32 to index
    %c0_83 = arith.constant 0 : index
    %c1_84 = arith.constant 1 : index
    %c0_85 = arith.constant 0 : index
    %98 = vector.load %arg2[%c0_82, %97, %c0_83, %c1_84, %c0_85] : memref<1x10x10x10x4xf32, #tpu.memory_space<vmem>>, vector<1x1x8x8x4xf32>
    %99 = vector.shape_cast %98 : vector<1x1x8x8x4xf32> to vector<8x8x4xf32>
    %100 = vector.shape_cast %99 : vector<8x8x4xf32> to vector<64x4xf32>
    %c10 = arith.constant 10 : index
    %c0_86 = arith.constant 0 : index
    %c0_87 = arith.constant 0 : index
    %101 = vector.load %arg3[%c10, %c0_86, %c0_87] : memref<27x4x128xf32, #tpu.memory_space<vmem>>, vector<1x4x128xf32>
    %102 = vector.shape_cast %101 : vector<1x4x128xf32> to vector<4x128xf32>
    %cst_88 = arith.constant dense<0.000000e+00> : vector<64x128xf32>
    %103 = tpu.matmul %100, %102, %cst_88 {dimension_numbers = #tpu.dot_dimension_numbers<[1], [0], [0], [1], [0, 0, 1, 1], [], []>} : vector<64x4xf32>, vector<4x128xf32>, vector<64x128xf32> -> vector<64x128xf32>
    %104 = arith.addf %95, %103 : vector<64x128xf32>
    %c1_i32_89 = arith.constant 1 : i32
    %105 = arith.addi %arg1, %c1_i32_89 : i32
    %c0_90 = arith.constant 0 : index
    %106 = arith.index_cast %105 : i32 to index
    %c0_91 = arith.constant 0 : index
    %c2_92 = arith.constant 2 : index
    %c0_93 = arith.constant 0 : index
    %107 = vector.load %arg2[%c0_90, %106, %c0_91, %c2_92, %c0_93] : memref<1x10x10x10x4xf32, #tpu.memory_space<vmem>>, vector<1x1x8x8x4xf32>
    %108 = vector.shape_cast %107 : vector<1x1x8x8x4xf32> to vector<8x8x4xf32>
    %109 = vector.shape_cast %108 : vector<8x8x4xf32> to vector<64x4xf32>
    %c11 = arith.constant 11 : index
    %c0_94 = arith.constant 0 : index
    %c0_95 = arith.constant 0 : index
    %110 = vector.load %arg3[%c11, %c0_94, %c0_95] : memref<27x4x128xf32, #tpu.memory_space<vmem>>, vector<1x4x128xf32>
    %111 = vector.shape_cast %110 : vector<1x4x128xf32> to vector<4x128xf32>
    %cst_96 = arith.constant dense<0.000000e+00> : vector<64x128xf32>
    %112 = tpu.matmul %109, %111, %cst_96 {dimension_numbers = #tpu.dot_dimension_numbers<[1], [0], [0], [1], [0, 0, 1, 1], [], []>} : vector<64x4xf32>, vector<4x128xf32>, vector<64x128xf32> -> vector<64x128xf32>
    %113 = arith.addf %104, %112 : vector<64x128xf32>
    %c1_i32_97 = arith.constant 1 : i32
    %114 = arith.addi %arg1, %c1_i32_97 : i32
    %c0_98 = arith.constant 0 : index
    %115 = arith.index_cast %114 : i32 to index
    %c1_99 = arith.constant 1 : index
    %c0_100 = arith.constant 0 : index
    %c0_101 = arith.constant 0 : index
    %116 = vector.load %arg2[%c0_98, %115, %c1_99, %c0_100, %c0_101] : memref<1x10x10x10x4xf32, #tpu.memory_space<vmem>>, vector<1x1x8x8x4xf32>
    %117 = vector.shape_cast %116 : vector<1x1x8x8x4xf32> to vector<8x8x4xf32>
    %118 = vector.shape_cast %117 : vector<8x8x4xf32> to vector<64x4xf32>
    %c12 = arith.constant 12 : index
    %c0_102 = arith.constant 0 : index
    %c0_103 = arith.constant 0 : index
    %119 = vector.load %arg3[%c12, %c0_102, %c0_103] : memref<27x4x128xf32, #tpu.memory_space<vmem>>, vector<1x4x128xf32>
    %120 = vector.shape_cast %119 : vector<1x4x128xf32> to vector<4x128xf32>
    %cst_104 = arith.constant dense<0.000000e+00> : vector<64x128xf32>
    %121 = tpu.matmul %118, %120, %cst_104 {dimension_numbers = #tpu.dot_dimension_numbers<[1], [0], [0], [1], [0, 0, 1, 1], [], []>} : vector<64x4xf32>, vector<4x128xf32>, vector<64x128xf32> -> vector<64x128xf32>
    %122 = arith.addf %113, %121 : vector<64x128xf32>
    %c1_i32_105 = arith.constant 1 : i32
    %123 = arith.addi %arg1, %c1_i32_105 : i32
    %c0_106 = arith.constant 0 : index
    %124 = arith.index_cast %123 : i32 to index
    %c1_107 = arith.constant 1 : index
    %c1_108 = arith.constant 1 : index
    %c0_109 = arith.constant 0 : index
    %125 = vector.load %arg2[%c0_106, %124, %c1_107, %c1_108, %c0_109] : memref<1x10x10x10x4xf32, #tpu.memory_space<vmem>>, vector<1x1x8x8x4xf32>
    %126 = vector.shape_cast %125 : vector<1x1x8x8x4xf32> to vector<8x8x4xf32>
    %127 = vector.shape_cast %126 : vector<8x8x4xf32> to vector<64x4xf32>
    %c13 = arith.constant 13 : index
    %c0_110 = arith.constant 0 : index
    %c0_111 = arith.constant 0 : index
    %128 = vector.load %arg3[%c13, %c0_110, %c0_111] : memref<27x4x128xf32, #tpu.memory_space<vmem>>, vector<1x4x128xf32>
    %129 = vector.shape_cast %128 : vector<1x4x128xf32> to vector<4x128xf32>
    %cst_112 = arith.constant dense<0.000000e+00> : vector<64x128xf32>
    %130 = tpu.matmul %127, %129, %cst_112 {dimension_numbers = #tpu.dot_dimension_numbers<[1], [0], [0], [1], [0, 0, 1, 1], [], []>} : vector<64x4xf32>, vector<4x128xf32>, vector<64x128xf32> -> vector<64x128xf32>
    %131 = arith.addf %122, %130 : vector<64x128xf32>
    %c1_i32_113 = arith.constant 1 : i32
    %132 = arith.addi %arg1, %c1_i32_113 : i32
    %c0_114 = arith.constant 0 : index
    %133 = arith.index_cast %132 : i32 to index
    %c1_115 = arith.constant 1 : index
    %c2_116 = arith.constant 2 : index
    %c0_117 = arith.constant 0 : index
    %134 = vector.load %arg2[%c0_114, %133, %c1_115, %c2_116, %c0_117] : memref<1x10x10x10x4xf32, #tpu.memory_space<vmem>>, vector<1x1x8x8x4xf32>
    %135 = vector.shape_cast %134 : vector<1x1x8x8x4xf32> to vector<8x8x4xf32>
    %136 = vector.shape_cast %135 : vector<8x8x4xf32> to vector<64x4xf32>
    %c14 = arith.constant 14 : index
    %c0_118 = arith.constant 0 : index
    %c0_119 = arith.constant 0 : index
    %137 = vector.load %arg3[%c14, %c0_118, %c0_119] : memref<27x4x128xf32, #tpu.memory_space<vmem>>, vector<1x4x128xf32>
    %138 = vector.shape_cast %137 : vector<1x4x128xf32> to vector<4x128xf32>
    %cst_120 = arith.constant dense<0.000000e+00> : vector<64x128xf32>
    %139 = tpu.matmul %136, %138, %cst_120 {dimension_numbers = #tpu.dot_dimension_numbers<[1], [0], [0], [1], [0, 0, 1, 1], [], []>} : vector<64x4xf32>, vector<4x128xf32>, vector<64x128xf32> -> vector<64x128xf32>
    %140 = arith.addf %131, %139 : vector<64x128xf32>
    %c1_i32_121 = arith.constant 1 : i32
    %141 = arith.addi %arg1, %c1_i32_121 : i32
    %c0_122 = arith.constant 0 : index
    %142 = arith.index_cast %141 : i32 to index
    %c2_123 = arith.constant 2 : index
    %c0_124 = arith.constant 0 : index
    %c0_125 = arith.constant 0 : index
    %143 = vector.load %arg2[%c0_122, %142, %c2_123, %c0_124, %c0_125] : memref<1x10x10x10x4xf32, #tpu.memory_space<vmem>>, vector<1x1x8x8x4xf32>
    %144 = vector.shape_cast %143 : vector<1x1x8x8x4xf32> to vector<8x8x4xf32>
    %145 = vector.shape_cast %144 : vector<8x8x4xf32> to vector<64x4xf32>
    %c15 = arith.constant 15 : index
    %c0_126 = arith.constant 0 : index
    %c0_127 = arith.constant 0 : index
    %146 = vector.load %arg3[%c15, %c0_126, %c0_127] : memref<27x4x128xf32, #tpu.memory_space<vmem>>, vector<1x4x128xf32>
    %147 = vector.shape_cast %146 : vector<1x4x128xf32> to vector<4x128xf32>
    %cst_128 = arith.constant dense<0.000000e+00> : vector<64x128xf32>
    %148 = tpu.matmul %145, %147, %cst_128 {dimension_numbers = #tpu.dot_dimension_numbers<[1], [0], [0], [1], [0, 0, 1, 1], [], []>} : vector<64x4xf32>, vector<4x128xf32>, vector<64x128xf32> -> vector<64x128xf32>
    %149 = arith.addf %140, %148 : vector<64x128xf32>
    %c1_i32_129 = arith.constant 1 : i32
    %150 = arith.addi %arg1, %c1_i32_129 : i32
    %c0_130 = arith.constant 0 : index
    %151 = arith.index_cast %150 : i32 to index
    %c2_131 = arith.constant 2 : index
    %c1_132 = arith.constant 1 : index
    %c0_133 = arith.constant 0 : index
    %152 = vector.load %arg2[%c0_130, %151, %c2_131, %c1_132, %c0_133] : memref<1x10x10x10x4xf32, #tpu.memory_space<vmem>>, vector<1x1x8x8x4xf32>
    %153 = vector.shape_cast %152 : vector<1x1x8x8x4xf32> to vector<8x8x4xf32>
    %154 = vector.shape_cast %153 : vector<8x8x4xf32> to vector<64x4xf32>
    %c16 = arith.constant 16 : index
    %c0_134 = arith.constant 0 : index
    %c0_135 = arith.constant 0 : index
    %155 = vector.load %arg3[%c16, %c0_134, %c0_135] : memref<27x4x128xf32, #tpu.memory_space<vmem>>, vector<1x4x128xf32>
    %156 = vector.shape_cast %155 : vector<1x4x128xf32> to vector<4x128xf32>
    %cst_136 = arith.constant dense<0.000000e+00> : vector<64x128xf32>
    %157 = tpu.matmul %154, %156, %cst_136 {dimension_numbers = #tpu.dot_dimension_numbers<[1], [0], [0], [1], [0, 0, 1, 1], [], []>} : vector<64x4xf32>, vector<4x128xf32>, vector<64x128xf32> -> vector<64x128xf32>
    %158 = arith.addf %149, %157 : vector<64x128xf32>
    %c1_i32_137 = arith.constant 1 : i32
    %159 = arith.addi %arg1, %c1_i32_137 : i32
    %c0_138 = arith.constant 0 : index
    %160 = arith.index_cast %159 : i32 to index
    %c2_139 = arith.constant 2 : index
    %c2_140 = arith.constant 2 : index
    %c0_141 = arith.constant 0 : index
    %161 = vector.load %arg2[%c0_138, %160, %c2_139, %c2_140, %c0_141] : memref<1x10x10x10x4xf32, #tpu.memory_space<vmem>>, vector<1x1x8x8x4xf32>
    %162 = vector.shape_cast %161 : vector<1x1x8x8x4xf32> to vector<8x8x4xf32>
    %163 = vector.shape_cast %162 : vector<8x8x4xf32> to vector<64x4xf32>
    %c17 = arith.constant 17 : index
    %c0_142 = arith.constant 0 : index
    %c0_143 = arith.constant 0 : index
    %164 = vector.load %arg3[%c17, %c0_142, %c0_143] : memref<27x4x128xf32, #tpu.memory_space<vmem>>, vector<1x4x128xf32>
    %165 = vector.shape_cast %164 : vector<1x4x128xf32> to vector<4x128xf32>
    %cst_144 = arith.constant dense<0.000000e+00> : vector<64x128xf32>
    %166 = tpu.matmul %163, %165, %cst_144 {dimension_numbers = #tpu.dot_dimension_numbers<[1], [0], [0], [1], [0, 0, 1, 1], [], []>} : vector<64x4xf32>, vector<4x128xf32>, vector<64x128xf32> -> vector<64x128xf32>
    %167 = arith.addf %158, %166 : vector<64x128xf32>
    %c2_i32 = arith.constant 2 : i32
    %168 = arith.addi %arg1, %c2_i32 : i32
    %c0_145 = arith.constant 0 : index
    %169 = arith.index_cast %168 : i32 to index
    %c0_146 = arith.constant 0 : index
    %c0_147 = arith.constant 0 : index
    %c0_148 = arith.constant 0 : index
    %170 = vector.load %arg2[%c0_145, %169, %c0_146, %c0_147, %c0_148] : memref<1x10x10x10x4xf32, #tpu.memory_space<vmem>>, vector<1x1x8x8x4xf32>
    %171 = vector.shape_cast %170 : vector<1x1x8x8x4xf32> to vector<8x8x4xf32>
    %172 = vector.shape_cast %171 : vector<8x8x4xf32> to vector<64x4xf32>
    %c18 = arith.constant 18 : index
    %c0_149 = arith.constant 0 : index
    %c0_150 = arith.constant 0 : index
    %173 = vector.load %arg3[%c18, %c0_149, %c0_150] : memref<27x4x128xf32, #tpu.memory_space<vmem>>, vector<1x4x128xf32>
    %174 = vector.shape_cast %173 : vector<1x4x128xf32> to vector<4x128xf32>
    %cst_151 = arith.constant dense<0.000000e+00> : vector<64x128xf32>
    %175 = tpu.matmul %172, %174, %cst_151 {dimension_numbers = #tpu.dot_dimension_numbers<[1], [0], [0], [1], [0, 0, 1, 1], [], []>} : vector<64x4xf32>, vector<4x128xf32>, vector<64x128xf32> -> vector<64x128xf32>
    %176 = arith.addf %167, %175 : vector<64x128xf32>
    %c2_i32_152 = arith.constant 2 : i32
    %177 = arith.addi %arg1, %c2_i32_152 : i32
    %c0_153 = arith.constant 0 : index
    %178 = arith.index_cast %177 : i32 to index
    %c0_154 = arith.constant 0 : index
    %c1_155 = arith.constant 1 : index
    %c0_156 = arith.constant 0 : index
    %179 = vector.load %arg2[%c0_153, %178, %c0_154, %c1_155, %c0_156] : memref<1x10x10x10x4xf32, #tpu.memory_space<vmem>>, vector<1x1x8x8x4xf32>
    %180 = vector.shape_cast %179 : vector<1x1x8x8x4xf32> to vector<8x8x4xf32>
    %181 = vector.shape_cast %180 : vector<8x8x4xf32> to vector<64x4xf32>
    %c19 = arith.constant 19 : index
    %c0_157 = arith.constant 0 : index
    %c0_158 = arith.constant 0 : index
    %182 = vector.load %arg3[%c19, %c0_157, %c0_158] : memref<27x4x128xf32, #tpu.memory_space<vmem>>, vector<1x4x128xf32>
    %183 = vector.shape_cast %182 : vector<1x4x128xf32> to vector<4x128xf32>
    %cst_159 = arith.constant dense<0.000000e+00> : vector<64x128xf32>
    %184 = tpu.matmul %181, %183, %cst_159 {dimension_numbers = #tpu.dot_dimension_numbers<[1], [0], [0], [1], [0, 0, 1, 1], [], []>} : vector<64x4xf32>, vector<4x128xf32>, vector<64x128xf32> -> vector<64x128xf32>
    %185 = arith.addf %176, %184 : vector<64x128xf32>
    %c2_i32_160 = arith.constant 2 : i32
    %186 = arith.addi %arg1, %c2_i32_160 : i32
    %c0_161 = arith.constant 0 : index
    %187 = arith.index_cast %186 : i32 to index
    %c0_162 = arith.constant 0 : index
    %c2_163 = arith.constant 2 : index
    %c0_164 = arith.constant 0 : index
    %188 = vector.load %arg2[%c0_161, %187, %c0_162, %c2_163, %c0_164] : memref<1x10x10x10x4xf32, #tpu.memory_space<vmem>>, vector<1x1x8x8x4xf32>
    %189 = vector.shape_cast %188 : vector<1x1x8x8x4xf32> to vector<8x8x4xf32>
    %190 = vector.shape_cast %189 : vector<8x8x4xf32> to vector<64x4xf32>
    %c20 = arith.constant 20 : index
    %c0_165 = arith.constant 0 : index
    %c0_166 = arith.constant 0 : index
    %191 = vector.load %arg3[%c20, %c0_165, %c0_166] : memref<27x4x128xf32, #tpu.memory_space<vmem>>, vector<1x4x128xf32>
    %192 = vector.shape_cast %191 : vector<1x4x128xf32> to vector<4x128xf32>
    %cst_167 = arith.constant dense<0.000000e+00> : vector<64x128xf32>
    %193 = tpu.matmul %190, %192, %cst_167 {dimension_numbers = #tpu.dot_dimension_numbers<[1], [0], [0], [1], [0, 0, 1, 1], [], []>} : vector<64x4xf32>, vector<4x128xf32>, vector<64x128xf32> -> vector<64x128xf32>
    %194 = arith.addf %185, %193 : vector<64x128xf32>
    %c2_i32_168 = arith.constant 2 : i32
    %195 = arith.addi %arg1, %c2_i32_168 : i32
    %c0_169 = arith.constant 0 : index
    %196 = arith.index_cast %195 : i32 to index
    %c1_170 = arith.constant 1 : index
    %c0_171 = arith.constant 0 : index
    %c0_172 = arith.constant 0 : index
    %197 = vector.load %arg2[%c0_169, %196, %c1_170, %c0_171, %c0_172] : memref<1x10x10x10x4xf32, #tpu.memory_space<vmem>>, vector<1x1x8x8x4xf32>
    %198 = vector.shape_cast %197 : vector<1x1x8x8x4xf32> to vector<8x8x4xf32>
    %199 = vector.shape_cast %198 : vector<8x8x4xf32> to vector<64x4xf32>
    %c21 = arith.constant 21 : index
    %c0_173 = arith.constant 0 : index
    %c0_174 = arith.constant 0 : index
    %200 = vector.load %arg3[%c21, %c0_173, %c0_174] : memref<27x4x128xf32, #tpu.memory_space<vmem>>, vector<1x4x128xf32>
    %201 = vector.shape_cast %200 : vector<1x4x128xf32> to vector<4x128xf32>
    %cst_175 = arith.constant dense<0.000000e+00> : vector<64x128xf32>
    %202 = tpu.matmul %199, %201, %cst_175 {dimension_numbers = #tpu.dot_dimension_numbers<[1], [0], [0], [1], [0, 0, 1, 1], [], []>} : vector<64x4xf32>, vector<4x128xf32>, vector<64x128xf32> -> vector<64x128xf32>
    %203 = arith.addf %194, %202 : vector<64x128xf32>
    %c2_i32_176 = arith.constant 2 : i32
    %204 = arith.addi %arg1, %c2_i32_176 : i32
    %c0_177 = arith.constant 0 : index
    %205 = arith.index_cast %204 : i32 to index
    %c1_178 = arith.constant 1 : index
    %c1_179 = arith.constant 1 : index
    %c0_180 = arith.constant 0 : index
    %206 = vector.load %arg2[%c0_177, %205, %c1_178, %c1_179, %c0_180] : memref<1x10x10x10x4xf32, #tpu.memory_space<vmem>>, vector<1x1x8x8x4xf32>
    %207 = vector.shape_cast %206 : vector<1x1x8x8x4xf32> to vector<8x8x4xf32>
    %208 = vector.shape_cast %207 : vector<8x8x4xf32> to vector<64x4xf32>
    %c22 = arith.constant 22 : index
    %c0_181 = arith.constant 0 : index
    %c0_182 = arith.constant 0 : index
    %209 = vector.load %arg3[%c22, %c0_181, %c0_182] : memref<27x4x128xf32, #tpu.memory_space<vmem>>, vector<1x4x128xf32>
    %210 = vector.shape_cast %209 : vector<1x4x128xf32> to vector<4x128xf32>
    %cst_183 = arith.constant dense<0.000000e+00> : vector<64x128xf32>
    %211 = tpu.matmul %208, %210, %cst_183 {dimension_numbers = #tpu.dot_dimension_numbers<[1], [0], [0], [1], [0, 0, 1, 1], [], []>} : vector<64x4xf32>, vector<4x128xf32>, vector<64x128xf32> -> vector<64x128xf32>
    %212 = arith.addf %203, %211 : vector<64x128xf32>
    %c2_i32_184 = arith.constant 2 : i32
    %213 = arith.addi %arg1, %c2_i32_184 : i32
    %c0_185 = arith.constant 0 : index
    %214 = arith.index_cast %213 : i32 to index
    %c1_186 = arith.constant 1 : index
    %c2_187 = arith.constant 2 : index
    %c0_188 = arith.constant 0 : index
    %215 = vector.load %arg2[%c0_185, %214, %c1_186, %c2_187, %c0_188] : memref<1x10x10x10x4xf32, #tpu.memory_space<vmem>>, vector<1x1x8x8x4xf32>
    %216 = vector.shape_cast %215 : vector<1x1x8x8x4xf32> to vector<8x8x4xf32>
    %217 = vector.shape_cast %216 : vector<8x8x4xf32> to vector<64x4xf32>
    %c23 = arith.constant 23 : index
    %c0_189 = arith.constant 0 : index
    %c0_190 = arith.constant 0 : index
    %218 = vector.load %arg3[%c23, %c0_189, %c0_190] : memref<27x4x128xf32, #tpu.memory_space<vmem>>, vector<1x4x128xf32>
    %219 = vector.shape_cast %218 : vector<1x4x128xf32> to vector<4x128xf32>
    %cst_191 = arith.constant dense<0.000000e+00> : vector<64x128xf32>
    %220 = tpu.matmul %217, %219, %cst_191 {dimension_numbers = #tpu.dot_dimension_numbers<[1], [0], [0], [1], [0, 0, 1, 1], [], []>} : vector<64x4xf32>, vector<4x128xf32>, vector<64x128xf32> -> vector<64x128xf32>
    %221 = arith.addf %212, %220 : vector<64x128xf32>
    %c2_i32_192 = arith.constant 2 : i32
    %222 = arith.addi %arg1, %c2_i32_192 : i32
    %c0_193 = arith.constant 0 : index
    %223 = arith.index_cast %222 : i32 to index
    %c2_194 = arith.constant 2 : index
    %c0_195 = arith.constant 0 : index
    %c0_196 = arith.constant 0 : index
    %224 = vector.load %arg2[%c0_193, %223, %c2_194, %c0_195, %c0_196] : memref<1x10x10x10x4xf32, #tpu.memory_space<vmem>>, vector<1x1x8x8x4xf32>
    %225 = vector.shape_cast %224 : vector<1x1x8x8x4xf32> to vector<8x8x4xf32>
    %226 = vector.shape_cast %225 : vector<8x8x4xf32> to vector<64x4xf32>
    %c24 = arith.constant 24 : index
    %c0_197 = arith.constant 0 : index
    %c0_198 = arith.constant 0 : index
    %227 = vector.load %arg3[%c24, %c0_197, %c0_198] : memref<27x4x128xf32, #tpu.memory_space<vmem>>, vector<1x4x128xf32>
    %228 = vector.shape_cast %227 : vector<1x4x128xf32> to vector<4x128xf32>
    %cst_199 = arith.constant dense<0.000000e+00> : vector<64x128xf32>
    %229 = tpu.matmul %226, %228, %cst_199 {dimension_numbers = #tpu.dot_dimension_numbers<[1], [0], [0], [1], [0, 0, 1, 1], [], []>} : vector<64x4xf32>, vector<4x128xf32>, vector<64x128xf32> -> vector<64x128xf32>
    %230 = arith.addf %221, %229 : vector<64x128xf32>
    %c2_i32_200 = arith.constant 2 : i32
    %231 = arith.addi %arg1, %c2_i32_200 : i32
    %c0_201 = arith.constant 0 : index
    %232 = arith.index_cast %231 : i32 to index
    %c2_202 = arith.constant 2 : index
    %c1_203 = arith.constant 1 : index
    %c0_204 = arith.constant 0 : index
    %233 = vector.load %arg2[%c0_201, %232, %c2_202, %c1_203, %c0_204] : memref<1x10x10x10x4xf32, #tpu.memory_space<vmem>>, vector<1x1x8x8x4xf32>
    %234 = vector.shape_cast %233 : vector<1x1x8x8x4xf32> to vector<8x8x4xf32>
    %235 = vector.shape_cast %234 : vector<8x8x4xf32> to vector<64x4xf32>
    %c25 = arith.constant 25 : index
    %c0_205 = arith.constant 0 : index
    %c0_206 = arith.constant 0 : index
    %236 = vector.load %arg3[%c25, %c0_205, %c0_206] : memref<27x4x128xf32, #tpu.memory_space<vmem>>, vector<1x4x128xf32>
    %237 = vector.shape_cast %236 : vector<1x4x128xf32> to vector<4x128xf32>
    %cst_207 = arith.constant dense<0.000000e+00> : vector<64x128xf32>
    %238 = tpu.matmul %235, %237, %cst_207 {dimension_numbers = #tpu.dot_dimension_numbers<[1], [0], [0], [1], [0, 0, 1, 1], [], []>} : vector<64x4xf32>, vector<4x128xf32>, vector<64x128xf32> -> vector<64x128xf32>
    %239 = arith.addf %230, %238 : vector<64x128xf32>
    %c2_i32_208 = arith.constant 2 : i32
    %240 = arith.addi %arg1, %c2_i32_208 : i32
    %c0_209 = arith.constant 0 : index
    %241 = arith.index_cast %240 : i32 to index
    %c2_210 = arith.constant 2 : index
    %c2_211 = arith.constant 2 : index
    %c0_212 = arith.constant 0 : index
    %242 = vector.load %arg2[%c0_209, %241, %c2_210, %c2_211, %c0_212] : memref<1x10x10x10x4xf32, #tpu.memory_space<vmem>>, vector<1x1x8x8x4xf32>
    %243 = vector.shape_cast %242 : vector<1x1x8x8x4xf32> to vector<8x8x4xf32>
    %244 = vector.shape_cast %243 : vector<8x8x4xf32> to vector<64x4xf32>
    %c26 = arith.constant 26 : index
    %c0_213 = arith.constant 0 : index
    %c0_214 = arith.constant 0 : index
    %245 = vector.load %arg3[%c26, %c0_213, %c0_214] : memref<27x4x128xf32, #tpu.memory_space<vmem>>, vector<1x4x128xf32>
    %246 = vector.shape_cast %245 : vector<1x4x128xf32> to vector<4x128xf32>
    %cst_215 = arith.constant dense<0.000000e+00> : vector<64x128xf32>
    %247 = tpu.matmul %244, %246, %cst_215 {dimension_numbers = #tpu.dot_dimension_numbers<[1], [0], [0], [1], [0, 0, 1, 1], [], []>} : vector<64x4xf32>, vector<4x128xf32>, vector<64x128xf32> -> vector<64x128xf32>
    %248 = arith.addf %239, %247 : vector<64x128xf32>
    %c0_216 = arith.constant 0 : index
    %c0_217 = arith.constant 0 : index
    %249 = vector.load %arg4[%c0_216, %c0_217] : memref<1x128xf32, #tpu.memory_space<vmem>>, vector<1x128xf32>
    %250 = vector.broadcast %249 : vector<1x128xf32> to vector<64x128xf32>
    %251 = arith.addf %248, %250 : vector<64x128xf32>
    %c0_218 = arith.constant 0 : index
    %c0_219 = arith.constant 0 : index
    %c0_220 = arith.constant 0 : index
    %252 = vector.load %arg7[%c0_218, %c0_219, %c0_220] : memref<1x64x128xf32, #tpu.memory_space<vmem>>, vector<1x64x128xf32>
    %253 = vector.shape_cast %252 : vector<1x64x128xf32> to vector<64x128xf32>
    %254 = vector.shape_cast %251 : vector<64x128xf32> to vector<1x64x128xf32>
    tpu.vector_store %arg7[%c0_218, %c0_219, %c0_220], %254 {strides = array<i32>} : memref<1x64x128xf32, #tpu.memory_space<vmem>>, vector<1x64x128xf32>,
    %c0_221 = arith.constant 0 : index
    %c0_222 = arith.constant 0 : index
    %255 = vector.load %arg8[%c0_221, %c0_222] : memref<8x128xf32, #tpu.memory_space<vmem>>, vector<1x128xf32>
    %cst_223 = arith.constant dense<0.000000e+00> : vector<128xf32>
    %256 = vector.multi_reduction <add>, %251, %cst_223 [0] : vector<64x128xf32> to vector<128xf32>
    %257 = vector.shape_cast %256 : vector<128xf32> to vector<1x128xf32>
    %258 = arith.addf %255, %257 : vector<1x128xf32>
    %c0_224 = arith.constant 0 : index
    %c0_225 = arith.constant 0 : index
    %259 = vector.load %arg8[%c0_224, %c0_225] : memref<8x128xf32, #tpu.memory_space<vmem>>, vector<1x128xf32>
    tpu.vector_store %arg8[%c0_224, %c0_225], %258 {strides = array<i32>} : memref<8x128xf32, #tpu.memory_space<vmem>>, vector<1x128xf32>,
    %c1_226 = arith.constant 1 : index
    %c0_227 = arith.constant 0 : index
    %260 = vector.load %arg8[%c1_226, %c0_227] : memref<8x128xf32, #tpu.memory_space<vmem>>, vector<1x128xf32>
    %261 = arith.mulf %251, %251 : vector<64x128xf32>
    %cst_228 = arith.constant dense<0.000000e+00> : vector<128xf32>
    %262 = vector.multi_reduction <add>, %261, %cst_228 [0] : vector<64x128xf32> to vector<128xf32>
    %263 = vector.shape_cast %262 : vector<128xf32> to vector<1x128xf32>
    %264 = arith.addf %260, %263 : vector<1x128xf32>
    %c1_229 = arith.constant 1 : index
    %c0_230 = arith.constant 0 : index
    %265 = vector.load %arg8[%c1_229, %c0_230] : memref<8x128xf32, #tpu.memory_space<vmem>>, vector<1x128xf32>
    tpu.vector_store %arg8[%c1_229, %c0_230], %264 {strides = array<i32>} : memref<8x128xf32, #tpu.memory_space<vmem>>, vector<1x128xf32>,
    %c1_i32_231 = arith.constant 1 : i32
    %266 = arith.cmpi eq, %arg0, %c1_i32_231 : i32
    %c7_i32 = arith.constant 7 : i32
    %267 = arith.cmpi eq, %arg1, %c7_i32 : i32
    %268 = arith.andi %266, %267 : i1
    %269 = arith.extui %268 : i1 to i32
    %c0_i32_232 = arith.constant 0 : i32
    %270 = arith.cmpi ne, %269, %c0_i32_232 : i32
    scf.if %270 {
      %c0_233 = arith.constant 0 : index
      %c0_234 = arith.constant 0 : index
      %271 = vector.load %arg8[%c0_233, %c0_234] : memref<8x128xf32, #tpu.memory_space<vmem>>, vector<1x128xf32>
      %cst_235 = arith.constant 9.765625E-4 : f32
      %272 = vector.broadcast %cst_235 : f32 to vector<1x128xf32>
      %273 = arith.mulf %271, %272 : vector<1x128xf32>
      %c1_236 = arith.constant 1 : index
      %c0_237 = arith.constant 0 : index
      %274 = vector.load %arg8[%c1_236, %c0_237] : memref<8x128xf32, #tpu.memory_space<vmem>>, vector<1x128xf32>
      %cst_238 = arith.constant 9.765625E-4 : f32
      %275 = vector.broadcast %cst_238 : f32 to vector<1x128xf32>
      %276 = arith.mulf %274, %275 : vector<1x128xf32>
      %277 = arith.mulf %273, %273 : vector<1x128xf32>
      %278 = arith.subf %276, %277 : vector<1x128xf32>
      %c0_239 = arith.constant 0 : index
      %c0_240 = arith.constant 0 : index
      %279 = vector.load %arg5[%c0_239, %c0_240] : memref<1x128xf32, #tpu.memory_space<vmem>>, vector<1x128xf32>
      %cst_241 = arith.constant 9.99999974E-6 : f32
      %280 = vector.broadcast %cst_241 : f32 to vector<1x128xf32>
      %281 = arith.addf %278, %280 : vector<1x128xf32>
      %282 = math.rsqrt %281 : vector<1x128xf32>
      %283 = arith.mulf %279, %282 : vector<1x128xf32>
      %c0_242 = arith.constant 0 : index
      %c0_243 = arith.constant 0 : index
      %284 = vector.load %arg6[%c0_242, %c0_243] : memref<1x128xf32, #tpu.memory_space<vmem>>, vector<1x128xf32>
      %285 = arith.mulf %273, %283 : vector<1x128xf32>
      %286 = arith.subf %284, %285 : vector<1x128xf32>
      %c0_244 = arith.constant 0 : index
      %c0_245 = arith.constant 0 : index
      %287 = vector.load %arg8[%c0_244, %c0_245] : memref<8x128xf32, #tpu.memory_space<vmem>>, vector<1x128xf32>
      tpu.vector_store %arg8[%c0_244, %c0_245], %283 {strides = array<i32>} : memref<8x128xf32, #tpu.memory_space<vmem>>, vector<1x128xf32>,
      %c1_246 = arith.constant 1 : index
      %c0_247 = arith.constant 0 : index
      %288 = vector.load %arg8[%c1_246, %c0_247] : memref<8x128xf32, #tpu.memory_space<vmem>>, vector<1x128xf32>
      tpu.vector_store %arg8[%c1_246, %c0_247], %286 {strides = array<i32>} : memref<8x128xf32, #tpu.memory_space<vmem>>, vector<1x128xf32>,
    } else {
    }
    return
  }
  func.func @transform_0(%arg0: i32, %arg1: i32) -> (i32, i32, i32, i32, i32) {
    %c0_i32 = arith.constant 0 : i32
    %c0_i32_0 = arith.constant 0 : i32
    %c0_i32_1 = arith.constant 0 : i32
    %c0_i32_2 = arith.constant 0 : i32
    %c0_i32_3 = arith.constant 0 : i32
    return %arg0, %c0_i32, %c0_i32_0, %c0_i32_1, %c0_i32_2 : i32, i32, i32, i32, i32
  }
  func.func @transform_1(%arg0: i32, %arg1: i32) -> (i32, i32, i32) {
    %c0_i32 = arith.constant 0 : i32
    %c0_i32_0 = arith.constant 0 : i32
    %c0_i32_1 = arith.constant 0 : i32
    %c0_i32_2 = arith.constant 0 : i32
    return %c0_i32, %c0_i32_0, %c0_i32_1 : i32, i32, i32
  }
  func.func @transform_2(%arg0: i32, %arg1: i32) -> (i32, i32) {
    %c0_i32 = arith.constant 0 : i32
    %c0_i32_0 = arith.constant 0 : i32
    %c0_i32_1 = arith.constant 0 : i32
    return %c0_i32, %c0_i32_0 : i32, i32
  }
  func.func @transform_3(%arg0: i32, %arg1: i32) -> (i32, i32) {
    %c0_i32 = arith.constant 0 : i32
    %c0_i32_0 = arith.constant 0 : i32
    %c0_i32_1 = arith.constant 0 : i32
    return %c0_i32, %c0_i32_0 : i32, i32
  }
  func.func @transform_4(%arg0: i32, %arg1: i32) -> (i32, i32) {
    %c0_i32 = arith.constant 0 : i32
    %c0_i32_0 = arith.constant 0 : i32
    %c0_i32_1 = arith.constant 0 : i32
    return %c0_i32, %c0_i32_0 : i32, i32
  }
  func.func @transform_5(%arg0: i32, %arg1: i32) -> (i32, i32, i32) {
    %c8_i32 = arith.constant 8 : i32
    %0 = arith.muli %arg0, %c8_i32 : i32
    %1 = arith.addi %0, %arg1 : i32
    %c0_i32 = arith.constant 0 : i32
    %c0_i32_0 = arith.constant 0 : i32
    %c0_i32_1 = arith.constant 0 : i32
    return %1, %c0_i32, %c0_i32_0 : i32, i32, i32
  }
  func.func @transform_6(%arg0: i32, %arg1: i32) -> (i32, i32) {
    %c0_i32 = arith.constant 0 : i32
    %c0_i32_0 = arith.constant 0 : i32
    %c0_i32_1 = arith.constant 0 : i32
    return %c0_i32, %c0_i32_0 : i32, i32
  }
}

module attributes {stable_mosaic.version = 11 : i64} {
  func.func @_bn_act_kernel(%arg0: i32, %arg1: memref<8x128xf32, #tpu.memory_space<vmem>>, %arg2: memref<512x128xf32, #tpu.memory_space<vmem>>, %arg3: memref<512x128xf32, #tpu.memory_space<vmem>>) attributes {dimension_semantics = [#tpu.dimension_semantics<parallel>], iteration_bounds = array<i64: 2>, scalar_prefetch = 0 : i64, scratch_operands = 0 : i64, tpu.core_type = #tpu.core_type<tc>, window_params = [{pipeline_mode = #tpu.pipeline_mode<synchronous>, transform_indices = @transform_0, window_bounds = array<i64: 8, 128>}, {transform_indices = @transform_1, window_bounds = array<i64: 512, 128>}, {transform_indices = @transform_2, window_bounds = array<i64: 512, 128>}]} {
    %c0 = arith.constant 0 : index
    %c0_0 = arith.constant 0 : index
    %0 = vector.load %arg2[%c0, %c0_0] : memref<512x128xf32, #tpu.memory_space<vmem>>, vector<512x128xf32>
    %c0_1 = arith.constant 0 : index
    %c0_2 = arith.constant 0 : index
    %1 = vector.load %arg1[%c0_1, %c0_2] : memref<8x128xf32, #tpu.memory_space<vmem>>, vector<1x128xf32>
    %2 = vector.broadcast %1 : vector<1x128xf32> to vector<512x128xf32>
    %3 = arith.mulf %0, %2 : vector<512x128xf32>
    %c1 = arith.constant 1 : index
    %c0_3 = arith.constant 0 : index
    %4 = vector.load %arg1[%c1, %c0_3] : memref<8x128xf32, #tpu.memory_space<vmem>>, vector<1x128xf32>
    %5 = vector.broadcast %4 : vector<1x128xf32> to vector<512x128xf32>
    %6 = arith.addf %3, %5 : vector<512x128xf32>
    %cst = arith.constant 0.000000e+00 : f32
    %7 = vector.broadcast %cst : f32 to vector<512x128xf32>
    %8 = arith.cmpf oge, %6, %7 : vector<512x128xf32>
    %cst_4 = arith.constant 0.00999999977 : f32
    %9 = vector.broadcast %cst_4 : f32 to vector<512x128xf32>
    %10 = arith.mulf %9, %6 : vector<512x128xf32>
    %11 = arith.select %8, %6, %10 : vector<512x128xi1>, vector<512x128xf32>
    %c0_5 = arith.constant 0 : index
    %c0_6 = arith.constant 0 : index
    %12 = vector.load %arg3[%c0_5, %c0_6] : memref<512x128xf32, #tpu.memory_space<vmem>>, vector<512x128xf32>
    tpu.vector_store %arg3[%c0_5, %c0_6], %11 {strides = array<i32>} : memref<512x128xf32, #tpu.memory_space<vmem>>, vector<512x128xf32>,
    return
  }
  func.func @transform_0(%arg0: i32) -> (i32, i32) {
    %c0_i32 = arith.constant 0 : i32
    %c0_i32_0 = arith.constant 0 : i32
    %c0_i32_1 = arith.constant 0 : i32
    return %c0_i32, %c0_i32_0 : i32, i32
  }
  func.func @transform_1(%arg0: i32) -> (i32, i32) {
    %c0_i32 = arith.constant 0 : i32
    %c0_i32_0 = arith.constant 0 : i32
    return %arg0, %c0_i32 : i32, i32
  }
  func.func @transform_2(%arg0: i32) -> (i32, i32) {
    %c0_i32 = arith.constant 0 : i32
    %c0_i32_0 = arith.constant 0 : i32
    return %arg0, %c0_i32 : i32, i32
  }
}

</mosaic_0001>

<llo_original>
// kernel: conv_dropout_norm_nonlin.3
$region0: #{conv_dropout_norm_nonlin.3}
  #allocation0 [shape = 'u32[]', space=smem, size = 0x4, offset = 0x4, fixed_abs, tag = 'smem constant byte address 0x4 - core index']
  #allocation1 [shape = 'u32[144,128]{1,0:T(1,128)}', space=vmem, size = 0x12000, scoped, tag = 'internal scratch']
  %s0 = inlined_call_operand.vmem [shape: f32[8,128], index: 0, kind: input, shape index: {}]
  %s1 = inlined_call_operand.vmem [shape: f32[1024,128], index: 1, kind: input, shape index: {}]
  %s2 = inlined_call_operand.vmem [shape: f32[1024,128], index: 2, kind: output, shape index: {}]
  %s3 = sld [smem:[#allocation0]]
  $region41: #{conv_dropout_norm_nonlin.3} parent=0
    _
  %s5 = ssub.s32 1, %s3
  %s6 = scalar_select 0, %s5, %s3
  loop: start=0, step=1, limit=4
  $region2: #{conv_dropout_norm_nonlin.3} parent=0 // loop_pre_header
    _
  $region3: #{conv_dropout_norm_nonlin.3} parent=0 // loop_header
    %s8 = sphi 0, %s12
    %p9 = scmp.ge.s32.totalorder %s8, 4
    %s16 = sphi 0, %s16
    %s18 = sphi 0, %s16
    %s19 = sphi 0, %s18
    %s33 = sphi 0, %s19
    %s39 = sphi 0, %s41
    %s42 = sphi 0, %s39
    %s43 = sphi 0, %s42
    %s59 = sphi 0, %s43
    %s65 = sphi 0, %s67
    %s68 = sphi 0, %s65
    %s69 = sphi 0, %s68
    %s85 = sphi 0, %s69
  $region4: #{conv_dropout_norm_nonlin.3} parent=0 // loop_header_branch
    %11 = sbr.rel (%p9) target = $region8
  $region5: #{conv_dropout_norm_nonlin.3} parent=0 // loop_body
    %s13 = ssub.s32 %s8, 1
    %s14 = ssub.s32 %s8, 2
    %s15 = sadd.s32 %s8, 1
    %s17 = sadd.s32 %s16, 1
    %p20 = scmp.eq.s32.totalorder %s8, 1
    %p21 = scmp.ne.s32.totalorder %s16, %s18
    %p22 = scmp.eq.s32.totalorder %s8, 0
    %p23 = por %p21, %p22
    %p24 = scmp.ne.s32.totalorder %s16, %s18
    %p25 = scmp.eq.s32.totalorder %s13, 1
    %p26 = por %p24, %p25
    %p27 = scmp.ne.s32.totalorder %s18, %s19
    %p28 = scmp.eq.s32.totalorder %s13, 0
    %p29 = por %p27, %p28
    %p30 = scmp.ne.s32.totalorder %s18, %s19
    %p31 = scmp.eq.s32.totalorder %s14, 1
    %p32 = por %p30, %p31
    %p34 = scmp.ne.s32.totalorder %s19, %s33
    %p35 = scmp.eq.s32.totalorder %s14, 0
    %p36 = por %p34, %p35
    %s37 = ssub.s32 %s8, %s15
    %p38 = scmp.eq.s32.totalorder %s37, 0
    %s40 = sadd.s32 %s39, 1
    %s41 = scalar_select %p38, %s39, %s40
    %p44 = pneg %p38
    %p45 = scmp.eq.s32.totalorder %s8, 1
    %p46 = por %p44, %p45
    %p47 = scmp.ne.s32.totalorder %s39, %s42
    %p48 = scmp.eq.s32.totalorder %s8, 0
    %p49 = por %p47, %p48
    %p50 = scmp.ne.s32.totalorder %s39, %s42
    %p51 = scmp.eq.s32.totalorder %s13, 1
    %p52 = por %p50, %p51
    %p53 = scmp.ne.s32.totalorder %s42, %s43
    %p54 = scmp.eq.s32.totalorder %s13, 0
    %p55 = por %p53, %p54
    %p56 = scmp.ne.s32.totalorder %s42, %s43
    %p57 = scmp.eq.s32.totalorder %s14, 1
    %p58 = por %p56, %p57
    %p60 = scmp.ne.s32.totalorder %s43, %s59
    %p61 = scmp.eq.s32.totalorder %s14, 0
    %p62 = por %p60, %p61
    %s63 = ssub.s32 %s8, %s15
    %p64 = scmp.eq.s32.totalorder %s63, 0
    %s66 = sadd.s32 %s65, 1
    %s67 = scalar_select %p64, %s65, %s66
    %p70 = pneg %p64
    %p71 = scmp.eq.s32.totalorder %s8, 1
    %p72 = por %p70, %p71
    %p73 = scmp.ne.s32.totalorder %s65, %s68
    %p74 = scmp.eq.s32.totalorder %s8, 0
    %p75 = por %p73, %p74
    %p76 = scmp.ne.s32.totalorder %s65, %s68
    %p77 = scmp.eq.s32.totalorder %s13, 1
    %p78 = por %p76, %p77
    %p79 = scmp.ne.s32.totalorder %s68, %s69
    %p80 = scmp.eq.s32.totalorder %s13, 0
    %p81 = por %p79, %p80
    %p82 = scmp.ne.s32.totalorder %s68, %s69
    %p83 = scmp.eq.s32.totalorder %s14, 1
    %p84 = por %p82, %p83
    %p86 = scmp.ne.s32.totalorder %s69, %s85
    %p87 = scmp.eq.s32.totalorder %s14, 0
    %p88 = por %p86, %p87
    %p89 = scmp.le.s32.totalorder 1, %s8
    %p90 = scmp.lt.s32.totalorder %s8, 3
    %p91 = pnand %p89, %p90
    %p92 = pneg %p91
    // Predicated region
    $region9: #{conv_dropout_norm_nonlin.3} parent=5 // pred_check
      _
    $region10: #{conv_dropout_norm_nonlin.3} parent=5 // pred_check_branch
      %94 = sbr.rel (%p91) target = $region12
    $region11: #{conv_dropout_norm_nonlin.3} parent=5 // pred_region
      %s95 = ssub.s32 %s8, 1
      // Predicated region
      $region13: #{conv_dropout_norm_nonlin.3} parent=11 // pred_check
        %p96 = pneg %p29
      $region14: #{conv_dropout_norm_nonlin.3} parent=11 // pred_check_branch
        %98 = sbr.rel (%p96) target = $region16
      $region15: #{conv_dropout_norm_nonlin.3} parent=11 // pred_region
        _
      $region16: #{conv_dropout_norm_nonlin.3} parent=11 // pred_fallthru
        _
    $region12: #{conv_dropout_norm_nonlin.3} parent=5 // pred_fallthru
      _
    %p99 = scmp.lt.s32.totalorder %s8, 2
    // Predicated region
    $region17: #{conv_dropout_norm_nonlin.3} parent=5 // pred_check
      %p100 = pneg %p99
    $region18: #{conv_dropout_norm_nonlin.3} parent=5 // pred_check_branch
      %102 = sbr.rel (%p100) target = $region20
    $region19: #{conv_dropout_norm_nonlin.3} parent=5 // pred_region
      // Predicated region
      $region21: #{conv_dropout_norm_nonlin.3} parent=19 // pred_check
        %p103 = pneg %p49
      $region22: #{conv_dropout_norm_nonlin.3} parent=19 // pred_check_branch
        %105 = sbr.rel (%p103) target = $region24
      $region23: #{conv_dropout_norm_nonlin.3} parent=19 // pred_region
        %s106 = smul.u32 64, %s8
        %p107 = scmp.lt.s32.totalorder %s106, 127
        %s108 = scalar_select %p107, %s106, 127
        %s109 = smul.addr %s108, 8
        %s110 = scalar_lea.vmem %s1, %s109
        %s111 = smul.u32 64, %s8
      $region24: #{conv_dropout_norm_nonlin.3} parent=19 // pred_fallthru
        _
    $region20: #{conv_dropout_norm_nonlin.3} parent=5 // pred_fallthru
      _
    %p112 = scmp.le.s32.totalorder 1, %s8
    %p113 = scmp.lt.s32.totalorder %s8, 3
    %p114 = pnand %p112, %p113
    %p115 = pneg %p114
    // Predicated region
    $region25: #{conv_dropout_norm_nonlin.3} parent=5 // pred_check
      _
    $region26: #{conv_dropout_norm_nonlin.3} parent=5 // pred_check_branch
      %117 = sbr.rel (%p114) target = $region28
    $region27: #{conv_dropout_norm_nonlin.3} parent=5 // pred_region
      %s118 = ssub.s32 %s8, 1
      %p119 = pneg %p29
      %p120 = pneg %p26
      %s121 = smul.u32 64, %s13
      %p122 = scmp.lt.s32.totalorder %s121, 127
      %s123 = scalar_select %p122, %s121, 127
      %s124 = smul.addr %s123, 8
      %s125 = scalar_lea.vmem %s1, %s124
      %p126 = pneg %p55
      %p127 = pneg %p52
      %p128 = pneg %p81
      %p129 = pneg %p78
      %s130 = smul.u32 64, %s13
      %p131 = scmp.lt.s32.totalorder %s130, 127
      %s132 = scalar_select %p131, %s130, 127
      %s133 = smul.addr %s132, 8
      %s134 = scalar_lea.vmem %s2, %s133
      %s135 = smul.u32 64, %s13
      %p136 = scmp.lt.s32.totalorder %s135, 127
      %s137 = scalar_select %p136, %s135, 127
      %s138 = smul.addr %s137, 8
      %s139 = scalar_lea.vmem %s1, %s138
      %s140 = smul.u32 64, %s13
      %s141 = smul.u32 64, %s13
      %p142 = scmp.lt.s32.totalorder %s141, 127
      %s143 = scalar_select %p142, %s141, 127
      %s144 = smul.addr %s143, 8
      %s145 = scalar_lea.vmem %s2, %s144
      %s146 = smul.u32 64, %s13
      %v147 = vld [vmem:[%s139] sm:$0xff]
      %v148 = vld [vmem:[%s139 + $0x8] sm:$0xff]
      %v149 = vld [vmem:[%s139 + $0x10] sm:$0xff]
      %v150 = vld [vmem:[%s139 + $0x18] sm:$0xff]
      %v151 = vld [vmem:[%s139 + $0x20] sm:$0xff]
      %v152 = vld [vmem:[%s139 + $0x28] sm:$0xff]
      %v153 = vld [vmem:[%s139 + $0x30] sm:$0xff]
      %v154 = vld [vmem:[%s139 + $0x38] sm:$0xff]
      %v155 = vld [vmem:[%s139 + $0x40] sm:$0xff]
      %v156 = vld [vmem:[%s139 + $0x48] sm:$0xff]
      %v157 = vld [vmem:[%s139 + $0x50] sm:$0xff]
      %v158 = vld [vmem:[%s139 + $0x58] sm:$0xff]
      %v159 = vld [vmem:[%s139 + $0x60] sm:$0xff]
      %v160 = vld [vmem:[%s139 + $0x68] sm:$0xff]
      %v161 = vld [vmem:[%s139 + $0x70] sm:$0xff]
      %v162 = vld [vmem:[%s139 + $0x78] sm:$0xff]
      %v163 = vld [vmem:[%s139 + $0x80] sm:$0xff]
      %v164 = vld [vmem:[%s139 + $0x88] sm:$0xff]
      %v165 = vld [vmem:[%s139 + $0x90] sm:$0xff]
      %v166 = vld [vmem:[%s139 + $0x98] sm:$0xff]
      %v167 = vld [vmem:[%s139 + $0xa0] sm:$0xff]
      %v168 = vld [vmem:[%s139 + $0xa8] sm:$0xff]
      %v169 = vld [vmem:[%s139 + $0xb0] sm:$0xff]
      %v170 = vld [vmem:[%s139 + $0xb8] sm:$0xff]
      %v171 = vld [vmem:[%s139 + $0xc0] sm:$0xff]
      %v172 = vld [vmem:[%s139 + $0xc8] sm:$0xff]
      %v173 = vld [vmem:[%s139 + $0xd0] sm:$0xff]
      %v174 = vld [vmem:[%s139 + $0xd8] sm:$0xff]
      %v175 = vld [vmem:[%s139 + $0xe0] sm:$0xff]
      %v176 = vld [vmem:[%s139 + $0xe8] sm:$0xff]
      %v177 = vld [vmem:[%s139 + $0xf0] sm:$0xff]
      %v178 = vld [vmem:[%s139 + $0xf8] sm:$0xff]
      %v179 = vld [vmem:[%s139 + $0x100] sm:$0xff]
      %v180 = vld [vmem:[%s139 + $0x108] sm:$0xff]
      %v181 = vld [vmem:[%s139 + $0x110] sm:$0xff]
      %v182 = vld [vmem:[%s139 + $0x118] sm:$0xff]
      %v183 = vld [vmem:[%s139 + $0x120] sm:$0xff]
      %v184 = vld [vmem:[%s139 + $0x128] sm:$0xff]
      %v185 = vld [vmem:[%s139 + $0x130] sm:$0xff]
      %v186 = vld [vmem:[%s139 + $0x138] sm:$0xff]
      %v187 = vld [vmem:[%s139 + $0x140] sm:$0xff]
      %v188 = vld [vmem:[%s139 + $0x148] sm:$0xff]
      %v189 = vld [vmem:[%s139 + $0x150] sm:$0xff]
      %v190 = vld [vmem:[%s139 + $0x158] sm:$0xff]
      %v191 = vld [vmem:[%s139 + $0x160] sm:$0xff]
      %v192 = vld [vmem:[%s139 + $0x168] sm:$0xff]
      %v193 = vld [vmem:[%s139 + $0x170] sm:$0xff]
      %v194 = vld [vmem:[%s139 + $0x178] sm:$0xff]
      %v195 = vld [vmem:[%s139 + $0x180] sm:$0xff]
      %v196 = vld [vmem:[%s139 + $0x188] sm:$0xff]
      %v197 = vld [vmem:[%s139 + $0x190] sm:$0xff]
      %v198 = vld [vmem:[%s139 + $0x198] sm:$0xff]
      %v199 = vld [vmem:[%s139 + $0x1a0] sm:$0xff]
      %v200 = vld [vmem:[%s139 + $0x1a8] sm:$0xff]
      %v201 = vld [vmem:[%s139 + $0x1b0] sm:$0xff]
      %v202 = vld [vmem:[%s139 + $0x1b8] sm:$0xff]
      %v203 = vld [vmem:[%s139 + $0x1c0] sm:$0xff]
      %v204 = vld [vmem:[%s139 + $0x1c8] sm:$0xff]
      %v205 = vld [vmem:[%s139 + $0x1d0] sm:$0xff]
      %v206 = vld [vmem:[%s139 + $0x1d8] sm:$0xff]
      %v207 = vld [vmem:[%s139 + $0x1e0] sm:$0xff]
      %v208 = vld [vmem:[%s139 + $0x1e8] sm:$0xff]
      %v209 = vld [vmem:[%s139 + $0x1f0] sm:$0xff]
      %v210 = vld [vmem:[%s139 + $0x1f8] sm:$0xff]
      %v211 = vld [vmem:[%s0] sm:$0x1]
      %v212 = vlaneseq
      %v213 = vshrl.u32 %v212, 7
      %v214 = vsub.s32 0, %v213
      %v215 = vrot.slane %v211, %v214
      %v216 = vmul.f32 %v147, %v215
      %v217 = vmul.f32 %v148, %v215
      %v218 = vmul.f32 %v149, %v215
      %v219 = vmul.f32 %v150, %v215
      %v220 = vmul.f32 %v151, %v215
      %v221 = vmul.f32 %v152, %v215
      %v222 = vmul.f32 %v153, %v215
      %v223 = vmul.f32 %v154, %v215
      %v224 = vmul.f32 %v155, %v215
      %v225 = vmul.f32 %v156, %v215
      %v226 = vmul.f32 %v157, %v215
      %v227 = vmul.f32 %v158, %v215
      %v228 = vmul.f32 %v159, %v215
      %v229 = vmul.f32 %v160, %v215
      %v230 = vmul.f32 %v161, %v215
      %v231 = vmul.f32 %v162, %v215
      %v232 = vmul.f32 %v163, %v215
      %v233 = vmul.f32 %v164, %v215
      %v234 = vmul.f32 %v165, %v215
      %v235 = vmul.f32 %v166, %v215
      %v236 = vmul.f32 %v167, %v215
      %v237 = vmul.f32 %v168, %v215
      %v238 = vmul.f32 %v169, %v215
      %v239 = vmul.f32 %v170, %v215
      %v240 = vmul.f32 %v171, %v215
      %v241 = vmul.f32 %v172, %v215
      %v242 = vmul.f32 %v173, %v215
      %v243 = vmul.f32 %v174, %v215
      %v244 = vmul.f32 %v175, %v215
      %v245 = vmul.f32 %v176, %v215
      %v246 = vmul.f32 %v177, %v215
      %v247 = vmul.f32 %v178, %v215
      %v248 = vmul.f32 %v179, %v215
      %v249 = vmul.f32 %v180, %v215
      %v250 = vmul.f32 %v181, %v215
      %v251 = vmul.f32 %v182, %v215
      %v252 = vmul.f32 %v183, %v215
      %v253 = vmul.f32 %v184, %v215
      %v254 = vmul.f32 %v185, %v215
      %v255 = vmul.f32 %v186, %v215
      %v256 = vmul.f32 %v187, %v215
      %v257 = vmul.f32 %v188, %v215
      %v258 = vmul.f32 %v189, %v215
      %v259 = vmul.f32 %v190, %v215
      %v260 = vmul.f32 %v191, %v215
      %v261 = vmul.f32 %v192, %v215
      %v262 = vmul.f32 %v193, %v215
      %v263 = vmul.f32 %v194, %v215
      %v264 = vmul.f32 %v195, %v215
      %v265 = vmul.f32 %v196, %v215
      %v266 = vmul.f32 %v197, %v215
      %v267 = vmul.f32 %v198, %v215
      %v268 = vmul.f32 %v199, %v215
      %v269 = vmul.f32 %v200, %v215
      %v270 = vmul.f32 %v201, %v215
      %v271 = vmul.f32 %v202, %v215
      %v272 = vmul.f32 %v203, %v215
      %v273 = vmul.f32 %v204, %v215
      %v274 = vmul.f32 %v205, %v215
      %v275 = vmul.f32 %v206, %v215
      %v276 = vmul.f32 %v207, %v215
      %v277 = vmul.f32 %v208, %v215
      %v278 = vmul.f32 %v209, %v215
      %v279 = vmul.f32 %v210, %v215
      %v280 = vld [vmem:[%s0 + $0x1] sm:$0x1]
      %v281 = vlaneseq
      %v282 = vshrl.u32 %v281, 7
      %v283 = vsub.s32 0, %v282
      %v284 = vrot.slane %v280, %v283
      %v285 = vadd.f32 %v216, %v284
      %v286 = vadd.f32 %v217, %v284
      %v287 = vadd.f32 %v218, %v284
      %v288 = vadd.f32 %v219, %v284
      %v289 = vadd.f32 %v220, %v284
      %v290 = vadd.f32 %v221, %v284
      %v291 = vadd.f32 %v222, %v284
      %v292 = vadd.f32 %v223, %v284
      %v293 = vadd.f32 %v224, %v284
      %v294 = vadd.f32 %v225, %v284
      %v295 = vadd.f32 %v226, %v284
      %v296 = vadd.f32 %v227, %v284
      %v297 = vadd.f32 %v228, %v284
      %v298 = vadd.f32 %v229, %v284
      %v299 = vadd.f32 %v230, %v284
      %v300 = vadd.f32 %v231, %v284
      %v301 = vadd.f32 %v232, %v284
      %v302 = vadd.f32 %v233, %v284
      %v303 = vadd.f32 %v234, %v284
      %v304 = vadd.f32 %v235, %v284
      %v305 = vadd.f32 %v236, %v284
      %v306 = vadd.f32 %v237, %v284
      %v307 = vadd.f32 %v238, %v284
      %v308 = vadd.f32 %v239, %v284
      %v309 = vadd.f32 %v240, %v284
      %v310 = vadd.f32 %v241, %v284
      %v311 = vadd.f32 %v242, %v284
      %v312 = vadd.f32 %v243, %v284
      %v313 = vadd.f32 %v244, %v284
      %v314 = vadd.f32 %v245, %v284
      %v315 = vadd.f32 %v246, %v284
      %v316 = vadd.f32 %v247, %v284
      %v317 = vadd.f32 %v248, %v284
      %v318 = vadd.f32 %v249, %v284
      %v319 = vadd.f32 %v250, %v284
      %v320 = vadd.f32 %v251, %v284
      %v321 = vadd.f32 %v252, %v284
      %v322 = vadd.f32 %v253, %v284
      %v323 = vadd.f32 %v254, %v284
      %v324 = vadd.f32 %v255, %v284
      %v325 = vadd.f32 %v256, %v284
      %v326 = vadd.f32 %v257, %v284
      %v327 = vadd.f32 %v258, %v284
      %v328 = vadd.f32 %v259, %v284
      %v329 = vadd.f32 %v260, %v284
      %v330 = vadd.f32 %v261, %v284
      %v331 = vadd.f32 %v262, %v284
      %v332 = vadd.f32 %v263, %v284
      %v333 = vadd.f32 %v264, %v284
      %v334 = vadd.f32 %v265, %v284
      %v335 = vadd.f32 %v266, %v284
      %v336 = vadd.f32 %v267, %v284
      %v337 = vadd.f32 %v268, %v284
      %v338 = vadd.f32 %v269, %v284
      %v339 = vadd.f32 %v270, %v284
      %v340 = vadd.f32 %v271, %v284
      %v341 = vadd.f32 %v272, %v284
      %v342 = vadd.f32 %v273, %v284
      %v343 = vadd.f32 %v274, %v284
      %v344 = vadd.f32 %v275, %v284
      %v345 = vadd.f32 %v276, %v284
      %v346 = vadd.f32 %v277, %v284
      %v347 = vadd.f32 %v278, %v284
      %v348 = vadd.f32 %v279, %v284
      %vm349 = vcmp.ge.f32.partialorder %v285, 0.0
      %vm350 = vcmp.ge.f32.partialorder %v286, 0.0
      %vm351 = vcmp.ge.f32.partialorder %v287, 0.0
      %vm352 = vcmp.ge.f32.partialorder %v288, 0.0
      %vm353 = vcmp.ge.f32.partialorder %v289, 0.0
      %vm354 = vcmp.ge.f32.partialorder %v290, 0.0
      %vm355 = vcmp.ge.f32.partialorder %v291, 0.0
      %vm356 = vcmp.ge.f32.partialorder %v292, 0.0
      %vm357 = vcmp.ge.f32.partialorder %v293, 0.0
      %vm358 = vcmp.ge.f32.partialorder %v294, 0.0
      %vm359 = vcmp.ge.f32.partialorder %v295, 0.0
      %vm360 = vcmp.ge.f32.partialorder %v296, 0.0
      %vm361 = vcmp.ge.f32.partialorder %v297, 0.0
      %vm362 = vcmp.ge.f32.partialorder %v298, 0.0
      %vm363 = vcmp.ge.f32.partialorder %v299, 0.0
      %vm364 = vcmp.ge.f32.partialorder %v300, 0.0
      %vm365 = vcmp.ge.f32.partialorder %v301, 0.0
      %vm366 = vcmp.ge.f32.partialorder %v302, 0.0
      %vm367 = vcmp.ge.f32.partialorder %v303, 0.0
      %vm368 = vcmp.ge.f32.partialorder %v304, 0.0
      %vm369 = vcmp.ge.f32.partialorder %v305, 0.0
      %vm370 = vcmp.ge.f32.partialorder %v306, 0.0
      %vm371 = vcmp.ge.f32.partialorder %v307, 0.0
      %vm372 = vcmp.ge.f32.partialorder %v308, 0.0
      %vm373 = vcmp.ge.f32.partialorder %v309, 0.0
      %vm374 = vcmp.ge.f32.partialorder %v310, 0.0
      %vm375 = vcmp.ge.f32.partialorder %v311, 0.0
      %vm376 = vcmp.ge.f32.partialorder %v312, 0.0
      %vm377 = vcmp.ge.f32.partialorder %v313, 0.0
      %vm378 = vcmp.ge.f32.partialorder %v314, 0.0
      %vm379 = vcmp.ge.f32.partialorder %v315, 0.0
      %vm380 = vcmp.ge.f32.partialorder %v316, 0.0
      %vm381 = vcmp.ge.f32.partialorder %v317, 0.0
      %vm382 = vcmp.ge.f32.partialorder %v318, 0.0
      %vm383 = vcmp.ge.f32.partialorder %v319, 0.0
      %vm384 = vcmp.ge.f32.partialorder %v320, 0.0
      %vm385 = vcmp.ge.f32.partialorder %v321, 0.0
      %vm386 = vcmp.ge.f32.partialorder %v322, 0.0
      %vm387 = vcmp.ge.f32.partialorder %v323, 0.0
      %vm388 = vcmp.ge.f32.partialorder %v324, 0.0
      %vm389 = vcmp.ge.f32.partialorder %v325, 0.0
      %vm390 = vcmp.ge.f32.partialorder %v326, 0.0
      %vm391 = vcmp.ge.f32.partialorder %v327, 0.0
      %vm392 = vcmp.ge.f32.partialorder %v328, 0.0
      %vm393 = vcmp.ge.f32.partialorder %v329, 0.0
      %vm394 = vcmp.ge.f32.partialorder %v330, 0.0
      %vm395 = vcmp.ge.f32.partialorder %v331, 0.0
      %vm396 = vcmp.ge.f32.partialorder %v332, 0.0
      %vm397 = vcmp.ge.f32.partialorder %v333, 0.0
      %vm398 = vcmp.ge.f32.partialorder %v334, 0.0
      %vm399 = vcmp.ge.f32.partialorder %v335, 0.0
      %vm400 = vcmp.ge.f32.partialorder %v336, 0.0
      %vm401 = vcmp.ge.f32.partialorder %v337, 0.0
      %vm402 = vcmp.ge.f32.partialorder %v338, 0.0
      %vm403 = vcmp.ge.f32.partialorder %v339, 0.0
      %vm404 = vcmp.ge.f32.partialorder %v340, 0.0
      %vm405 = vcmp.ge.f32.partialorder %v341, 0.0
      %vm406 = vcmp.ge.f32.partialorder %v342, 0.0
      %vm407 = vcmp.ge.f32.partialorder %v343, 0.0
      %vm408 = vcmp.ge.f32.partialorder %v344, 0.0
      %vm409 = vcmp.ge.f32.partialorder %v345, 0.0
      %vm410 = vcmp.ge.f32.partialorder %v346, 0.0
      %vm411 = vcmp.ge.f32.partialorder %v347, 0.0
      %vm412 = vcmp.ge.f32.partialorder %v348, 0.0
      %v413 = vmul.f32 %v285, 0.01
      %v414 = vmul.f32 %v286, 0.01
      %v415 = vmul.f32 %v287, 0.01
      %v416 = vmul.f32 %v288, 0.01
      %v417 = vmul.f32 %v289, 0.01
      %v418 = vmul.f32 %v290, 0.01
      %v419 = vmul.f32 %v291, 0.01
      %v420 = vmul.f32 %v292, 0.01
      %v421 = vmul.f32 %v293, 0.01
      %v422 = vmul.f32 %v294, 0.01
      %v423 = vmul.f32 %v295, 0.01
      %v424 = vmul.f32 %v296, 0.01
      %v425 = vmul.f32 %v297, 0.01
      %v426 = vmul.f32 %v298, 0.01
      %v427 = vmul.f32 %v299, 0.01
      %v428 = vmul.f32 %v300, 0.01
      %v429 = vmul.f32 %v301, 0.01
      %v430 = vmul.f32 %v302, 0.01
      %v431 = vmul.f32 %v303, 0.01
      %v432 = vmul.f32 %v304, 0.01
      %v433 = vmul.f32 %v305, 0.01
      %v434 = vmul.f32 %v306, 0.01
      %v435 = vmul.f32 %v307, 0.01
      %v436 = vmul.f32 %v308, 0.01
      %v437 = vmul.f32 %v309, 0.01
      %v438 = vmul.f32 %v310, 0.01
      %v439 = vmul.f32 %v311, 0.01
      %v440 = vmul.f32 %v312, 0.01
      %v441 = vmul.f32 %v313, 0.01
      %v442 = vmul.f32 %v314, 0.01
      %v443 = vmul.f32 %v315, 0.01
      %v444 = vmul.f32 %v316, 0.01
      %v445 = vmul.f32 %v317, 0.01
      %v446 = vmul.f32 %v318, 0.01
      %v447 = vmul.f32 %v319, 0.01
      %v448 = vmul.f32 %v320, 0.01
      %v449 = vmul.f32 %v321, 0.01
      %v450 = vmul.f32 %v322, 0.01
      %v451 = vmul.f32 %v323, 0.01
      %v452 = vmul.f32 %v324, 0.01
      %v453 = vmul.f32 %v325, 0.01
      %v454 = vmul.f32 %v326, 0.01
      %v455 = vmul.f32 %v327, 0.01
      %v456 = vmul.f32 %v328, 0.01
      %v457 = vmul.f32 %v329, 0.01
      %v458 = vmul.f32 %v330, 0.01
      %v459 = vmul.f32 %v331, 0.01
      %v460 = vmul.f32 %v332, 0.01
      %v461 = vmul.f32 %v333, 0.01
      %v462 = vmul.f32 %v334, 0.01
      %v463 = vmul.f32 %v335, 0.01
      %v464 = vmul.f32 %v336, 0.01
      %v465 = vmul.f32 %v337, 0.01
      %v466 = vmul.f32 %v338, 0.01
      %v467 = vmul.f32 %v339, 0.01
      %v468 = vmul.f32 %v340, 0.01
      %v469 = vmul.f32 %v341, 0.01
      %v470 = vmul.f32 %v342, 0.01
      %v471 = vmul.f32 %v343, 0.01
      %v472 = vmul.f32 %v344, 0.01
      %v473 = vmul.f32 %v345, 0.01
      %v474 = vmul.f32 %v346, 0.01
      %v475 = vmul.f32 %v347, 0.01
      %v476 = vmul.f32 %v348, 0.01
      %v477 = vsel %vm349, %v285, %v413
      %v478 = vsel %vm350, %v286, %v414
      %v479 = vsel %vm351, %v287, %v415
      %v480 = vsel %vm352, %v288, %v416
      %v481 = vsel %vm353, %v289, %v417
      %v482 = vsel %vm354, %v290, %v418
      %v483 = vsel %vm355, %v291, %v419
      %v484 = vsel %vm356, %v292, %v420
      %v485 = vsel %vm357, %v293, %v421
      %v486 = vsel %vm358, %v294, %v422
      %v487 = vsel %vm359, %v295, %v423
      %v488 = vsel %vm360, %v296, %v424
      %v489 = vsel %vm361, %v297, %v425
      %v490 = vsel %vm362, %v298, %v426
      %v491 = vsel %vm363, %v299, %v427
      %v492 = vsel %vm364, %v300, %v428
      %v493 = vsel %vm365, %v301, %v429
      %v494 = vsel %vm366, %v302, %v430
      %v495 = vsel %vm367, %v303, %v431
      %v496 = vsel %vm368, %v304, %v432
      %v497 = vsel %vm369, %v305, %v433
      %v498 = vsel %vm370, %v306, %v434
      %v499 = vsel %vm371, %v307, %v435
      %v500 = vsel %vm372, %v308, %v436
      %v501 = vsel %vm373, %v309, %v437
      %v502 = vsel %vm374, %v310, %v438
      %v503 = vsel %vm375, %v311, %v439
      %v504 = vsel %vm376, %v312, %v440
      %v505 = vsel %vm377, %v313, %v441
      %v506 = vsel %vm378, %v314, %v442
      %v507 = vsel %vm379, %v315, %v443
      %v508 = vsel %vm380, %v316, %v444
      %v509 = vsel %vm381, %v317, %v445
      %v510 = vsel %vm382, %v318, %v446
      %v511 = vsel %vm383, %v319, %v447
      %v512 = vsel %vm384, %v320, %v448
      %v513 = vsel %vm385, %v321, %v449
      %v514 = vsel %vm386, %v322, %v450
      %v515 = vsel %vm387, %v323, %v451
      %v516 = vsel %vm388, %v324, %v452
      %v517 = vsel %vm389, %v325, %v453
      %v518 = vsel %vm390, %v326, %v454
      %v519 = vsel %vm391, %v327, %v455
      %v520 = vsel %vm392, %v328, %v456
      %v521 = vsel %vm393, %v329, %v457
      %v522 = vsel %vm394, %v330, %v458
      %v523 = vsel %vm395, %v331, %v459
      %v524 = vsel %vm396, %v332, %v460
      %v525 = vsel %vm397, %v333, %v461
      %v526 = vsel %vm398, %v334, %v462
      %v527 = vsel %vm399, %v335, %v463
      %v528 = vsel %vm400, %v336, %v464
      %v529 = vsel %vm401, %v337, %v465
      %v530 = vsel %vm402, %v338, %v466
      %v531 = vsel %vm403, %v339, %v467
      %v532 = vsel %vm404, %v340, %v468
      %v533 = vsel %vm405, %v341, %v469
      %v534 = vsel %vm406, %v342, %v470
      %v535 = vsel %vm407, %v343, %v471
      %v536 = vsel %vm408, %v344, %v472
      %v537 = vsel %vm409, %v345, %v473
      %v538 = vsel %vm410, %v346, %v474
      %v539 = vsel %vm411, %v347, %v475
      %v540 = vsel %vm412, %v348, %v476
      %541 = vst [vmem:[%s145] sm:$0xff] %v477
      %542 = vst [vmem:[%s145 + $0x8] sm:$0xff] %v478
      %543 = vst [vmem:[%s145 + $0x10] sm:$0xff] %v479
      %544 = vst [vmem:[%s145 + $0x18] sm:$0xff] %v480
      %545 = vst [vmem:[%s145 + $0x20] sm:$0xff] %v481
      %546 = vst [vmem:[%s145 + $0x28] sm:$0xff] %v482
      %547 = vst [vmem:[%s145 + $0x30] sm:$0xff] %v483
      %548 = vst [vmem:[%s145 + $0x38] sm:$0xff] %v484
      %549 = vst [vmem:[%s145 + $0x40] sm:$0xff] %v485
      %550 = vst [vmem:[%s145 + $0x48] sm:$0xff] %v486
      %551 = vst [vmem:[%s145 + $0x50] sm:$0xff] %v487
      %552 = vst [vmem:[%s145 + $0x58] sm:$0xff] %v488
      %553 = vst [vmem:[%s145 + $0x60] sm:$0xff] %v489
      %554 = vst [vmem:[%s145 + $0x68] sm:$0xff] %v490
      %555 = vst [vmem:[%s145 + $0x70] sm:$0xff] %v491
      %556 = vst [vmem:[%s145 + $0x78] sm:$0xff] %v492
      %557 = vst [vmem:[%s145 + $0x80] sm:$0xff] %v493
      %558 = vst [vmem:[%s145 + $0x88] sm:$0xff] %v494
      %559 = vst [vmem:[%s145 + $0x90] sm:$0xff] %v495
      %560 = vst [vmem:[%s145 + $0x98] sm:$0xff] %v496
      %561 = vst [vmem:[%s145 + $0xa0] sm:$0xff] %v497
      %562 = vst [vmem:[%s145 + $0xa8] sm:$0xff] %v498
      %563 = vst [vmem:[%s145 + $0xb0] sm:$0xff] %v499
      %564 = vst [vmem:[%s145 + $0xb8] sm:$0xff] %v500
      %565 = vst [vmem:[%s145 + $0xc0] sm:$0xff] %v501
      %566 = vst [vmem:[%s145 + $0xc8] sm:$0xff] %v502
      %567 = vst [vmem:[%s145 + $0xd0] sm:$0xff] %v503
      %568 = vst [vmem:[%s145 + $0xd8] sm:$0xff] %v504
      %569 = vst [vmem:[%s145 + $0xe0] sm:$0xff] %v505
      %570 = vst [vmem:[%s145 + $0xe8] sm:$0xff] %v506
      %571 = vst [vmem:[%s145 + $0xf0] sm:$0xff] %v507
      %572 = vst [vmem:[%s145 + $0xf8] sm:$0xff] %v508
      %573 = vst [vmem:[%s145 + $0x100] sm:$0xff] %v509
      %574 = vst [vmem:[%s145 + $0x108] sm:$0xff] %v510
      %575 = vst [vmem:[%s145 + $0x110] sm:$0xff] %v511
      %576 = vst [vmem:[%s145 + $0x118] sm:$0xff] %v512
      %577 = vst [vmem:[%s145 + $0x120] sm:$0xff] %v513
      %578 = vst [vmem:[%s145 + $0x128] sm:$0xff] %v514
      %579 = vst [vmem:[%s145 + $0x130] sm:$0xff] %v515
      %580 = vst [vmem:[%s145 + $0x138] sm:$0xff] %v516
      %581 = vst [vmem:[%s145 + $0x140] sm:$0xff] %v517
      %582 = vst [vmem:[%s145 + $0x148] sm:$0xff] %v518
      %583 = vst [vmem:[%s145 + $0x150] sm:$0xff] %v519
      %584 = vst [vmem:[%s145 + $0x158] sm:$0xff] %v520
      %585 = vst [vmem:[%s145 + $0x160] sm:$0xff] %v521
      %586 = vst [vmem:[%s145 + $0x168] sm:$0xff] %v522
      %587 = vst [vmem:[%s145 + $0x170] sm:$0xff] %v523
      %588 = vst [vmem:[%s145 + $0x178] sm:$0xff] %v524
      %589 = vst [vmem:[%s145 + $0x180] sm:$0xff] %v525
      %590 = vst [vmem:[%s145 + $0x188] sm:$0xff] %v526
      %591 = vst [vmem:[%s145 + $0x190] sm:$0xff] %v527
      %592 = vst [vmem:[%s145 + $0x198] sm:$0xff] %v528
      %593 = vst [vmem:[%s145 + $0x1a0] sm:$0xff] %v529
      %594 = vst [vmem:[%s145 + $0x1a8] sm:$0xff] %v530
      %595 = vst [vmem:[%s145 + $0x1b0] sm:$0xff] %v531
      %596 = vst [vmem:[%s145 + $0x1b8] sm:$0xff] %v532
      %597 = vst [vmem:[%s145 + $0x1c0] sm:$0xff] %v533
      %598 = vst [vmem:[%s145 + $0x1c8] sm:$0xff] %v534
      %599 = vst [vmem:[%s145 + $0x1d0] sm:$0xff] %v535
      %600 = vst [vmem:[%s145 + $0x1d8] sm:$0xff] %v536
      %601 = vst [vmem:[%s145 + $0x1e0] sm:$0xff] %v537
      %602 = vst [vmem:[%s145 + $0x1e8] sm:$0xff] %v538
      %603 = vst [vmem:[%s145 + $0x1f0] sm:$0xff] %v539
      %604 = vst [vmem:[%s145 + $0x1f8] sm:$0xff] %v540
      %s605 = smul.u32 64, %s13
      %p606 = scmp.lt.s32.totalorder %s605, 127
      %s607 = scalar_select %p606, %s605, 127
      %s608 = smul.addr %s607, 8
      %s609 = scalar_lea.vmem %s2, %s608
      // Predicated region
      $region29: #{conv_dropout_norm_nonlin.3} parent=27 // pred_check
        %p610 = pneg %p78
      $region30: #{conv_dropout_norm_nonlin.3} parent=27 // pred_check_branch
        %612 = sbr.rel (%p610) target = $region32
      $region31: #{conv_dropout_norm_nonlin.3} parent=27 // pred_region
        %s613 = smul.u32 64, %s13
      $region32: #{conv_dropout_norm_nonlin.3} parent=27 // pred_fallthru
        _
    $region28: #{conv_dropout_norm_nonlin.3} parent=5 // pred_fallthru
      _
    %p614 = scmp.le.s32.totalorder 2, %s8
    // Predicated region
    $region33: #{conv_dropout_norm_nonlin.3} parent=5 // pred_check
      %p615 = pneg %p614
    $region34: #{conv_dropout_norm_nonlin.3} parent=5 // pred_check_branch
      %617 = sbr.rel (%p615) target = $region36
    $region35: #{conv_dropout_norm_nonlin.3} parent=5 // pred_region
      %s618 = ssub.s32 %s8, 2
      // Predicated region
      $region37: #{conv_dropout_norm_nonlin.3} parent=35 // pred_check
        %p619 = pneg %p84
      $region38: #{conv_dropout_norm_nonlin.3} parent=35 // pred_check_branch
        %621 = sbr.rel (%p619) target = $region40
      $region39: #{conv_dropout_norm_nonlin.3} parent=35 // pred_region
        %s622 = smul.u32 64, %s14
        %p623 = scmp.lt.s32.totalorder %s622, 127
        %s624 = scalar_select %p623, %s622, 127
        %s625 = smul.addr %s624, 8
        %s626 = scalar_lea.vmem %s2, %s625
      $region40: #{conv_dropout_norm_nonlin.3} parent=35 // pred_fallthru
        _
    $region36: #{conv_dropout_norm_nonlin.3} parent=5 // pred_fallthru
      _
  $region6: #{conv_dropout_norm_nonlin.3} parent=0 // loop_footer
    %s12 = sadd.s32 1, %s8
  $region7: #{conv_dropout_norm_nonlin.3} parent=0 // loop_footer_branch
    %7 = sbr.rel target = $region3
  $region8: #{conv_dropout_norm_nonlin.3} parent=0 // loop_exit
    _

// kernel: conv_dropout_norm_nonlin.2
$region0: #{conv_dropout_norm_nonlin.2}
  #allocation0 [shape = 'u32[]', space=smem, size = 0x4, offset = 0x4, fixed_abs, tag = 'smem constant byte address 0x4 - core index']
  #allocation1 [shape = 'u32[144,128]{1,0:T(1,128)}', space=vmem, size = 0x12000, scoped, tag = 'internal scratch']
  %s0 = inlined_call_operand.vmem [shape: f32[2,10,10,10,4], index: 0, kind: input, shape index: {}]
  %s1 = inlined_call_operand.vmem [shape: f32[27,4,128], index: 1, kind: input, shape index: {}]
  %s2 = inlined_call_operand.vmem [shape: f32[1,128], index: 2, kind: input, shape index: {}]
  %s3 = inlined_call_operand.vmem [shape: f32[1,128], index: 3, kind: input, shape index: {}]
  %s4 = inlined_call_operand.vmem [shape: f32[1,128], index: 4, kind: input, shape index: {}]
  %s5 = inlined_call_operand.vmem [shape: f32[16,64,128], index: 5, kind: output, shape index: {0}]
  %s6 = inlined_call_operand.vmem [shape: f32[8,128], index: 6, kind: output, shape index: {1}]
  %7 = xla_tuple %s5, %s6
  %s8 = sld [smem:[#allocation0]]
  $region69: #{conv_dropout_norm_nonlin.2} parent=0
    _
  %s10 = ssub.s32 1, %s8
  %s11 = scalar_select 0, %s10, %s8
  loop: start=0, step=1, limit=18
  $region2: #{conv_dropout_norm_nonlin.2} parent=0 // loop_pre_header
    _
  $region3: #{conv_dropout_norm_nonlin.2} parent=0 // loop_header
    %s13 = sphi 0, %s17
    %p14 = scmp.ge.s32.totalorder %s13, 18
    %s20 = sphi 0, %s32
    %s21 = sphi 0, %s28
    %s22 = sphi 0, %s20
    %s23 = sphi 0, %s21
    %s24 = sphi 0, %s22
    %s25 = sphi 0, %s23
    %s35 = sphi 0, %s37
    %s38 = sphi 0, %s35
    %s39 = sphi 0, %s38
    %s55 = sphi 0, %s39
    %s59 = sphi 0, %s59
    %s61 = sphi 0, %s59
    %s62 = sphi 0, %s61
    %s76 = sphi 0, %s62
    %s80 = sphi 0, %s80
    %s82 = sphi 0, %s80
    %s83 = sphi 0, %s82
    %s97 = sphi 0, %s83
    %s101 = sphi 0, %s101
    %s103 = sphi 0, %s101
    %s104 = sphi 0, %s103
    %s118 = sphi 0, %s104
    %s122 = sphi 0, %s122
    %s124 = sphi 0, %s122
    %s125 = sphi 0, %s124
    %s139 = sphi 0, %s125
    %s149 = sphi 0, %s151
    %s152 = sphi 0, %s149
    %s153 = sphi 0, %s152
    %s169 = sphi 0, %s153
    %s173 = sphi 0, %s173
    %s175 = sphi 0, %s173
    %s176 = sphi 0, %s175
    %s190 = sphi 0, %s176
  $region4: #{conv_dropout_norm_nonlin.2} parent=0 // loop_header_branch
    %16 = sbr.rel (%p14) target = $region8
  $region5: #{conv_dropout_norm_nonlin.2} parent=0 // loop_body
    %s18 = ssub.s32 %s13, 1
    %s19 = ssub.s32 %s13, 2
    %s26 = sadd.s32 1, %s21
    %p27 = scmp.ge.s32.totalorder %s26, 8
    %s28 = scalar_select %p27, 0, %s26
    %s29 = sadd.s32 1, %s20
    %s30 = scalar_select %p27, %s29, %s20
    %p31 = scmp.ge.s32.totalorder %s30, 2
    %s32 = scalar_select %p31, 0, %s30
    %s33 = ssub.s32 %s20, %s32
    %p34 = scmp.eq.s32.totalorder %s33, 0
    %s36 = sadd.s32 %s35, 1
    %s37 = scalar_select %p34, %s35, %s36
    %p40 = pneg %p34
    %p41 = scmp.eq.s32.totalorder %s13, 15
    %p42 = por %p40, %p41
    %p43 = scmp.ne.s32.totalorder %s35, %s38
    %p44 = scmp.eq.s32.totalorder %s13, 0
    %p45 = por %p43, %p44
    %p46 = scmp.ne.s32.totalorder %s35, %s38
    %p47 = scmp.eq.s32.totalorder %s18, 15
    %p48 = por %p46, %p47
    %p49 = scmp.ne.s32.totalorder %s38, %s39
    %p50 = scmp.eq.s32.totalorder %s18, 0
    %p51 = por %p49, %p50
    %p52 = scmp.ne.s32.totalorder %s38, %s39
    %p53 = scmp.eq.s32.totalorder %s19, 15
    %p54 = por %p52, %p53
    %p56 = scmp.ne.s32.totalorder %s39, %s55
    %p57 = scmp.eq.s32.totalorder %s19, 0
    %p58 = por %p56, %p57
    %s60 = sadd.s32 %s59, 1
    %p63 = scmp.eq.s32.totalorder %s13, 15
    %p64 = scmp.ne.s32.totalorder %s59, %s61
    %p65 = scmp.eq.s32.totalorder %s13, 0
    %p66 = por %p64, %p65
    %p67 = scmp.ne.s32.totalorder %s59, %s61
    %p68 = scmp.eq.s32.totalorder %s18, 15
    %p69 = por %p67, %p68
    %p70 = scmp.ne.s32.totalorder %s61, %s62
    %p71 = scmp.eq.s32.totalorder %s18, 0
    %p72 = por %p70, %p71
    %p73 = scmp.ne.s32.totalorder %s61, %s62
    %p74 = scmp.eq.s32.totalorder %s19, 15
    %p75 = por %p73, %p74
    %p77 = scmp.ne.s32.totalorder %s62, %s76
    %p78 = scmp.eq.s32.totalorder %s19, 0
    %p79 = por %p77, %p78
    %s81 = sadd.s32 %s80, 1
    %p84 = scmp.eq.s32.totalorder %s13, 15
    %p85 = scmp.ne.s32.totalorder %s80, %s82
    %p86 = scmp.eq.s32.totalorder %s13, 0
    %p87 = por %p85, %p86
    %p88 = scmp.ne.s32.totalorder %s80, %s82
    %p89 = scmp.eq.s32.totalorder %s18, 15
    %p90 = por %p88, %p89
    %p91 = scmp.ne.s32.totalorder %s82, %s83
    %p92 = scmp.eq.s32.totalorder %s18, 0
    %p93 = por %p91, %p92
    %p94 = scmp.ne.s32.totalorder %s82, %s83
    %p95 = scmp.eq.s32.totalorder %s19, 15
    %p96 = por %p94, %p95
    %p98 = scmp.ne.s32.totalorder %s83, %s97
    %p99 = scmp.eq.s32.totalorder %s19, 0
    %p100 = por %p98, %p99
    %s102 = sadd.s32 %s101, 1
    %p105 = scmp.eq.s32.totalorder %s13, 15
    %p106 = scmp.ne.s32.totalorder %s101, %s103
    %p107 = scmp.eq.s32.totalorder %s13, 0
    %p108 = por %p106, %p107
    %p109 = scmp.ne.s32.totalorder %s101, %s103
    %p110 = scmp.eq.s32.totalorder %s18, 15
    %p111 = por %p109, %p110
    %p112 = scmp.ne.s32.totalorder %s103, %s104
    %p113 = scmp.eq.s32.totalorder %s18, 0
    %p114 = por %p112, %p113
    %p115 = scmp.ne.s32.totalorder %s103, %s104
    %p116 = scmp.eq.s32.totalorder %s19, 15
    %p117 = por %p115, %p116
    %p119 = scmp.ne.s32.totalorder %s104, %s118
    %p120 = scmp.eq.s32.totalorder %s19, 0
    %p121 = por %p119, %p120
    %s123 = sadd.s32 %s122, 1
    %p126 = scmp.eq.s32.totalorder %s13, 15
    %p127 = scmp.ne.s32.totalorder %s122, %s124
    %p128 = scmp.eq.s32.totalorder %s13, 0
    %p129 = por %p127, %p128
    %p130 = scmp.ne.s32.totalorder %s122, %s124
    %p131 = scmp.eq.s32.totalorder %s18, 15
    %p132 = por %p130, %p131
    %p133 = scmp.ne.s32.totalorder %s124, %s125
    %p134 = scmp.eq.s32.totalorder %s18, 0
    %p135 = por %p133, %p134
    %p136 = scmp.ne.s32.totalorder %s124, %s125
    %p137 = scmp.eq.s32.totalorder %s19, 15
    %p138 = por %p136, %p137
    %p140 = scmp.ne.s32.totalorder %s125, %s139
    %p141 = scmp.eq.s32.totalorder %s19, 0
    %p142 = por %p140, %p141
    %s143 = smul.u32 %s20, 8
    %s144 = sadd.s32 %s143, %s21
    %s145 = smul.u32 %s32, 8
    %s146 = sadd.s32 %s145, %s28
    %s147 = ssub.s32 %s144, %s146
    %p148 = scmp.eq.s32.totalorder %s147, 0
    %s150 = sadd.s32 %s149, 1
    %s151 = scalar_select %p148, %s149, %s150
    %p154 = pneg %p148
    %p155 = scmp.eq.s32.totalorder %s13, 15
    %p156 = por %p154, %p155
    %p157 = scmp.ne.s32.totalorder %s149, %s152
    %p158 = scmp.eq.s32.totalorder %s13, 0
    %p159 = por %p157, %p158
    %p160 = scmp.ne.s32.totalorder %s149, %s152
    %p161 = scmp.eq.s32.totalorder %s18, 15
    %p162 = por %p160, %p161
    %p163 = scmp.ne.s32.totalorder %s152, %s153
    %p164 = scmp.eq.s32.totalorder %s18, 0
    %p165 = por %p163, %p164
    %p166 = scmp.ne.s32.totalorder %s152, %s153
    %p167 = scmp.eq.s32.totalorder %s19, 15
    %p168 = por %p166, %p167
    %p170 = scmp.ne.s32.totalorder %s153, %s169
    %p171 = scmp.eq.s32.totalorder %s19, 0
    %p172 = por %p170, %p171
    %s174 = sadd.s32 %s173, 1
    %p177 = scmp.eq.s32.totalorder %s13, 15
    %p178 = scmp.ne.s32.totalorder %s173, %s175
    %p179 = scmp.eq.s32.totalorder %s13, 0
    %p180 = por %p178, %p179
    %p181 = scmp.ne.s32.totalorder %s173, %s175
    %p182 = scmp.eq.s32.totalorder %s18, 15
    %p183 = por %p181, %p182
    %p184 = scmp.ne.s32.totalorder %s175, %s176
    %p185 = scmp.eq.s32.totalorder %s18, 0
    %p186 = por %p184, %p185
    %p187 = scmp.ne.s32.totalorder %s175, %s176
    %p188 = scmp.eq.s32.totalorder %s19, 15
    %p189 = por %p187, %p188
    %p191 = scmp.ne.s32.totalorder %s176, %s190
    %p192 = scmp.eq.s32.totalorder %s19, 0
    %p193 = por %p191, %p192
    %p194 = scmp.le.s32.totalorder 1, %s13
    %p195 = scmp.lt.s32.totalorder %s13, 17
    %p196 = pnand %p194, %p195
    %p197 = pneg %p196
    // Predicated region
    $region9: #{conv_dropout_norm_nonlin.2} parent=5 // pred_check
      _
    $region10: #{conv_dropout_norm_nonlin.2} parent=5 // pred_check_branch
      %199 = sbr.rel (%p196) target = $region12
    $region11: #{conv_dropout_norm_nonlin.2} parent=5 // pred_region
      %s200 = ssub.s32 %s13, 1
      // Predicated region
      $region13: #{conv_dropout_norm_nonlin.2} parent=11 // pred_check
        %p201 = pneg %p72
      $region14: #{conv_dropout_norm_nonlin.2} parent=11 // pred_check_branch
        %203 = sbr.rel (%p201) target = $region16
      $region15: #{conv_dropout_norm_nonlin.2} parent=11 // pred_region
        _
      $region16: #{conv_dropout_norm_nonlin.2} parent=11 // pred_fallthru
        _
      // Predicated region
      $region17: #{conv_dropout_norm_nonlin.2} parent=11 // pred_check
        %p204 = pneg %p93
      $region18: #{conv_dropout_norm_nonlin.2} parent=11 // pred_check_branch
        %206 = sbr.rel (%p204) target = $region20
      $region19: #{conv_dropout_norm_nonlin.2} parent=11 // pred_region
        _
      $region20: #{conv_dropout_norm_nonlin.2} parent=11 // pred_fallthru
        _
      // Predicated region
      $region21: #{conv_dropout_norm_nonlin.2} parent=11 // pred_check
        %p207 = pneg %p114
      $region22: #{conv_dropout_norm_nonlin.2} parent=11 // pred_check_branch
        %209 = sbr.rel (%p207) target = $region24
      $region23: #{conv_dropout_norm_nonlin.2} parent=11 // pred_region
        _
      $region24: #{conv_dropout_norm_nonlin.2} parent=11 // pred_fallthru
        _
      // Predicated region
      $region25: #{conv_dropout_norm_nonlin.2} parent=11 // pred_check
        %p210 = pneg %p135
      $region26: #{conv_dropout_norm_nonlin.2} parent=11 // pred_check_branch
        %212 = sbr.rel (%p210) target = $region28
      $region27: #{conv_dropout_norm_nonlin.2} parent=11 // pred_region
        _
      $region28: #{conv_dropout_norm_nonlin.2} parent=11 // pred_fallthru
        _
    $region12: #{conv_dropout_norm_nonlin.2} parent=5 // pred_fallthru
      _
    %p213 = scmp.lt.s32.totalorder %s13, 16
    // Predicated region
    $region29: #{conv_dropout_norm_nonlin.2} parent=5 // pred_check
      %p214 = pneg %p213
    $region30: #{conv_dropout_norm_nonlin.2} parent=5 // pred_check_branch
      %216 = sbr.rel (%p214) target = $region32
    $region31: #{conv_dropout_norm_nonlin.2} parent=5 // pred_region
      // Predicated region
      $region33: #{conv_dropout_norm_nonlin.2} parent=31 // pred_check
        %p217 = pneg %p45
      $region34: #{conv_dropout_norm_nonlin.2} parent=31 // pred_check_branch
        %219 = sbr.rel (%p217) target = $region36
      $region35: #{conv_dropout_norm_nonlin.2} parent=31 // pred_region
        %p220 = scmp.lt.s32.totalorder %s20, 1
        %s221 = scalar_select %p220, %s20, 1
        %s222 = smul.addr %s221, 200
        %s223 = smul.addr %s222, 8
        %s224 = scalar_lea.vmem %s0, %s223
      $region36: #{conv_dropout_norm_nonlin.2} parent=31 // pred_fallthru
        _
    $region32: #{conv_dropout_norm_nonlin.2} parent=5 // pred_fallthru
      _
    %p225 = scmp.le.s32.totalorder 1, %s13
    %p226 = scmp.lt.s32.totalorder %s13, 17
    %p227 = pnand %p225, %p226
    %p228 = pneg %p227
    // Predicated region
    $region37: #{conv_dropout_norm_nonlin.2} parent=5 // pred_check
      _
    $region38: #{conv_dropout_norm_nonlin.2} parent=5 // pred_check_branch
      %230 = sbr.rel (%p227) target = $region40
    $region39: #{conv_dropout_norm_nonlin.2} parent=5 // pred_region
      %s231 = ssub.s32 %s13, 1
      %p232 = scmp.lt.s32.totalorder %s22, 1
      %s233 = scalar_select %p232, %s22, 1
      %s234 = smul.addr %s233, 200
      %s235 = smul.addr %s234, 8
      %s236 = scalar_lea.vmem %s0, %s235
      %p237 = pneg %p51
      %p238 = pneg %p48
      %p239 = pneg %p72
      %p240 = pneg %p69
      %p241 = pneg %p93
      %p242 = pneg %p90
      %p243 = pneg %p114
      %p244 = pneg %p111
      %p245 = pneg %p135
      %p246 = pneg %p132
      %p247 = pneg %p165
      %p248 = pneg %p162
      %s249 = smul.u32 %s22, 8
      %s250 = sadd.s32 %s249, %s23
      %p251 = scmp.lt.s32.totalorder %s250, 15
      %s252 = scalar_select %p251, %s250, 15
      %s253 = smul.addr %s252, 8
      %s254 = smul.addr %s253, 8
      %s255 = scalar_lea.vmem %s5, %s254
      %p256 = pneg %p186
      %p257 = pneg %p183
      %p258 = scmp.lt.s32.totalorder %s22, 1
      %s259 = scalar_select %p258, %s22, 1
      %s260 = smul.addr %s259, 200
      %s261 = smul.addr %s260, 8
      %s262 = scalar_lea.vmem %s0, %s261
      %s263 = smul.u32 %s22, 8
      %s264 = sadd.s32 %s263, %s23
      %p265 = scmp.lt.s32.totalorder %s264, 15
      %s266 = scalar_select %p265, %s264, 15
      %s267 = smul.addr %s266, 8
      %s268 = smul.addr %s267, 8
      %s269 = scalar_lea.vmem %s5, %s268
      %s270 = smul.u32 %s22, 8
      %s271 = sadd.s32 %s270, %s23
      %p272 = scmp.eq.s32.totalorder %s22, 0
      %p273 = scmp.eq.s32.totalorder %s23, 0
      %p274 = pnand %p272, %p273
      %p275 = pneg %p274
      // Predicated region
      $region41: #{conv_dropout_norm_nonlin.2} parent=39 // pred_check
        _
      $region42: #{conv_dropout_norm_nonlin.2} parent=39 // pred_check_branch
        %277 = sbr.rel (%p274) target = $region44
      $region43: #{conv_dropout_norm_nonlin.2} parent=39 // pred_region
        %278 = vst [vmem:[%s6] sm:$0xff] 0.0
      $region44: #{conv_dropout_norm_nonlin.2} parent=39 // pred_fallthru
        _
      %s279 = smul.u32 %s23, 160
      %s280 = scalar_lea.vmem %s262, %s279
      %v281 = vld [vmem:[%s280] sm:$0xff]
      %v282 = vld [vmem:[%s280 + $0x10] sm:$0xff]
      %v283 = vld [vmem:[%s280 + $0x20] sm:$0xff]
      %v284 = vld [vmem:[%s280 + $0x30] sm:$0xff]
      %v285 = vld [vmem:[%s280 + $0x40] sm:$0xff]
      %v286 = vld [vmem:[%s280 + $0x50] sm:$0xff]
      %v287 = vld [vmem:[%s280 + $0x60] sm:$0xff]
      %v288 = vld [vmem:[%s280 + $0x70] sm:$0xff]
      %v289 = vld [vmem:[%s1] sm:$0xf]
      %v290 = vld [vmem:[%s280 + $0x1] sm:$0xff]
      %v291 = vld [vmem:[%s280 + $0x11] sm:$0xff]
      %v292 = vld [vmem:[%s280 + $0x21] sm:$0xff]
      %v293 = vld [vmem:[%s280 + $0x31] sm:$0xff]
      %v294 = vld [vmem:[%s280 + $0x41] sm:$0xff]
      %v295 = vld [vmem:[%s280 + $0x51] sm:$0xff]
      %v296 = vld [vmem:[%s280 + $0x61] sm:$0xff]
      %v297 = vld [vmem:[%s280 + $0x71] sm:$0xff]
      %s298 = scalar_lea.vmem %s1, 4
      %v299 = vld [vmem:[%s298] sm:$0xf]
      %vm300 = vcmask 31744
      %v302 = vsel %vm300, %v290, 0
      %v305 = vsel %vm300, %v291, 0
      %v308 = vsel %vm300, %v292, 0
      %v311 = vsel %vm300, %v293, 0
      %v314 = vsel %vm300, %v294, 0
      %v317 = vsel %vm300, %v295, 0
      %v320 = vsel %vm300, %v296, 0
      %v323 = vsel %vm300, %v297, 0
      %vm325 = vcmask 1043456
      %v327 = vsel %vm325, %v299, 0
      %329 = vmatprep.subr.mxu0 0.0
      %330 = vmatpush1.msra.mxu0 %v327
      %331 = vmatprep.subr.mxu0 0.0
      %332 = vmatpush1.msra.mxu0 0.0
      %333 = vmatprep.subr.mxu0 0.0
      %334 = vmatpush1.msra.mxu0 0.0
      %335 = vmatprep.subr.mxu0 0.0
      %336 = vmatpush1.msra.mxu0 0.0
      %337 = vmatprep.subr.mxu0 0.0
      %338 = vmatpush1.msra.mxu0 0.0
      %339 = vmatprep.subr.mxu0 0.0
      %340 = vmatpush1.msra.mxu0 0.0
      %341 = vmatprep.subr.mxu0 0.0
      %342 = vmatpush1.msra.mxu0 0.0
      %343 = vmatprep.subr.mxu0 0.0
      %344 = vmatpush1.msra.mxu0 0.0
      %345 = vmatprep.subr.mxu0 0.0
      %346 = vmatpush1.msra.mxu0 0.0
      %347 = vmatprep.subr.mxu0 0.0
      %348 = vmatpush1.msra.mxu0 0.0
      %349 = vmatprep.subr.mxu0 0.0
      %350 = vmatpush1.msra.mxu0 0.0
      %351 = vmatprep.subr.mxu0 0.0
      %352 = vmatpush1.msra.mxu0 0.0
      %353 = vmatprep.subr.mxu0 0.0
      %354 = vmatpush1.msra.mxu0 0.0
      %355 = vmatprep.subr.mxu0 0.0
      %356 = vmatpush1.msra.mxu0 0.0
      %357 = vmatprep.subr.mxu0 0.0
      %358 = vmatpush1.msra.mxu0 0.0
      %359 = vmatprep.subr.mxu0 0.0
      %360 = vmatpush1.msra.mxu0 0.0
      %361 = vmatprep.subr.mxu0 0.0
      %362 = vmatpush1.msra.mxu0 0.0
      %363 = vmatprep.subr.mxu0 0.0
      %364 = vmatpush1.msra.mxu0 0.0
      %365 = vmatprep.subr.mxu0 0.0
      %366 = vmatpush1.msra.mxu0 0.0
      %367 = vmatprep.subr.mxu0 0.0
      %368 = vmatpush1.msra.mxu0 0.0
      %369 = vmatprep.subr.mxu0 0.0
      %370 = vmatpush1.msra.mxu0 0.0
      %371 = vmatprep.subr.mxu0 0.0
      %372 = vmatpush1.msra.mxu0 0.0
      %373 = vmatprep.subr.mxu0 0.0
      %374 = vmatpush1.msra.mxu0 0.0
      %375 = vmatprep.subr.mxu0 0.0
      %376 = vmatpush1.msra.mxu0 0.0
      %377 = vmatprep.subr.mxu0 0.0
      %378 = vmatpush1.msra.mxu0 0.0
      %379 = vmatprep.subr.mxu0 0.0
      %380 = vmatpush1.msra.mxu0 0.0
      %381 = vmatprep.subr.mxu0 0.0
      %382 = vmatpush1.msra.mxu0 0.0
      %383 = vmatprep.subr.mxu0 0.0
      %384 = vmatpush1.msra.mxu0 0.0
      %385 = vmatprep.subr.mxu0 0.0
      %386 = vmatpush1.msra.mxu0 0.0
      %387 = vmatprep.subr.mxu0 0.0
      %388 = vmatpush1.msra.mxu0 0.0
      %389 = vmatprep.subr.mxu0 0.0
      %390 = vmatpush1.msra.mxu0 0.0
      %391 = vmatprep.subr.mxu0 0.0
      %392 = vmatpush1.msra.mxu0 0.0
      %393 = vmatprep.mubr.f32.mxu0 0.0
      %394 = vmatmul.mubr.f32.gmra.mrb[0].mxu0 %v302
      %v395 = vpop.f32.mrb[0].mxu0
      %v396 = vadd.f32 0.0, %v395
      %v397 = vpop.f32.mrb[0].mxu0
      %398 = vmatprep.mubr.f32.mxu0 0.0
      %399 = vmatmul.mubr.f32.gmra.mrb[0].mxu0 %v305
      %v400 = vpop.f32.mrb[0].mxu0
      %v401 = vadd.f32 0.0, %v400
      %v402 = vpop.f32.mrb[0].mxu0
      %403 = vmatprep.mubr.f32.mxu0 0.0
      %404 = vmatmul.mubr.f32.gmra.mrb[0].mxu0 %v308
      %v405 = vpop.f32.mrb[0].mxu0
      %v406 = vadd.f32 0.0, %v405
      %v407 = vpop.f32.mrb[0].mxu0
      %408 = vmatprep.mubr.f32.mxu0 0.0
      %409 = vmatmul.mubr.f32.gmra.mrb[0].mxu0 %v311
      %v410 = vpop.f32.mrb[0].mxu0
      %v411 = vadd.f32 0.0, %v410
      %v412 = vpop.f32.mrb[0].mxu0
      %413 = vmatprep.mubr.f32.mxu0 0.0
      %414 = vmatmul.mubr.f32.gmra.mrb[0].mxu0 %v314
      %v415 = vpop.f32.mrb[0].mxu0
      %v416 = vadd.f32 0.0, %v415
      %v417 = vpop.f32.mrb[0].mxu0
      %418 = vmatprep.mubr.f32.mxu0 0.0
      %419 = vmatmul.mubr.f32.gmra.mrb[0].mxu0 %v317
      %v420 = vpop.f32.mrb[0].mxu0
      %v421 = vadd.f32 0.0, %v420
      %v422 = vpop.f32.mrb[0].mxu0
      %423 = vmatprep.mubr.f32.mxu0 0.0
      %424 = vmatmul.mubr.f32.gmra.mrb[0].mxu0 %v320
      %v425 = vpop.f32.mrb[0].mxu0
      %v426 = vadd.f32 0.0, %v425
      %v427 = vpop.f32.mrb[0].mxu0
      %428 = vmatprep.mubr.f32.mxu0 0.0
      %429 = vmatmul.mubr.f32.gmra.mrb[0].mxu0 %v323
      %v430 = vpop.f32.mrb[0].mxu0
      %v431 = vadd.f32 0.0, %v430
      %v432 = vpop.f32.mrb[0].mxu0
      %433 = vdwg.mxu0
      %v435 = vsel %vm300, %v281, 0
      %v438 = vsel %vm300, %v282, 0
      %v441 = vsel %vm300, %v283, 0
      %v444 = vsel %vm300, %v284, 0
      %v447 = vsel %vm300, %v285, 0
      %v450 = vsel %vm300, %v286, 0
      %v453 = vsel %vm300, %v287, 0
      %v456 = vsel %vm300, %v288, 0
      %v459 = vsel %vm325, %v289, 0
      %461 = vmatprep.subr.mxu0 0.0
      %462 = vmatpush1.msra.mxu0 %v459
      %463 = vmatprep.subr.mxu0 0.0
      %464 = vmatpush1.msra.mxu0 0.0
      %465 = vmatprep.subr.mxu0 0.0
      %466 = vmatpush1.msra.mxu0 0.0
      %467 = vmatprep.subr.mxu0 0.0
      %468 = vmatpush1.msra.mxu0 0.0
      %469 = vmatprep.subr.mxu0 0.0
      %470 = vmatpush1.msra.mxu0 0.0
      %471 = vmatprep.subr.mxu0 0.0
      %472 = vmatpush1.msra.mxu0 0.0
      %473 = vmatprep.subr.mxu0 0.0
      %474 = vmatpush1.msra.mxu0 0.0
      %475 = vmatprep.subr.mxu0 0.0
      %476 = vmatpush1.msra.mxu0 0.0
      %477 = vmatprep.subr.mxu0 0.0
      %478 = vmatpush1.msra.mxu0 0.0
      %479 = vmatprep.subr.mxu0 0.0
      %480 = vmatpush1.msra.mxu0 0.0
      %481 = vmatprep.subr.mxu0 0.0
      %482 = vmatpush1.msra.mxu0 0.0
      %483 = vmatprep.subr.mxu0 0.0
      %484 = vmatpush1.msra.mxu0 0.0
      %485 = vmatprep.subr.mxu0 0.0
      %486 = vmatpush1.msra.mxu0 0.0
      %487 = vmatprep.subr.mxu0 0.0
      %488 = vmatpush1.msra.mxu0 0.0
      %489 = vmatprep.subr.mxu0 0.0
      %490 = vmatpush1.msra.mxu0 0.0
      %491 = vmatprep.subr.mxu0 0.0
      %492 = vmatpush1.msra.mxu0 0.0
      %493 = vmatprep.subr.mxu0 0.0
      %494 = vmatpush1.msra.mxu0 0.0
      %495 = vmatprep.subr.mxu0 0.0
      %496 = vmatpush1.msra.mxu0 0.0
      %497 = vmatprep.subr.mxu0 0.0
      %498 = vmatpush1.msra.mxu0 0.0
      %499 = vmatprep.subr.mxu0 0.0
      %500 = vmatpush1.msra.mxu0 0.0
      %501 = vmatprep.subr.mxu0 0.0
      %502 = vmatpush1.msra.mxu0 0.0
      %503 = vmatprep.subr.mxu0 0.0
      %504 = vmatpush1.msra.mxu0 0.0
      %505 = vmatprep.subr.mxu0 0.0
      %506 = vmatpush1.msra.mxu0 0.0
      %507 = vmatprep.subr.mxu0 0.0
      %508 = vmatpush1.msra.mxu0 0.0
      %509 = vmatprep.subr.mxu0 0.0
      %510 = vmatpush1.msra.mxu0 0.0
      %511 = vmatprep.subr.mxu0 0.0
      %512 = vmatpush1.msra.mxu0 0.0
      %513 = vmatprep.subr.mxu0 0.0
      %514 = vmatpush1.msra.mxu0 0.0
      %515 = vmatprep.subr.mxu0 0.0
      %516 = vmatpush1.msra.mxu0 0.0
      %517 = vmatprep.subr.mxu0 0.0
      %518 = vmatpush1.msra.mxu0 0.0
      %519 = vmatprep.subr.mxu0 0.0
      %520 = vmatpush1.msra.mxu0 0.0
      %521 = vmatprep.subr.mxu0 0.0
      %522 = vmatpush1.msra.mxu0 0.0
      %523 = vmatprep.subr.mxu0 0.0
      %524 = vmatpush1.msra.mxu0 0.0
      %525 = vmatprep.mubr.f32.mxu0 0.0
      %526 = vmatmul.mubr.f32.gmra.mrb[0].mxu0 %v435
      %v527 = vpop.f32.mrb[0].mxu0
      %v528 = vadd.f32 %v396, %v527
      %v529 = vpop.f32.mrb[0].mxu0
      %530 = vmatprep.mubr.f32.mxu0 0.0
      %531 = vmatmul.mubr.f32.gmra.mrb[0].mxu0 %v438
      %v532 = vpop.f32.mrb[0].mxu0
      %v533 = vadd.f32 %v401, %v532
      %v534 = vpop.f32.mrb[0].mxu0
      %535 = vmatprep.mubr.f32.mxu0 0.0
      %536 = vmatmul.mubr.f32.gmra.mrb[0].mxu0 %v441
      %v537 = vpop.f32.mrb[0].mxu0
      %v538 = vadd.f32 %v406, %v537
      %v539 = vpop.f32.mrb[0].mxu0
      %540 = vmatprep.mubr.f32.mxu0 0.0
      %541 = vmatmul.mubr.f32.gmra.mrb[0].mxu0 %v444
      %v542 = vpop.f32.mrb[0].mxu0
      %v543 = vadd.f32 %v411, %v542
      %v544 = vpop.f32.mrb[0].mxu0
      %545 = vmatprep.mubr.f32.mxu0 0.0
      %546 = vmatmul.mubr.f32.gmra.mrb[0].mxu0 %v447
      %v547 = vpop.f32.mrb[0].mxu0
      %v548 = vadd.f32 %v416, %v547
      %v549 = vpop.f32.mrb[0].mxu0
      %550 = vmatprep.mubr.f32.mxu0 0.0
      %551 = vmatmul.mubr.f32.gmra.mrb[0].mxu0 %v450
      %v552 = vpop.f32.mrb[0].mxu0
      %v553 = vadd.f32 %v421, %v552
      %v554 = vpop.f32.mrb[0].mxu0
      %555 = vmatprep.mubr.f32.mxu0 0.0
      %556 = vmatmul.mubr.f32.gmra.mrb[0].mxu0 %v453
      %v557 = vpop.f32.mrb[0].mxu0
      %v558 = vadd.f32 %v426, %v557
      %v559 = vpop.f32.mrb[0].mxu0
      %560 = vmatprep.mubr.f32.mxu0 0.0
      %561 = vmatmul.mubr.f32.gmra.mrb[0].mxu0 %v456
      %v562 = vpop.f32.mrb[0].mxu0
      %v563 = vadd.f32 %v431, %v562
      %v564 = vpop.f32.mrb[0].mxu0
      %565 = vdwg.mxu0
      %v566 = vld [vmem:[%s280 + $0x2] sm:$0xff]
      %v567 = vld [vmem:[%s280 + $0x12] sm:$0xff]
      %v568 = vld [vmem:[%s280 + $0x22] sm:$0xff]
      %v569 = vld [vmem:[%s280 + $0x32] sm:$0xff]
      %v570 = vld [vmem:[%s280 + $0x42] sm:$0xff]
      %v571 = vld [vmem:[%s280 + $0x52] sm:$0xff]
      %v572 = vld [vmem:[%s280 + $0x62] sm:$0xff]
      %v573 = vld [vmem:[%s280 + $0x72] sm:$0xff]
      %s574 = scalar_lea.vmem %s1, 8
      %v575 = vld [vmem:[%s574] sm:$0xf]
      %v577 = vsel %vm300, %v566, 0
      %v580 = vsel %vm300, %v567, 0
      %v583 = vsel %vm300, %v568, 0
      %v586 = vsel %vm300, %v569, 0
      %v589 = vsel %vm300, %v570, 0
      %v592 = vsel %vm300, %v571, 0
      %v595 = vsel %vm300, %v572, 0
      %v598 = vsel %vm300, %v573, 0
      %v601 = vsel %vm325, %v575, 0
      %603 = vmatprep.subr.mxu0 0.0
      %604 = vmatpush1.msra.mxu0 %v601
      %605 = vmatprep.subr.mxu0 0.0
      %606 = vmatpush1.msra.mxu0 0.0
      %607 = vmatprep.subr.mxu0 0.0
      %608 = vmatpush1.msra.mxu0 0.0
      %609 = vmatprep.subr.mxu0 0.0
      %610 = vmatpush1.msra.mxu0 0.0
      %611 = vmatprep.subr.mxu0 0.0
      %612 = vmatpush1.msra.mxu0 0.0
      %613 = vmatprep.subr.mxu0 0.0
      %614 = vmatpush1.msra.mxu0 0.0
      %615 = vmatprep.subr.mxu0 0.0
      %616 = vmatpush1.msra.mxu0 0.0
      %617 = vmatprep.subr.mxu0 0.0
      %618 = vmatpush1.msra.mxu0 0.0
      %619 = vmatprep.subr.mxu0 0.0
      %620 = vmatpush1.msra.mxu0 0.0
      %621 = vmatprep.subr.mxu0 0.0
      %622 = vmatpush1.msra.mxu0 0.0
      %623 = vmatprep.subr.mxu0 0.0
      %624 = vmatpush1.msra.mxu0 0.0
      %625 = vmatprep.subr.mxu0 0.0
      %626 = vmatpush1.msra.mxu0 0.0
      %627 = vmatprep.subr.mxu0 0.0
      %628 = vmatpush1.msra.mxu0 0.0
      %629 = vmatprep.subr.mxu0 0.0
      %630 = vmatpush1.msra.mxu0 0.0
      %631 = vmatprep.subr.mxu0 0.0
      %632 = vmatpush1.msra.mxu0 0.0
      %633 = vmatprep.subr.mxu0 0.0
      %634 = vmatpush1.msra.mxu0 0.0
      %635 = vmatprep.subr.mxu0 0.0
      %636 = vmatpush1.msra.mxu0 0.0
      %637 = vmatprep.subr.mxu0 0.0
      %638 = vmatpush1.msra.mxu0 0.0
      %639 = vmatprep.subr.mxu0 0.0
      %640 = vmatpush1.msra.mxu0 0.0
      %641 = vmatprep.subr.mxu0 0.0
      %642 = vmatpush1.msra.mxu0 0.0
      %643 = vmatprep.subr.mxu0 0.0
      %644 = vmatpush1.msra.mxu0 0.0
      %645 = vmatprep.subr.mxu0 0.0
      %646 = vmatpush1.msra.mxu0 0.0
      %647 = vmatprep.subr.mxu0 0.0
      %648 = vmatpush1.msra.mxu0 0.0
      %649 = vmatprep.subr.mxu0 0.0
      %650 = vmatpush1.msra.mxu0 0.0
      %651 = vmatprep.subr.mxu0 0.0
      %652 = vmatpush1.msra.mxu0 0.0
      %653 = vmatprep.subr.mxu0 0.0
      %654 = vmatpush1.msra.mxu0 0.0
      %655 = vmatprep.subr.mxu0 0.0
      %656 = vmatpush1.msra.mxu0 0.0
      %657 = vmatprep.subr.mxu0 0.0
      %658 = vmatpush1.msra.mxu0 0.0
      %659 = vmatprep.subr.mxu0 0.0
      %660 = vmatpush1.msra.mxu0 0.0
      %661 = vmatprep.subr.mxu0 0.0
      %662 = vmatpush1.msra.mxu0 0.0
      %663 = vmatprep.subr.mxu0 0.0
      %664 = vmatpush1.msra.mxu0 0.0
      %665 = vmatprep.subr.mxu0 0.0
      %666 = vmatpush1.msra.mxu0 0.0
      %667 = vmatprep.mubr.f32.mxu0 0.0
      %668 = vmatmul.mubr.f32.gmra.mrb[0].mxu0 %v577
      %v669 = vpop.f32.mrb[0].mxu0
      %v670 = vadd.f32 0.0, %v669
      %v671 = vpop.f32.mrb[0].mxu0
      %672 = vmatprep.mubr.f32.mxu0 0.0
      %673 = vmatmul.mubr.f32.gmra.mrb[0].mxu0 %v580
      %v674 = vpop.f32.mrb[0].mxu0
      %v675 = vadd.f32 0.0, %v674
      %v676 = vpop.f32.mrb[0].mxu0
      %677 = vmatprep.mubr.f32.mxu0 0.0
      %678 = vmatmul.mubr.f32.gmra.mrb[0].mxu0 %v583
      %v679 = vpop.f32.mrb[0].mxu0
      %v680 = vadd.f32 0.0, %v679
      %v681 = vpop.f32.mrb[0].mxu0
      %682 = vmatprep.mubr.f32.mxu0 0.0
      %683 = vmatmul.mubr.f32.gmra.mrb[0].mxu0 %v586
      %v684 = vpop.f32.mrb[0].mxu0
      %v685 = vadd.f32 0.0, %v684
      %v686 = vpop.f32.mrb[0].mxu0
      %687 = vmatprep.mubr.f32.mxu0 0.0
      %688 = vmatmul.mubr.f32.gmra.mrb[0].mxu0 %v589
      %v689 = vpop.f32.mrb[0].mxu0
      %v690 = vadd.f32 0.0, %v689
      %v691 = vpop.f32.mrb[0].mxu0
      %692 = vmatprep.mubr.f32.mxu0 0.0
      %693 = vmatmul.mubr.f32.gmra.mrb[0].mxu0 %v592
      %v694 = vpop.f32.mrb[0].mxu0
      %v695 = vadd.f32 0.0, %v694
      %v696 = vpop.f32.mrb[0].mxu0
      %697 = vmatprep.mubr.f32.mxu0 0.0
      %698 = vmatmul.mubr.f32.gmra.mrb[0].mxu0 %v595
      %v699 = vpop.f32.mrb[0].mxu0
      %v700 = vadd.f32 0.0, %v699
      %v701 = vpop.f32.mrb[0].mxu0
      %702 = vmatprep.mubr.f32.mxu0 0.0
      %703 = vmatmul.mubr.f32.gmra.mrb[0].mxu0 %v598
      %v704 = vpop.f32.mrb[0].mxu0
      %v705 = vadd.f32 0.0, %v704
      %v706 = vpop.f32.mrb[0].mxu0
      %707 = vdwg.mxu0
      %v708 = vadd.f32 %v528, %v670
      %v709 = vadd.f32 %v533, %v675
      %v710 = vadd.f32 %v538, %v680
      %v711 = vadd.f32 %v543, %v685
      %v712 = vadd.f32 %v548, %v690
      %v713 = vadd.f32 %v553, %v695
      %v714 = vadd.f32 %v558, %v700
      %v715 = vadd.f32 %v563, %v705
      %s716 = sadd.s32 16, %s279
      %s717 = scalar_lea.vmem %s262, %s716
      %v718 = vld [vmem:[%s717] sm:$0xff]
      %v719 = vld [vmem:[%s717 + $0x10] sm:$0xff]
      %v720 = vld [vmem:[%s717 + $0x20] sm:$0xff]
      %v721 = vld [vmem:[%s717 + $0x30] sm:$0xff]
      %v722 = vld [vmem:[%s717 + $0x40] sm:$0xff]
      %v723 = vld [vmem:[%s717 + $0x50] sm:$0xff]
      %v724 = vld [vmem:[%s717 + $0x60] sm:$0xff]
      %v725 = vld [vmem:[%s717 + $0x70] sm:$0xff]
      %s726 = scalar_lea.vmem %s1, 12
      %v727 = vld [vmem:[%s726] sm:$0xf]
      %v729 = vsel %vm300, %v718, 0
      %v732 = vsel %vm300, %v719, 0
      %v735 = vsel %vm300, %v720, 0
      %v738 = vsel %vm300, %v721, 0
      %v741 = vsel %vm300, %v722, 0
      %v744 = vsel %vm300, %v723, 0
      %v747 = vsel %vm300, %v724, 0
      %v750 = vsel %vm300, %v725, 0
      %v753 = vsel %vm325, %v727, 0
      %755 = vmatprep.subr.mxu0 0.0
      %756 = vmatpush1.msra.mxu0 %v753
      %757 = vmatprep.subr.mxu0 0.0
      %758 = vmatpush1.msra.mxu0 0.0
      %759 = vmatprep.subr.mxu0 0.0
      %760 = vmatpush1.msra.mxu0 0.0
      %761 = vmatprep.subr.mxu0 0.0
      %762 = vmatpush1.msra.mxu0 0.0
      %763 = vmatprep.subr.mxu0 0.0
      %764 = vmatpush1.msra.mxu0 0.0
      %765 = vmatprep.subr.mxu0 0.0
      %766 = vmatpush1.msra.mxu0 0.0
      %767 = vmatprep.subr.mxu0 0.0
      %768 = vmatpush1.msra.mxu0 0.0
      %769 = vmatprep.subr.mxu0 0.0
      %770 = vmatpush1.msra.mxu0 0.0
      %771 = vmatprep.subr.mxu0 0.0
      %772 = vmatpush1.msra.mxu0 0.0
      %773 = vmatprep.subr.mxu0 0.0
      %774 = vmatpush1.msra.mxu0 0.0
      %775 = vmatprep.subr.mxu0 0.0
      %776 = vmatpush1.msra.mxu0 0.0
      %777 = vmatprep.subr.mxu0 0.0
      %778 = vmatpush1.msra.mxu0 0.0
      %779 = vmatprep.subr.mxu0 0.0
      %780 = vmatpush1.msra.mxu0 0.0
      %781 = vmatprep.subr.mxu0 0.0
      %782 = vmatpush1.msra.mxu0 0.0
      %783 = vmatprep.subr.mxu0 0.0
      %784 = vmatpush1.msra.mxu0 0.0
      %785 = vmatprep.subr.mxu0 0.0
      %786 = vmatpush1.msra.mxu0 0.0
      %787 = vmatprep.subr.mxu0 0.0
      %788 = vmatpush1.msra.mxu0 0.0
      %789 = vmatprep.subr.mxu0 0.0
      %790 = vmatpush1.msra.mxu0 0.0
      %791 = vmatprep.subr.mxu0 0.0
      %792 = vmatpush1.msra.mxu0 0.0
      %793 = vmatprep.subr.mxu0 0.0
      %794 = vmatpush1.msra.mxu0 0.0
      %795 = vmatprep.subr.mxu0 0.0
      %796 = vmatpush1.msra.mxu0 0.0
      %797 = vmatprep.subr.mxu0 0.0
      %798 = vmatpush1.msra.mxu0 0.0
      %799 = vmatprep.subr.mxu0 0.0
      %800 = vmatpush1.msra.mxu0 0.0
      %801 = vmatprep.subr.mxu0 0.0
      %802 = vmatpush1.msra.mxu0 0.0
      %803 = vmatprep.subr.mxu0 0.0
      %804 = vmatpush1.msra.mxu0 0.0
      %805 = vmatprep.subr.mxu0 0.0
      %806 = vmatpush1.msra.mxu0 0.0
      %807 = vmatprep.subr.mxu0 0.0
      %808 = vmatpush1.msra.mxu0 0.0
      %809 = vmatprep.subr.mxu0 0.0
      %810 = vmatpush1.msra.mxu0 0.0
      %811 = vmatprep.subr.mxu0 0.0
      %812 = vmatpush1.msra.mxu0 0.0
      %813 = vmatprep.subr.mxu0 0.0
      %814 = vmatpush1.msra.mxu0 0.0
      %815 = vmatprep.subr.mxu0 0.0
      %816 = vmatpush1.msra.mxu0 0.0
      %817 = vmatprep.subr.mxu0 0.0
      %818 = vmatpush1.msra.mxu0 0.0
      %819 = vmatprep.mubr.f32.mxu0 0.0
      %820 = vmatmul.mubr.f32.gmra.mrb[0].mxu0 %v729
      %v821 = vpop.f32.mrb[0].mxu0
      %v822 = vadd.f32 0.0, %v821
      %v823 = vpop.f32.mrb[0].mxu0
      %824 = vmatprep.mubr.f32.mxu0 0.0
      %825 = vmatmul.mubr.f32.gmra.mrb[0].mxu0 %v732
      %v826 = vpop.f32.mrb[0].mxu0
      %v827 = vadd.f32 0.0, %v826
      %v828 = vpop.f32.mrb[0].mxu0
      %829 = vmatprep.mubr.f32.mxu0 0.0
      %830 = vmatmul.mubr.f32.gmra.mrb[0].mxu0 %v735
      %v831 = vpop.f32.mrb[0].mxu0
      %v832 = vadd.f32 0.0, %v831
      %v833 = vpop.f32.mrb[0].mxu0
      %834 = vmatprep.mubr.f32.mxu0 0.0
      %835 = vmatmul.mubr.f32.gmra.mrb[0].mxu0 %v738
      %v836 = vpop.f32.mrb[0].mxu0
      %v837 = vadd.f32 0.0, %v836
      %v838 = vpop.f32.mrb[0].mxu0
      %839 = vmatprep.mubr.f32.mxu0 0.0
      %840 = vmatmul.mubr.f32.gmra.mrb[0].mxu0 %v741
      %v841 = vpop.f32.mrb[0].mxu0
      %v842 = vadd.f32 0.0, %v841
      %v843 = vpop.f32.mrb[0].mxu0
      %844 = vmatprep.mubr.f32.mxu0 0.0
      %845 = vmatmul.mubr.f32.gmra.mrb[0].mxu0 %v744
      %v846 = vpop.f32.mrb[0].mxu0
      %v847 = vadd.f32 0.0, %v846
      %v848 = vpop.f32.mrb[0].mxu0
      %849 = vmatprep.mubr.f32.mxu0 0.0
      %850 = vmatmul.mubr.f32.gmra.mrb[0].mxu0 %v747
      %v851 = vpop.f32.mrb[0].mxu0
      %v852 = vadd.f32 0.0, %v851
      %v853 = vpop.f32.mrb[0].mxu0
      %854 = vmatprep.mubr.f32.mxu0 0.0
      %855 = vmatmul.mubr.f32.gmra.mrb[0].mxu0 %v750
      %v856 = vpop.f32.mrb[0].mxu0
      %v857 = vadd.f32 0.0, %v856
      %v858 = vpop.f32.mrb[0].mxu0
      %859 = vdwg.mxu0
      %v860 = vadd.f32 %v708, %v822
      %v861 = vadd.f32 %v709, %v827
      %v862 = vadd.f32 %v710, %v832
      %v863 = vadd.f32 %v711, %v837
      %v864 = vadd.f32 %v712, %v842
      %v865 = vadd.f32 %v713, %v847
      %v866 = vadd.f32 %v714, %v852
      %v867 = vadd.f32 %v715, %v857
      %v868 = vld [vmem:[%s717 + $0x1] sm:$0xff]
      %v869 = vld [vmem:[%s717 + $0x11] sm:$0xff]
      %v870 = vld [vmem:[%s717 + $0x21] sm:$0xff]
      %v871 = vld [vmem:[%s717 + $0x31] sm:$0xff]
      %v872 = vld [vmem:[%s717 + $0x41] sm:$0xff]
      %v873 = vld [vmem:[%s717 + $0x51] sm:$0xff]
      %v874 = vld [vmem:[%s717 + $0x61] sm:$0xff]
      %v875 = vld [vmem:[%s717 + $0x71] sm:$0xff]
      %s876 = scalar_lea.vmem %s1, 16
      %v877 = vld [vmem:[%s876] sm:$0xf]
      %v879 = vsel %vm300, %v868, 0
      %v882 = vsel %vm300, %v869, 0
      %v885 = vsel %vm300, %v870, 0
      %v888 = vsel %vm300, %v871, 0
      %v891 = vsel %vm300, %v872, 0
      %v894 = vsel %vm300, %v873, 0
      %v897 = vsel %vm300, %v874, 0
      %v900 = vsel %vm300, %v875, 0
      %v903 = vsel %vm325, %v877, 0
      %905 = vmatprep.subr.mxu0 0.0
      %906 = vmatpush1.msra.mxu0 %v903
      %907 = vmatprep.subr.mxu0 0.0
      %908 = vmatpush1.msra.mxu0 0.0
      %909 = vmatprep.subr.mxu0 0.0
      %910 = vmatpush1.msra.mxu0 0.0
      %911 = vmatprep.subr.mxu0 0.0
      %912 = vmatpush1.msra.mxu0 0.0
      %913 = vmatprep.subr.mxu0 0.0
      %914 = vmatpush1.msra.mxu0 0.0
      %915 = vmatprep.subr.mxu0 0.0
      %916 = vmatpush1.msra.mxu0 0.0
      %917 = vmatprep.subr.mxu0 0.0
      %918 = vmatpush1.msra.mxu0 0.0
      %919 = vmatprep.subr.mxu0 0.0
      %920 = vmatpush1.msra.mxu0 0.0
      %921 = vmatprep.subr.mxu0 0.0
      %922 = vmatpush1.msra.mxu0 0.0
      %923 = vmatprep.subr.mxu0 0.0
      %924 = vmatpush1.msra.mxu0 0.0
      %925 = vmatprep.subr.mxu0 0.0
      %926 = vmatpush1.msra.mxu0 0.0
      %927 = vmatprep.subr.mxu0 0.0
      %928 = vmatpush1.msra.mxu0 0.0
      %929 = vmatprep.subr.mxu0 0.0
      %930 = vmatpush1.msra.mxu0 0.0
      %931 = vmatprep.subr.mxu0 0.0
      %932 = vmatpush1.msra.mxu0 0.0
      %933 = vmatprep.subr.mxu0 0.0
      %934 = vmatpush1.msra.mxu0 0.0
      %935 = vmatprep.subr.mxu0 0.0
      %936 = vmatpush1.msra.mxu0 0.0
      %937 = vmatprep.subr.mxu0 0.0
      %938 = vmatpush1.msra.mxu0 0.0
      %939 = vmatprep.subr.mxu0 0.0
      %940 = vmatpush1.msra.mxu0 0.0
      %941 = vmatprep.subr.mxu0 0.0
      %942 = vmatpush1.msra.mxu0 0.0
      %943 = vmatprep.subr.mxu0 0.0
      %944 = vmatpush1.msra.mxu0 0.0
      %945 = vmatprep.subr.mxu0 0.0
      %946 = vmatpush1.msra.mxu0 0.0
      %947 = vmatprep.subr.mxu0 0.0
      %948 = vmatpush1.msra.mxu0 0.0
      %949 = vmatprep.subr.mxu0 0.0
      %950 = vmatpush1.msra.mxu0 0.0
      %951 = vmatprep.subr.mxu0 0.0
      %952 = vmatpush1.msra.mxu0 0.0
      %953 = vmatprep.subr.mxu0 0.0
      %954 = vmatpush1.msra.mxu0 0.0
      %955 = vmatprep.subr.mxu0 0.0
      %956 = vmatpush1.msra.mxu0 0.0
      %957 = vmatprep.subr.mxu0 0.0
      %958 = vmatpush1.msra.mxu0 0.0
      %959 = vmatprep.subr.mxu0 0.0
      %960 = vmatpush1.msra.mxu0 0.0
      %961 = vmatprep.subr.mxu0 0.0
      %962 = vmatpush1.msra.mxu0 0.0
      %963 = vmatprep.subr.mxu0 0.0
      %964 = vmatpush1.msra.mxu0 0.0
      %965 = vmatprep.subr.mxu0 0.0
      %966 = vmatpush1.msra.mxu0 0.0
      %967 = vmatprep.subr.mxu0 0.0
      %968 = vmatpush1.msra.mxu0 0.0
      %969 = vmatprep.mubr.f32.mxu0 0.0
      %970 = vmatmul.mubr.f32.gmra.mrb[0].mxu0 %v879
      %v971 = vpop.f32.mrb[0].mxu0
      %v972 = vadd.f32 0.0, %v971
      %v973 = vpop.f32.mrb[0].mxu0
      %974 = vmatprep.mubr.f32.mxu0 0.0
      %975 = vmatmul.mubr.f32.gmra.mrb[0].mxu0 %v882
      %v976 = vpop.f32.mrb[0].mxu0
      %v977 = vadd.f32 0.0, %v976
      %v978 = vpop.f32.mrb[0].mxu0
      %979 = vmatprep.mubr.f32.mxu0 0.0
      %980 = vmatmul.mubr.f32.gmra.mrb[0].mxu0 %v885
      %v981 = vpop.f32.mrb[0].mxu0
      %v982 = vadd.f32 0.0, %v981
      %v983 = vpop.f32.mrb[0].mxu0
      %984 = vmatprep.mubr.f32.mxu0 0.0
      %985 = vmatmul.mubr.f32.gmra.mrb[0].mxu0 %v888
      %v986 = vpop.f32.mrb[0].mxu0
      %v987 = vadd.f32 0.0, %v986
      %v988 = vpop.f32.mrb[0].mxu0
      %989 = vmatprep.mubr.f32.mxu0 0.0
      %990 = vmatmul.mubr.f32.gmra.mrb[0].mxu0 %v891
      %v991 = vpop.f32.mrb[0].mxu0
      %v992 = vadd.f32 0.0, %v991
      %v993 = vpop.f32.mrb[0].mxu0
      %994 = vmatprep.mubr.f32.mxu0 0.0
      %995 = vmatmul.mubr.f32.gmra.mrb[0].mxu0 %v894
      %v996 = vpop.f32.mrb[0].mxu0
      %v997 = vadd.f32 0.0, %v996
      %v998 = vpop.f32.mrb[0].mxu0
      %999 = vmatprep.mubr.f32.mxu0 0.0
      %1000 = vmatmul.mubr.f32.gmra.mrb[0].mxu0 %v897
      %v1001 = vpop.f32.mrb[0].mxu0
      %v1002 = vadd.f32 0.0, %v1001
      %v1003 = vpop.f32.mrb[0].mxu0
      %1004 = vmatprep.mubr.f32.mxu0 0.0
      %1005 = vmatmul.mubr.f32.gmra.mrb[0].mxu0 %v900
      %v1006 = vpop.f32.mrb[0].mxu0
      %v1007 = vadd.f32 0.0, %v1006
      %v1008 = vpop.f32.mrb[0].mxu0
      %1009 = vdwg.mxu0
      %v1010 = vadd.f32 %v860, %v972
      %v1011 = vadd.f32 %v861, %v977
      %v1012 = vadd.f32 %v862, %v982
      %v1013 = vadd.f32 %v863, %v987
      %v1014 = vadd.f32 %v864, %v992
      %v1015 = vadd.f32 %v865, %v997
      %v1016 = vadd.f32 %v866, %v1002
      %v1017 = vadd.f32 %v867, %v1007
      %v1018 = vld [vmem:[%s717 + $0x2] sm:$0xff]
      %v1019 = vld [vmem:[%s717 + $0x12] sm:$0xff]
      %v1020 = vld [vmem:[%s717 + $0x22] sm:$0xff]
      %v1021 = vld [vmem:[%s717 + $0x32] sm:$0xff]
      %v1022 = vld [vmem:[%s717 + $0x42] sm:$0xff]
      %v1023 = vld [vmem:[%s717 + $0x52] sm:$0xff]
      %v1024 = vld [vmem:[%s717 + $0x62] sm:$0xff]
      %v1025 = vld [vmem:[%s717 + $0x72] sm:$0xff]
      %s1026 = scalar_lea.vmem %s1, 20
      %v1027 = vld [vmem:[%s1026] sm:$0xf]
      %v1029 = vsel %vm300, %v1018, 0
      %v1032 = vsel %vm300, %v1019, 0
      %v1035 = vsel %vm300, %v1020, 0
      %v1038 = vsel %vm300, %v1021, 0
      %v1041 = vsel %vm300, %v1022, 0
      %v1044 = vsel %vm300, %v1023, 0
      %v1047 = vsel %vm300, %v1024, 0
      %v1050 = vsel %vm300, %v1025, 0
      %v1053 = vsel %vm325, %v1027, 0
      %1055 = vmatprep.subr.mxu0 0.0
      %1056 = vmatpush1.msra.mxu0 %v1053
      %1057 = vmatprep.subr.mxu0 0.0
      %1058 = vmatpush1.msra.mxu0 0.0
      %1059 = vmatprep.subr.mxu0 0.0
      %1060 = vmatpush1.msra.mxu0 0.0
      %1061 = vmatprep.subr.mxu0 0.0
      %1062 = vmatpush1.msra.mxu0 0.0
      %1063 = vmatprep.subr.mxu0 0.0
      %1064 = vmatpush1.msra.mxu0 0.0
      %1065 = vmatprep.subr.mxu0 0.0
      %1066 = vmatpush1.msra.mxu0 0.0
      %1067 = vmatprep.subr.mxu0 0.0
      %1068 = vmatpush1.msra.mxu0 0.0
      %1069 = vmatprep.subr.mxu0 0.0
      %1070 = vmatpush1.msra.mxu0 0.0
      %1071 = vmatprep.subr.mxu0 0.0
      %1072 = vmatpush1.msra.mxu0 0.0
      %1073 = vmatprep.subr.mxu0 0.0
      %1074 = vmatpush1.msra.mxu0 0.0
      %1075 = vmatprep.subr.mxu0 0.0
      %1076 = vmatpush1.msra.mxu0 0.0
      %1077 = vmatprep.subr.mxu0 0.0
      %1078 = vmatpush1.msra.mxu0 0.0
      %1079 = vmatprep.subr.mxu0 0.0
      %1080 = vmatpush1.msra.mxu0 0.0
      %1081 = vmatprep.subr.mxu0 0.0
      %1082 = vmatpush1.msra.mxu0 0.0
      %1083 = vmatprep.subr.mxu0 0.0
      %1084 = vmatpush1.msra.mxu0 0.0
      %1085 = vmatprep.subr.mxu0 0.0
      %1086 = vmatpush1.msra.mxu0 0.0
      %1087 = vmatprep.subr.mxu0 0.0
      %1088 = vmatpush1.msra.mxu0 0.0
      %1089 = vmatprep.subr.mxu0 0.0
      %1090 = vmatpush1.msra.mxu0 0.0
      %1091 = vmatprep.subr.mxu0 0.0
      %1092 = vmatpush1.msra.mxu0 0.0
      %1093 = vmatprep.subr.mxu0 0.0
      %1094 = vmatpush1.msra.mxu0 0.0
      %1095 = vmatprep.subr.mxu0 0.0
      %1096 = vmatpush1.msra.mxu0 0.0
      %1097 = vmatprep.subr.mxu0 0.0
      %1098 = vmatpush1.msra.mxu0 0.0
      %1099 = vmatprep.subr.mxu0 0.0
      %1100 = vmatpush1.msra.mxu0 0.0
      %1101 = vmatprep.subr.mxu0 0.0
      %1102 = vmatpush1.msra.mxu0 0.0
      %1103 = vmatprep.subr.mxu0 0.0
      %1104 = vmatpush1.msra.mxu0 0.0
      %1105 = vmatprep.subr.mxu0 0.0
      %1106 = vmatpush1.msra.mxu0 0.0
      %1107 = vmatprep.subr.mxu0 0.0
      %1108 = vmatpush1.msra.mxu0 0.0
      %1109 = vmatprep.subr.mxu0 0.0
      %1110 = vmatpush1.msra.mxu0 0.0
      %1111 = vmatprep.subr.mxu0 0.0
      %1112 = vmatpush1.msra.mxu0 0.0
      %1113 = vmatprep.subr.mxu0 0.0
      %1114 = vmatpush1.msra.mxu0 0.0
      %1115 = vmatprep.subr.mxu0 0.0
      %1116 = vmatpush1.msra.mxu0 0.0
      %1117 = vmatprep.subr.mxu0 0.0
      %1118 = vmatpush1.msra.mxu0 0.0
      %1119 = vmatprep.mubr.f32.mxu0 0.0
      %1120 = vmatmul.mubr.f32.gmra.mrb[0].mxu0 %v1029
      %v1121 = vpop.f32.mrb[0].mxu0
      %v1122 = vadd.f32 0.0, %v1121
      %v1123 = vpop.f32.mrb[0].mxu0
      %1124 = vmatprep.mubr.f32.mxu0 0.0
      %1125 = vmatmul.mubr.f32.gmra.mrb[0].mxu0 %v1032
      %v1126 = vpop.f32.mrb[0].mxu0
      %v1127 = vadd.f32 0.0, %v1126
      %v1128 = vpop.f32.mrb[0].mxu0
      %1129 = vmatprep.mubr.f32.mxu0 0.0
      %1130 = vmatmul.mubr.f32.gmra.mrb[0].mxu0 %v1035
      %v1131 = vpop.f32.mrb[0].mxu0
      %v1132 = vadd.f32 0.0, %v1131
      %v1133 = vpop.f32.mrb[0].mxu0
      %1134 = vmatprep.mubr.f32.mxu0 0.0
      %1135 = vmatmul.mubr.f32.gmra.mrb[0].mxu0 %v1038
      %v1136 = vpop.f32.mrb[0].mxu0
      %v1137 = vadd.f32 0.0, %v1136
      %v1138 = vpop.f32.mrb[0].mxu0
      %1139 = vmatprep.mubr.f32.mxu0 0.0
      %1140 = vmatmul.mubr.f32.gmra.mrb[0].mxu0 %v1041
      %v1141 = vpop.f32.mrb[0].mxu0
      %v1142 = vadd.f32 0.0, %v1141
      %v1143 = vpop.f32.mrb[0].mxu0
      %1144 = vmatprep.mubr.f32.mxu0 0.0
      %1145 = vmatmul.mubr.f32.gmra.mrb[0].mxu0 %v1044
      %v1146 = vpop.f32.mrb[0].mxu0
      %v1147 = vadd.f32 0.0, %v1146
      %v1148 = vpop.f32.mrb[0].mxu0
      %1149 = vmatprep.mubr.f32.mxu0 0.0
      %1150 = vmatmul.mubr.f32.gmra.mrb[0].mxu0 %v1047
      %v1151 = vpop.f32.mrb[0].mxu0
      %v1152 = vadd.f32 0.0, %v1151
      %v1153 = vpop.f32.mrb[0].mxu0
      %1154 = vmatprep.mubr.f32.mxu0 0.0
      %1155 = vmatmul.mubr.f32.gmra.mrb[0].mxu0 %v1050
      %v1156 = vpop.f32.mrb[0].mxu0
      %v1157 = vadd.f32 0.0, %v1156
      %v1158 = vpop.f32.mrb[0].mxu0
      %1159 = vdwg.mxu0
      %v1160 = vadd.f32 %v1010, %v1122
      %v1161 = vadd.f32 %v1011, %v1127
      %v1162 = vadd.f32 %v1012, %v1132
      %v1163 = vadd.f32 %v1013, %v1137
      %v1164 = vadd.f32 %v1014, %v1142
      %v1165 = vadd.f32 %v1015, %v1147
      %v1166 = vadd.f32 %v1016, %v1152
      %v1167 = vadd.f32 %v1017, %v1157
      %s1168 = sadd.s32 32, %s279
      %s1169 = scalar_lea.vmem %s262, %s1168
      %v1170 = vld [vmem:[%s1169] sm:$0xff]
      %v1171 = vld [vmem:[%s1169 + $0x10] sm:$0xff]
      %v1172 = vld [vmem:[%s1169 + $0x20] sm:$0xff]
      %v1173 = vld [vmem:[%s1169 + $0x30] sm:$0xff]
      %v1174 = vld [vmem:[%s1169 + $0x40] sm:$0xff]
      %v1175 = vld [vmem:[%s1169 + $0x50] sm:$0xff]
      %v1176 = vld [vmem:[%s1169 + $0x60] sm:$0xff]
      %v1177 = vld [vmem:[%s1169 + $0x70] sm:$0xff]
      %s1178 = scalar_lea.vmem %s1, 24
      %v1179 = vld [vmem:[%s1178] sm:$0xf]
      %v1181 = vsel %vm300, %v1170, 0
      %v1184 = vsel %vm300, %v1171, 0
      %v1187 = vsel %vm300, %v1172, 0
      %v1190 = vsel %vm300, %v1173, 0
      %v1193 = vsel %vm300, %v1174, 0
      %v1196 = vsel %vm300, %v1175, 0
      %v1199 = vsel %vm300, %v1176, 0
      %v1202 = vsel %vm300, %v1177, 0
      %v1205 = vsel %vm325, %v1179, 0
      %1207 = vmatprep.subr.mxu0 0.0
      %1208 = vmatpush1.msra.mxu0 %v1205
      %1209 = vmatprep.subr.mxu0 0.0
      %1210 = vmatpush1.msra.mxu0 0.0
      %1211 = vmatprep.subr.mxu0 0.0
      %1212 = vmatpush1.msra.mxu0 0.0
      %1213 = vmatprep.subr.mxu0 0.0
      %1214 = vmatpush1.msra.mxu0 0.0
      %1215 = vmatprep.subr.mxu0 0.0
      %1216 = vmatpush1.msra.mxu0 0.0
      %1217 = vmatprep.subr.mxu0 0.0
      %1218 = vmatpush1.msra.mxu0 0.0
      %1219 = vmatprep.subr.mxu0 0.0
      %1220 = vmatpush1.msra.mxu0 0.0
      %1221 = vmatprep.subr.mxu0 0.0
      %1222 = vmatpush1.msra.mxu0 0.0
      %1223 = vmatprep.subr.mxu0 0.0
      %1224 = vmatpush1.msra.mxu0 0.0
      %1225 = vmatprep.subr.mxu0 0.0
      %1226 = vmatpush1.msra.mxu0 0.0
      %1227 = vmatprep.subr.mxu0 0.0
      %1228 = vmatpush1.msra.mxu0 0.0
      %1229 = vmatprep.subr.mxu0 0.0
      %1230 = vmatpush1.msra.mxu0 0.0
      %1231 = vmatprep.subr.mxu0 0.0
      %1232 = vmatpush1.msra.mxu0 0.0
      %1233 = vmatprep.subr.mxu0 0.0
      %1234 = vmatpush1.msra.mxu0 0.0
      %1235 = vmatprep.subr.mxu0 0.0
      %1236 = vmatpush1.msra.mxu0 0.0
      %1237 = vmatprep.subr.mxu0 0.0
      %1238 = vmatpush1.msra.mxu0 0.0
      %1239 = vmatprep.subr.mxu0 0.0
      %1240 = vmatpush1.msra.mxu0 0.0
      %1241 = vmatprep.subr.mxu0 0.0
      %1242 = vmatpush1.msra.mxu0 0.0
      %1243 = vmatprep.subr.mxu0 0.0
      %1244 = vmatpush1.msra.mxu0 0.0
      %1245 = vmatprep.subr.mxu0 0.0
      %1246 = vmatpush1.msra.mxu0 0.0
      %1247 = vmatprep.subr.mxu0 0.0
      %1248 = vmatpush1.msra.mxu0 0.0
      %1249 = vmatprep.subr.mxu0 0.0
      %1250 = vmatpush1.msra.mxu0 0.0
      %1251 = vmatprep.subr.mxu0 0.0
      %1252 = vmatpush1.msra.mxu0 0.0
      %1253 = vmatprep.subr.mxu0 0.0
      %1254 = vmatpush1.msra.mxu0 0.0
      %1255 = vmatprep.subr.mxu0 0.0
      %1256 = vmatpush1.msra.mxu0 0.0
      %1257 = vmatprep.subr.mxu0 0.0
      %1258 = vmatpush1.msra.mxu0 0.0
      %1259 = vmatprep.subr.mxu0 0.0
      %1260 = vmatpush1.msra.mxu0 0.0
      %1261 = vmatprep.subr.mxu0 0.0
      %1262 = vmatpush1.msra.mxu0 0.0
      %1263 = vmatprep.subr.mxu0 0.0
      %1264 = vmatpush1.msra.mxu0 0.0
      %1265 = vmatprep.subr.mxu0 0.0
      %1266 = vmatpush1.msra.mxu0 0.0
      %1267 = vmatprep.subr.mxu0 0.0
      %1268 = vmatpush1.msra.mxu0 0.0
      %1269 = vmatprep.subr.mxu0 0.0
      %1270 = vmatpush1.msra.mxu0 0.0
      %1271 = vmatprep.mubr.f32.mxu0 0.0
      %1272 = vmatmul.mubr.f32.gmra.mrb[0].mxu0 %v1181
      %v1273 = vpop.f32.mrb[0].mxu0
      %v1274 = vadd.f32 0.0, %v1273
      %v1275 = vpop.f32.mrb[0].mxu0
      %1276 = vmatprep.mubr.f32.mxu0 0.0
      %1277 = vmatmul.mubr.f32.gmra.mrb[0].mxu0 %v1184
      %v1278 = vpop.f32.mrb[0].mxu0
      %v1279 = vadd.f32 0.0, %v1278
      %v1280 = vpop.f32.mrb[0].mxu0
      %1281 = vmatprep.mubr.f32.mxu0 0.0
      %1282 = vmatmul.mubr.f32.gmra.mrb[0].mxu0 %v1187
      %v1283 = vpop.f32.mrb[0].mxu0
      %v1284 = vadd.f32 0.0, %v1283
      %v1285 = vpop.f32.mrb[0].mxu0
      %1286 = vmatprep.mubr.f32.mxu0 0.0
      %1287 = vmatmul.mubr.f32.gmra.mrb[0].mxu0 %v1190
      %v1288 = vpop.f32.mrb[0].mxu0
      %v1289 = vadd.f32 0.0, %v1288
      %v1290 = vpop.f32.mrb[0].mxu0
      %1291 = vmatprep.mubr.f32.mxu0 0.0
      %1292 = vmatmul.mubr.f32.gmra.mrb[0].mxu0 %v1193
      %v1293 = vpop.f32.mrb[0].mxu0
      %v1294 = vadd.f32 0.0, %v1293
      %v1295 = vpop.f32.mrb[0].mxu0
      %1296 = vmatprep.mubr.f32.mxu0 0.0
      %1297 = vmatmul.mubr.f32.gmra.mrb[0].mxu0 %v1196
      %v1298 = vpop.f32.mrb[0].mxu0
      %v1299 = vadd.f32 0.0, %v1298
      %v1300 = vpop.f32.mrb[0].mxu0
      %1301 = vmatprep.mubr.f32.mxu0 0.0
      %1302 = vmatmul.mubr.f32.gmra.mrb[0].mxu0 %v1199
      %v1303 = vpop.f32.mrb[0].mxu0
      %v1304 = vadd.f32 0.0, %v1303
      %v1305 = vpop.f32.mrb[0].mxu0
      %1306 = vmatprep.mubr.f32.mxu0 0.0
      %1307 = vmatmul.mubr.f32.gmra.mrb[0].mxu0 %v1202
      %v1308 = vpop.f32.mrb[0].mxu0
      %v1309 = vadd.f32 0.0, %v1308
      %v1310 = vpop.f32.mrb[0].mxu0
      %1311 = vdwg.mxu0
      %v1312 = vadd.f32 %v1160, %v1274
      %v1313 = vadd.f32 %v1161, %v1279
      %v1314 = vadd.f32 %v1162, %v1284
      %v1315 = vadd.f32 %v1163, %v1289
      %v1316 = vadd.f32 %v1164, %v1294
      %v1317 = vadd.f32 %v1165, %v1299
      %v1318 = vadd.f32 %v1166, %v1304
      %v1319 = vadd.f32 %v1167, %v1309
      %v1320 = vld [vmem:[%s1169 + $0x1] sm:$0xff]
      %v1321 = vld [vmem:[%s1169 + $0x11] sm:$0xff]
      %v1322 = vld [vmem:[%s1169 + $0x21] sm:$0xff]
      %v1323 = vld [vmem:[%s1169 + $0x31] sm:$0xff]
      %v1324 = vld [vmem:[%s1169 + $0x41] sm:$0xff]
      %v1325 = vld [vmem:[%s1169 + $0x51] sm:$0xff]
      %v1326 = vld [vmem:[%s1169 + $0x61] sm:$0xff]
      %v1327 = vld [vmem:[%s1169 + $0x71] sm:$0xff]
      %s1328 = scalar_lea.vmem %s1, 28
      %v1329 = vld [vmem:[%s1328] sm:$0xf]
      %v1331 = vsel %vm300, %v1320, 0
      %v1334 = vsel %vm300, %v1321, 0
      %v1337 = vsel %vm300, %v1322, 0
      %v1340 = vsel %vm300, %v1323, 0
      %v1343 = vsel %vm300, %v1324, 0
      %v1346 = vsel %vm300, %v1325, 0
      %v1349 = vsel %vm300, %v1326, 0
      %v1352 = vsel %vm300, %v1327, 0
      %v1355 = vsel %vm325, %v1329, 0
      %1357 = vmatprep.subr.mxu0 0.0
      %1358 = vmatpush1.msra.mxu0 %v1355
      %1359 = vmatprep.subr.mxu0 0.0
      %1360 = vmatpush1.msra.mxu0 0.0
      %1361 = vmatprep.subr.mxu0 0.0
      %1362 = vmatpush1.msra.mxu0 0.0
      %1363 = vmatprep.subr.mxu0 0.0
      %1364 = vmatpush1.msra.mxu0 0.0
      %1365 = vmatprep.subr.mxu0 0.0
      %1366 = vmatpush1.msra.mxu0 0.0
      %1367 = vmatprep.subr.mxu0 0.0
      %1368 = vmatpush1.msra.mxu0 0.0
      %1369 = vmatprep.subr.mxu0 0.0
      %1370 = vmatpush1.msra.mxu0 0.0
      %1371 = vmatprep.subr.mxu0 0.0
      %1372 = vmatpush1.msra.mxu0 0.0
      %1373 = vmatprep.subr.mxu0 0.0
      %1374 = vmatpush1.msra.mxu0 0.0
      %1375 = vmatprep.subr.mxu0 0.0
      %1376 = vmatpush1.msra.mxu0 0.0
      %1377 = vmatprep.subr.mxu0 0.0
      %1378 = vmatpush1.msra.mxu0 0.0
      %1379 = vmatprep.subr.mxu0 0.0
      %1380 = vmatpush1.msra.mxu0 0.0
      %1381 = vmatprep.subr.mxu0 0.0
      %1382 = vmatpush1.msra.mxu0 0.0
      %1383 = vmatprep.subr.mxu0 0.0
      %1384 = vmatpush1.msra.mxu0 0.0
      %1385 = vmatprep.subr.mxu0 0.0
      %1386 = vmatpush1.msra.mxu0 0.0
      %1387 = vmatprep.subr.mxu0 0.0
      %1388 = vmatpush1.msra.mxu0 0.0
      %1389 = vmatprep.subr.mxu0 0.0
      %1390 = vmatpush1.msra.mxu0 0.0
      %1391 = vmatprep.subr.mxu0 0.0
      %1392 = vmatpush1.msra.mxu0 0.0
      %1393 = vmatprep.subr.mxu0 0.0
      %1394 = vmatpush1.msra.mxu0 0.0
      %1395 = vmatprep.subr.mxu0 0.0
      %1396 = vmatpush1.msra.mxu0 0.0
      %1397 = vmatprep.subr.mxu0 0.0
      %1398 = vmatpush1.msra.mxu0 0.0
      %1399 = vmatprep.subr.mxu0 0.0
      %1400 = vmatpush1.msra.mxu0 0.0
      %1401 = vmatprep.subr.mxu0 0.0
      %1402 = vmatpush1.msra.mxu0 0.0
      %1403 = vmatprep.subr.mxu0 0.0
      %1404 = vmatpush1.msra.mxu0 0.0
      %1405 = vmatprep.subr.mxu0 0.0
      %1406 = vmatpush1.msra.mxu0 0.0
      %1407 = vmatprep.subr.mxu0 0.0
      %1408 = vmatpush1.msra.mxu0 0.0
      %1409 = vmatprep.subr.mxu0 0.0
      %1410 = vmatpush1.msra.mxu0 0.0
      %1411 = vmatprep.subr.mxu0 0.0
      %1412 = vmatpush1.msra.mxu0 0.0
      %1413 = vmatprep.subr.mxu0 0.0
      %1414 = vmatpush1.msra.mxu0 0.0
      %1415 = vmatprep.subr.mxu0 0.0
      %1416 = vmatpush1.msra.mxu0 0.0
      %1417 = vmatprep.subr.mxu0 0.0
      %1418 = vmatpush1.msra.mxu0 0.0
      %1419 = vmatprep.subr.mxu0 0.0
      %1420 = vmatpush1.msra.mxu0 0.0
      %1421 = vmatprep.mubr.f32.mxu0 0.0
      %1422 = vmatmul.mubr.f32.gmra.mrb[0].mxu0 %v1331
      %v1423 = vpop.f32.mrb[0].mxu0
      %v1424 = vadd.f32 0.0, %v1423
      %v1425 = vpop.f32.mrb[0].mxu0
      %1426 = vmatprep.mubr.f32.mxu0 0.0
      %1427 = vmatmul.mubr.f32.gmra.mrb[0].mxu0 %v1334
      %v1428 = vpop.f32.mrb[0].mxu0
      %v1429 = vadd.f32 0.0, %v1428
      %v1430 = vpop.f32.mrb[0].mxu0
      %1431 = vmatprep.mubr.f32.mxu0 0.0
      %1432 = vmatmul.mubr.f32.gmra.mrb[0].mxu0 %v1337
      %v1433 = vpop.f32.mrb[0].mxu0
      %v1434 = vadd.f32 0.0, %v1433
      %v1435 = vpop.f32.mrb[0].mxu0
      %1436 = vmatprep.mubr.f32.mxu0 0.0
      %1437 = vmatmul.mubr.f32.gmra.mrb[0].mxu0 %v1340
      %v1438 = vpop.f32.mrb[0].mxu0
      %v1439 = vadd.f32 0.0, %v1438
      %v1440 = vpop.f32.mrb[0].mxu0
      %1441 = vmatprep.mubr.f32.mxu0 0.0
      %1442 = vmatmul.mubr.f32.gmra.mrb[0].mxu0 %v1343
      %v1443 = vpop.f32.mrb[0].mxu0
      %v1444 = vadd.f32 0.0, %v1443
      %v1445 = vpop.f32.mrb[0].mxu0
      %1446 = vmatprep.mubr.f32.mxu0 0.0
      %1447 = vmatmul.mubr.f32.gmra.mrb[0].mxu0 %v1346
      %v1448 = vpop.f32.mrb[0].mxu0
      %v1449 = vadd.f32 0.0, %v1448
      %v1450 = vpop.f32.mrb[0].mxu0
      %1451 = vmatprep.mubr.f32.mxu0 0.0
      %1452 = vmatmul.mubr.f32.gmra.mrb[0].mxu0 %v1349
      %v1453 = vpop.f32.mrb[0].mxu0
      %v1454 = vadd.f32 0.0, %v1453
      %v1455 = vpop.f32.mrb[0].mxu0
      %1456 = vmatprep.mubr.f32.mxu0 0.0
      %1457 = vmatmul.mubr.f32.gmra.mrb[0].mxu0 %v1352
      %v1458 = vpop.f32.mrb[0].mxu0
      %v1459 = vadd.f32 0.0, %v1458
      %v1460 = vpop.f32.mrb[0].mxu0
      %1461 = vdwg.mxu0
      %v1462 = vadd.f32 %v1312, %v1424
      %v1463 = vadd.f32 %v1313, %v1429
      %v1464 = vadd.f32 %v1314, %v1434
      %v1465 = vadd.f32 %v1315, %v1439
      %v1466 = vadd.f32 %v1316, %v1444
      %v1467 = vadd.f32 %v1317, %v1449
      %v1468 = vadd.f32 %v1318, %v1454
      %v1469 = vadd.f32 %v1319, %v1459
      %v1470 = vld [vmem:[%s1169 + $0x2] sm:$0xff]
      %v1471 = vld [vmem:[%s1169 + $0x12] sm:$0xff]
      %v1472 = vld [vmem:[%s1169 + $0x22] sm:$0xff]
      %v1473 = vld [vmem:[%s1169 + $0x32] sm:$0xff]
      %v1474 = vld [vmem:[%s1169 + $0x42] sm:$0xff]
      %v1475 = vld [vmem:[%s1169 + $0x52] sm:$0xff]
      %v1476 = vld [vmem:[%s1169 + $0x62] sm:$0xff]
      %v1477 = vld [vmem:[%s1169 + $0x72] sm:$0xff]
      %s1478 = scalar_lea.vmem %s1, 32
      %v1479 = vld [vmem:[%s1478] sm:$0xf]
      %v1481 = vsel %vm300, %v1470, 0
      %v1484 = vsel %vm300, %v1471, 0
      %v1487 = vsel %vm300, %v1472, 0
      %v1490 = vsel %vm300, %v1473, 0
      %v1493 = vsel %vm300, %v1474, 0
      %v1496 = vsel %vm300, %v1475, 0
      %v1499 = vsel %vm300, %v1476, 0
      %v1502 = vsel %vm300, %v1477, 0
      %v1505 = vsel %vm325, %v1479, 0
      %1507 = vmatprep.subr.mxu0 0.0
      %1508 = vmatpush1.msra.mxu0 %v1505
      %1509 = vmatprep.subr.mxu0 0.0
      %1510 = vmatpush1.msra.mxu0 0.0
      %1511 = vmatprep.subr.mxu0 0.0
      %1512 = vmatpush1.msra.mxu0 0.0
      %1513 = vmatprep.subr.mxu0 0.0
      %1514 = vmatpush1.msra.mxu0 0.0
      %1515 = vmatprep.subr.mxu0 0.0
      %1516 = vmatpush1.msra.mxu0 0.0
      %1517 = vmatprep.subr.mxu0 0.0
      %1518 = vmatpush1.msra.mxu0 0.0
      %1519 = vmatprep.subr.mxu0 0.0
      %1520 = vmatpush1.msra.mxu0 0.0
      %1521 = vmatprep.subr.mxu0 0.0
      %1522 = vmatpush1.msra.mxu0 0.0
      %1523 = vmatprep.subr.mxu0 0.0
      %1524 = vmatpush1.msra.mxu0 0.0
      %1525 = vmatprep.subr.mxu0 0.0
      %1526 = vmatpush1.msra.mxu0 0.0
      %1527 = vmatprep.subr.mxu0 0.0
      %1528 = vmatpush1.msra.mxu0 0.0
      %1529 = vmatprep.subr.mxu0 0.0
      %1530 = vmatpush1.msra.mxu0 0.0
      %1531 = vmatprep.subr.mxu0 0.0
      %1532 = vmatpush1.msra.mxu0 0.0
      %1533 = vmatprep.subr.mxu0 0.0
      %1534 = vmatpush1.msra.mxu0 0.0
      %1535 = vmatprep.subr.mxu0 0.0
      %1536 = vmatpush1.msra.mxu0 0.0
      %1537 = vmatprep.subr.mxu0 0.0
      %1538 = vmatpush1.msra.mxu0 0.0
      %1539 = vmatprep.subr.mxu0 0.0
      %1540 = vmatpush1.msra.mxu0 0.0
      %1541 = vmatprep.subr.mxu0 0.0
      %1542 = vmatpush1.msra.mxu0 0.0
      %1543 = vmatprep.subr.mxu0 0.0
      %1544 = vmatpush1.msra.mxu0 0.0
      %1545 = vmatprep.subr.mxu0 0.0
      %1546 = vmatpush1.msra.mxu0 0.0
      %1547 = vmatprep.subr.mxu0 0.0
      %1548 = vmatpush1.msra.mxu0 0.0
      %1549 = vmatprep.subr.mxu0 0.0
      %1550 = vmatpush1.msra.mxu0 0.0
      %1551 = vmatprep.subr.mxu0 0.0
      %1552 = vmatpush1.msra.mxu0 0.0
      %1553 = vmatprep.subr.mxu0 0.0
      %1554 = vmatpush1.msra.mxu0 0.0
      %1555 = vmatprep.subr.mxu0 0.0
      %1556 = vmatpush1.msra.mxu0 0.0
      %1557 = vmatprep.subr.mxu0 0.0
      %1558 = vmatpush1.msra.mxu0 0.0
      %1559 = vmatprep.subr.mxu0 0.0
      %1560 = vmatpush1.msra.mxu0 0.0
      %1561 = vmatprep.subr.mxu0 0.0
      %1562 = vmatpush1.msra.mxu0 0.0
      %1563 = vmatprep.subr.mxu0 0.0
      %1564 = vmatpush1.msra.mxu0 0.0
      %1565 = vmatprep.subr.mxu0 0.0
      %1566 = vmatpush1.msra.mxu0 0.0
      %1567 = vmatprep.subr.mxu0 0.0
      %1568 = vmatpush1.msra.mxu0 0.0
      %1569 = vmatprep.subr.mxu0 0.0
      %1570 = vmatpush1.msra.mxu0 0.0
      %1571 = vmatprep.mubr.f32.mxu0 0.0
      %1572 = vmatmul.mubr.f32.gmra.mrb[0].mxu0 %v1481
      %v1573 = vpop.f32.mrb[0].mxu0
      %v1574 = vadd.f32 0.0, %v1573
      %v1575 = vpop.f32.mrb[0].mxu0
      %1576 = vmatprep.mubr.f32.mxu0 0.0
      %1577 = vmatmul.mubr.f32.gmra.mrb[0].mxu0 %v1484
      %v1578 = vpop.f32.mrb[0].mxu0
      %v1579 = vadd.f32 0.0, %v1578
      %v1580 = vpop.f32.mrb[0].mxu0
      %1581 = vmatprep.mubr.f32.mxu0 0.0
      %1582 = vmatmul.mubr.f32.gmra.mrb[0].mxu0 %v1487
      %v1583 = vpop.f32.mrb[0].mxu0
      %v1584 = vadd.f32 0.0, %v1583
      %v1585 = vpop.f32.mrb[0].mxu0
      %1586 = vmatprep.mubr.f32.mxu0 0.0
      %1587 = vmatmul.mubr.f32.gmra.mrb[0].mxu0 %v1490
      %v1588 = vpop.f32.mrb[0].mxu0
      %v1589 = vadd.f32 0.0, %v1588
      %v1590 = vpop.f32.mrb[0].mxu0
      %1591 = vmatprep.mubr.f32.mxu0 0.0
      %1592 = vmatmul.mubr.f32.gmra.mrb[0].mxu0 %v1493
      %v1593 = vpop.f32.mrb[0].mxu0
      %v1594 = vadd.f32 0.0, %v1593
      %v1595 = vpop.f32.mrb[0].mxu0
      %1596 = vmatprep.mubr.f32.mxu0 0.0
      %1597 = vmatmul.mubr.f32.gmra.mrb[0].mxu0 %v1496
      %v1598 = vpop.f32.mrb[0].mxu0
      %v1599 = vadd.f32 0.0, %v1598
      %v1600 = vpop.f32.mrb[0].mxu0
      %1601 = vmatprep.mubr.f32.mxu0 0.0
      %1602 = vmatmul.mubr.f32.gmra.mrb[0].mxu0 %v1499
      %v1603 = vpop.f32.mrb[0].mxu0
      %v1604 = vadd.f32 0.0, %v1603
      %v1605 = vpop.f32.mrb[0].mxu0
      %1606 = vmatprep.mubr.f32.mxu0 0.0
      %1607 = vmatmul.mubr.f32.gmra.mrb[0].mxu0 %v1502
      %v1608 = vpop.f32.mrb[0].mxu0
      %v1609 = vadd.f32 0.0, %v1608
      %v1610 = vpop.f32.mrb[0].mxu0
      %1611 = vdwg.mxu0
      %v1612 = vadd.f32 %v1462, %v1574
      %v1613 = vadd.f32 %v1463, %v1579
      %v1614 = vadd.f32 %v1464, %v1584
      %v1615 = vadd.f32 %v1465, %v1589
      %v1616 = vadd.f32 %v1466, %v1594
      %v1617 = vadd.f32 %v1467, %v1599
      %v1618 = vadd.f32 %v1468, %v1604
      %v1619 = vadd.f32 %v1469, %v1609
      %s1620 = sadd.s32 %s23, 1
      %s1621 = smul.u32 %s1620, 160
      %s1622 = scalar_lea.vmem %s262, %s1621
      %v1623 = vld [vmem:[%s1622] sm:$0xff]
      %v1624 = vld [vmem:[%s1622 + $0x10] sm:$0xff]
      %v1625 = vld [vmem:[%s1622 + $0x20] sm:$0xff]
      %v1626 = vld [vmem:[%s1622 + $0x30] sm:$0xff]
      %v1627 = vld [vmem:[%s1622 + $0x40] sm:$0xff]
      %v1628 = vld [vmem:[%s1622 + $0x50] sm:$0xff]
      %v1629 = vld [vmem:[%s1622 + $0x60] sm:$0xff]
      %v1630 = vld [vmem:[%s1622 + $0x70] sm:$0xff]
      %s1631 = scalar_lea.vmem %s1, 36
      %v1632 = vld [vmem:[%s1631] sm:$0xf]
      %v1634 = vsel %vm300, %v1623, 0
      %v1637 = vsel %vm300, %v1624, 0
      %v1640 = vsel %vm300, %v1625, 0
      %v1643 = vsel %vm300, %v1626, 0
      %v1646 = vsel %vm300, %v1627, 0
      %v1649 = vsel %vm300, %v1628, 0
      %v1652 = vsel %vm300, %v1629, 0
      %v1655 = vsel %vm300, %v1630, 0
      %v1658 = vsel %vm325, %v1632, 0
      %1660 = vmatprep.subr.mxu0 0.0
      %1661 = vmatpush1.msra.mxu0 %v1658
      %1662 = vmatprep.subr.mxu0 0.0
      %1663 = vmatpush1.msra.mxu0 0.0
      %1664 = vmatprep.subr.mxu0 0.0
      %1665 = vmatpush1.msra.mxu0 0.0
      %1666 = vmatprep.subr.mxu0 0.0
      %1667 = vmatpush1.msra.mxu0 0.0
      %1668 = vmatprep.subr.mxu0 0.0
      %1669 = vmatpush1.msra.mxu0 0.0
      %1670 = vmatprep.subr.mxu0 0.0
      %1671 = vmatpush1.msra.mxu0 0.0
      %1672 = vmatprep.subr.mxu0 0.0
      %1673 = vmatpush1.msra.mxu0 0.0
      %1674 = vmatprep.subr.mxu0 0.0
      %1675 = vmatpush1.msra.mxu0 0.0
      %1676 = vmatprep.subr.mxu0 0.0
      %1677 = vmatpush1.msra.mxu0 0.0
      %1678 = vmatprep.subr.mxu0 0.0
      %1679 = vmatpush1.msra.mxu0 0.0
      %1680 = vmatprep.subr.mxu0 0.0
      %1681 = vmatpush1.msra.mxu0 0.0
      %1682 = vmatprep.subr.mxu0 0.0
      %1683 = vmatpush1.msra.mxu0 0.0
      %1684 = vmatprep.subr.mxu0 0.0
      %1685 = vmatpush1.msra.mxu0 0.0
      %1686 = vmatprep.subr.mxu0 0.0
      %1687 = vmatpush1.msra.mxu0 0.0
      %1688 = vmatprep.subr.mxu0 0.0
      %1689 = vmatpush1.msra.mxu0 0.0
      %1690 = vmatprep.subr.mxu0 0.0
      %1691 = vmatpush1.msra.mxu0 0.0
      %1692 = vmatprep.subr.mxu0 0.0
      %1693 = vmatpush1.msra.mxu0 0.0
      %1694 = vmatprep.subr.mxu0 0.0
      %1695 = vmatpush1.msra.mxu0 0.0
      %1696 = vmatprep.subr.mxu0 0.0
      %1697 = vmatpush1.msra.mxu0 0.0
      %1698 = vmatprep.subr.mxu0 0.0
      %1699 = vmatpush1.msra.mxu0 0.0
      %1700 = vmatprep.subr.mxu0 0.0
      %1701 = vmatpush1.msra.mxu0 0.0
      %1702 = vmatprep.subr.mxu0 0.0
      %1703 = vmatpush1.msra.mxu0 0.0
      %1704 = vmatprep.subr.mxu0 0.0
      %1705 = vmatpush1.msra.mxu0 0.0
      %1706 = vmatprep.subr.mxu0 0.0
      %1707 = vmatpush1.msra.mxu0 0.0
      %1708 = vmatprep.subr.mxu0 0.0
      %1709 = vmatpush1.msra.mxu0 0.0
      %1710 = vmatprep.subr.mxu0 0.0
      %1711 = vmatpush1.msra.mxu0 0.0
      %1712 = vmatprep.subr.mxu0 0.0
      %1713 = vmatpush1.msra.mxu0 0.0
      %1714 = vmatprep.subr.mxu0 0.0
      %1715 = vmatpush1.msra.mxu0 0.0
      %1716 = vmatprep.subr.mxu0 0.0
      %1717 = vmatpush1.msra.mxu0 0.0
      %1718 = vmatprep.subr.mxu0 0.0
      %1719 = vmatpush1.msra.mxu0 0.0
      %1720 = vmatprep.subr.mxu0 0.0
      %1721 = vmatpush1.msra.mxu0 0.0
      %1722 = vmatprep.subr.mxu0 0.0
      %1723 = vmatpush1.msra.mxu0 0.0
      %1724 = vmatprep.mubr.f32.mxu0 0.0
      %1725 = vmatmul.mubr.f32.gmra.mrb[0].mxu0 %v1634
      %v1726 = vpop.f32.mrb[0].mxu0
      %v1727 = vadd.f32 0.0, %v1726
      %v1728 = vpop.f32.mrb[0].mxu0
      %1729 = vmatprep.mubr.f32.mxu0 0.0
      %1730 = vmatmul.mubr.f32.gmra.mrb[0].mxu0 %v1637
      %v1731 = vpop.f32.mrb[0].mxu0
      %v1732 = vadd.f32 0.0, %v1731
      %v1733 = vpop.f32.mrb[0].mxu0
      %1734 = vmatprep.mubr.f32.mxu0 0.0
      %1735 = vmatmul.mubr.f32.gmra.mrb[0].mxu0 %v1640
      %v1736 = vpop.f32.mrb[0].mxu0
      %v1737 = vadd.f32 0.0, %v1736
      %v1738 = vpop.f32.mrb[0].mxu0
      %1739 = vmatprep.mubr.f32.mxu0 0.0
      %1740 = vmatmul.mubr.f32.gmra.mrb[0].mxu0 %v1643
      %v1741 = vpop.f32.mrb[0].mxu0
      %v1742 = vadd.f32 0.0, %v1741
      %v1743 = vpop.f32.mrb[0].mxu0
      %1744 = vmatprep.mubr.f32.mxu0 0.0
      %1745 = vmatmul.mubr.f32.gmra.mrb[0].mxu0 %v1646
      %v1746 = vpop.f32.mrb[0].mxu0
      %v1747 = vadd.f32 0.0, %v1746
      %v1748 = vpop.f32.mrb[0].mxu0
      %1749 = vmatprep.mubr.f32.mxu0 0.0
      %1750 = vmatmul.mubr.f32.gmra.mrb[0].mxu0 %v1649
      %v1751 = vpop.f32.mrb[0].mxu0
      %v1752 = vadd.f32 0.0, %v1751
      %v1753 = vpop.f32.mrb[0].mxu0
      %1754 = vmatprep.mubr.f32.mxu0 0.0
      %1755 = vmatmul.mubr.f32.gmra.mrb[0].mxu0 %v1652
      %v1756 = vpop.f32.mrb[0].mxu0
      %v1757 = vadd.f32 0.0, %v1756
      %v1758 = vpop.f32.mrb[0].mxu0
      %1759 = vmatprep.mubr.f32.mxu0 0.0
      %1760 = vmatmul.mubr.f32.gmra.mrb[0].mxu0 %v1655
      %v1761 = vpop.f32.mrb[0].mxu0
      %v1762 = vadd.f32 0.0, %v1761
      %v1763 = vpop.f32.mrb[0].mxu0
      %1764 = vdwg.mxu0
      %v1765 = vadd.f32 %v1612, %v1727
      %v1766 = vadd.f32 %v1613, %v1732
      %v1767 = vadd.f32 %v1614, %v1737
      %v1768 = vadd.f32 %v1615, %v1742
      %v1769 = vadd.f32 %v1616, %v1747
      %v1770 = vadd.f32 %v1617, %v1752
      %v1771 = vadd.f32 %v1618, %v1757
      %v1772 = vadd.f32 %v1619, %v1762
      %v1773 = vld [vmem:[%s1622 + $0x1] sm:$0xff]
      %v1774 = vld [vmem:[%s1622 + $0x11] sm:$0xff]
      %v1775 = vld [vmem:[%s1622 + $0x21] sm:$0xff]
      %v1776 = vld [vmem:[%s1622 + $0x31] sm:$0xff]
      %v1777 = vld [vmem:[%s1622 + $0x41] sm:$0xff]
      %v1778 = vld [vmem:[%s1622 + $0x51] sm:$0xff]
      %v1779 = vld [vmem:[%s1622 + $0x61] sm:$0xff]
      %v1780 = vld [vmem:[%s1622 + $0x71] sm:$0xff]
      %s1781 = scalar_lea.vmem %s1, 40
      %v1782 = vld [vmem:[%s1781] sm:$0xf]
      %v1784 = vsel %vm300, %v1773, 0
      %v1787 = vsel %vm300, %v1774, 0
      %v1790 = vsel %vm300, %v1775, 0
      %v1793 = vsel %vm300, %v1776, 0
      %v1796 = vsel %vm300, %v1777, 0
      %v1799 = vsel %vm300, %v1778, 0
      %v1802 = vsel %vm300, %v1779, 0
      %v1805 = vsel %vm300, %v1780, 0
      %v1808 = vsel %vm325, %v1782, 0
      %1810 = vmatprep.subr.mxu0 0.0
      %1811 = vmatpush1.msra.mxu0 %v1808
      %1812 = vmatprep.subr.mxu0 0.0
      %1813 = vmatpush1.msra.mxu0 0.0
      %1814 = vmatprep.subr.mxu0 0.0
      %1815 = vmatpush1.msra.mxu0 0.0
      %1816 = vmatprep.subr.mxu0 0.0
      %1817 = vmatpush1.msra.mxu0 0.0
      %1818 = vmatprep.subr.mxu0 0.0
      %1819 = vmatpush1.msra.mxu0 0.0
      %1820 = vmatprep.subr.mxu0 0.0
      %1821 = vmatpush1.msra.mxu0 0.0
      %1822 = vmatprep.subr.mxu0 0.0
      %1823 = vmatpush1.msra.mxu0 0.0
      %1824 = vmatprep.subr.mxu0 0.0
      %1825 = vmatpush1.msra.mxu0 0.0
      %1826 = vmatprep.subr.mxu0 0.0
      %1827 = vmatpush1.msra.mxu0 0.0
      %1828 = vmatprep.subr.mxu0 0.0
      %1829 = vmatpush1.msra.mxu0 0.0
      %1830 = vmatprep.subr.mxu0 0.0
      %1831 = vmatpush1.msra.mxu0 0.0
      %1832 = vmatprep.subr.mxu0 0.0
      %1833 = vmatpush1.msra.mxu0 0.0
      %1834 = vmatprep.subr.mxu0 0.0
      %1835 = vmatpush1.msra.mxu0 0.0
      %1836 = vmatprep.subr.mxu0 0.0
      %1837 = vmatpush1.msra.mxu0 0.0
      %1838 = vmatprep.subr.mxu0 0.0
      %1839 = vmatpush1.msra.mxu0 0.0
      %1840 = vmatprep.subr.mxu0 0.0
      %1841 = vmatpush1.msra.mxu0 0.0
      %1842 = vmatprep.subr.mxu0 0.0
      %1843 = vmatpush1.msra.mxu0 0.0
      %1844 = vmatprep.subr.mxu0 0.0
      %1845 = vmatpush1.msra.mxu0 0.0
      %1846 = vmatprep.subr.mxu0 0.0
      %1847 = vmatpush1.msra.mxu0 0.0
      %1848 = vmatprep.subr.mxu0 0.0
      %1849 = vmatpush1.msra.mxu0 0.0
      %1850 = vmatprep.subr.mxu0 0.0
      %1851 = vmatpush1.msra.mxu0 0.0
      %1852 = vmatprep.subr.mxu0 0.0
      %1853 = vmatpush1.msra.mxu0 0.0
      %1854 = vmatprep.subr.mxu0 0.0
      %1855 = vmatpush1.msra.mxu0 0.0
      %1856 = vmatprep.subr.mxu0 0.0
      %1857 = vmatpush1.msra.mxu0 0.0
      %1858 = vmatprep.subr.mxu0 0.0
      %1859 = vmatpush1.msra.mxu0 0.0
      %1860 = vmatprep.subr.mxu0 0.0
      %1861 = vmatpush1.msra.mxu0 0.0
      %1862 = vmatprep.subr.mxu0 0.0
      %1863 = vmatpush1.msra.mxu0 0.0
      %1864 = vmatprep.subr.mxu0 0.0
      %1865 = vmatpush1.msra.mxu0 0.0
      %1866 = vmatprep.subr.mxu0 0.0
      %1867 = vmatpush1.msra.mxu0 0.0
      %1868 = vmatprep.subr.mxu0 0.0
      %1869 = vmatpush1.msra.mxu0 0.0
      %1870 = vmatprep.subr.mxu0 0.0
      %1871 = vmatpush1.msra.mxu0 0.0
      %1872 = vmatprep.subr.mxu0 0.0
      %1873 = vmatpush1.msra.mxu0 0.0
      %1874 = vmatprep.mubr.f32.mxu0 0.0
      %1875 = vmatmul.mubr.f32.gmra.mrb[0].mxu0 %v1784
      %v1876 = vpop.f32.mrb[0].mxu0
      %v1877 = vadd.f32 0.0, %v1876
      %v1878 = vpop.f32.mrb[0].mxu0
      %1879 = vmatprep.mubr.f32.mxu0 0.0
      %1880 = vmatmul.mubr.f32.gmra.mrb[0].mxu0 %v1787
      %v1881 = vpop.f32.mrb[0].mxu0
      %v1882 = vadd.f32 0.0, %v1881
      %v1883 = vpop.f32.mrb[0].mxu0
      %1884 = vmatprep.mubr.f32.mxu0 0.0
      %1885 = vmatmul.mubr.f32.gmra.mrb[0].mxu0 %v1790
      %v1886 = vpop.f32.mrb[0].mxu0
      %v1887 = vadd.f32 0.0, %v1886
      %v1888 = vpop.f32.mrb[0].mxu0
      %1889 = vmatprep.mubr.f32.mxu0 0.0
      %1890 = vmatmul.mubr.f32.gmra.mrb[0].mxu0 %v1793
      %v1891 = vpop.f32.mrb[0].mxu0
      %v1892 = vadd.f32 0.0, %v1891
      %v1893 = vpop.f32.mrb[0].mxu0
      %1894 = vmatprep.mubr.f32.mxu0 0.0
      %1895 = vmatmul.mubr.f32.gmra.mrb[0].mxu0 %v1796
      %v1896 = vpop.f32.mrb[0].mxu0
      %v1897 = vadd.f32 0.0, %v1896
      %v1898 = vpop.f32.mrb[0].mxu0
      %1899 = vmatprep.mubr.f32.mxu0 0.0
      %1900 = vmatmul.mubr.f32.gmra.mrb[0].mxu0 %v1799
      %v1901 = vpop.f32.mrb[0].mxu0
      %v1902 = vadd.f32 0.0, %v1901
      %v1903 = vpop.f32.mrb[0].mxu0
      %1904 = vmatprep.mubr.f32.mxu0 0.0
      %1905 = vmatmul.mubr.f32.gmra.mrb[0].mxu0 %v1802
      %v1906 = vpop.f32.mrb[0].mxu0
      %v1907 = vadd.f32 0.0, %v1906
      %v1908 = vpop.f32.mrb[0].mxu0
      %1909 = vmatprep.mubr.f32.mxu0 0.0
      %1910 = vmatmul.mubr.f32.gmra.mrb[0].mxu0 %v1805
      %v1911 = vpop.f32.mrb[0].mxu0
      %v1912 = vadd.f32 0.0, %v1911
      %v1913 = vpop.f32.mrb[0].mxu0
      %1914 = vdwg.mxu0
      %v1915 = vadd.f32 %v1765, %v1877
      %v1916 = vadd.f32 %v1766, %v1882
      %v1917 = vadd.f32 %v1767, %v1887
      %v1918 = vadd.f32 %v1768, %v1892
      %v1919 = vadd.f32 %v1769, %v1897
      %v1920 = vadd.f32 %v1770, %v1902
      %v1921 = vadd.f32 %v1771, %v1907
      %v1922 = vadd.f32 %v1772, %v1912
      %v1923 = vld [vmem:[%s1622 + $0x2] sm:$0xff]
      %v1924 = vld [vmem:[%s1622 + $0x12] sm:$0xff]
      %v1925 = vld [vmem:[%s1622 + $0x22] sm:$0xff]
      %v1926 = vld [vmem:[%s1622 + $0x32] sm:$0xff]
      %v1927 = vld [vmem:[%s1622 + $0x42] sm:$0xff]
      %v1928 = vld [vmem:[%s1622 + $0x52] sm:$0xff]
      %v1929 = vld [vmem:[%s1622 + $0x62] sm:$0xff]
      %v1930 = vld [vmem:[%s1622 + $0x72] sm:$0xff]
      %s1931 = scalar_lea.vmem %s1, 44
      %v1932 = vld [vmem:[%s1931] sm:$0xf]
      %v1934 = vsel %vm300, %v1923, 0
      %v1937 = vsel %vm300, %v1924, 0
      %v1940 = vsel %vm300, %v1925, 0
      %v1943 = vsel %vm300, %v1926, 0
      %v1946 = vsel %vm300, %v1927, 0
      %v1949 = vsel %vm300, %v1928, 0
      %v1952 = vsel %vm300, %v1929, 0
      %v1955 = vsel %vm300, %v1930, 0
      %v1958 = vsel %vm325, %v1932, 0
      %1960 = vmatprep.subr.mxu0 0.0
      %1961 = vmatpush1.msra.mxu0 %v1958
      %1962 = vmatprep.subr.mxu0 0.0
      %1963 = vmatpush1.msra.mxu0 0.0
      %1964 = vmatprep.subr.mxu0 0.0
      %1965 = vmatpush1.msra.mxu0 0.0
      %1966 = vmatprep.subr.mxu0 0.0
      %1967 = vmatpush1.msra.mxu0 0.0
      %1968 = vmatprep.subr.mxu0 0.0
      %1969 = vmatpush1.msra.mxu0 0.0
      %1970 = vmatprep.subr.mxu0 0.0
      %1971 = vmatpush1.msra.mxu0 0.0
      %1972 = vmatprep.subr.mxu0 0.0
      %1973 = vmatpush1.msra.mxu0 0.0
      %1974 = vmatprep.subr.mxu0 0.0
      %1975 = vmatpush1.msra.mxu0 0.0
      %1976 = vmatprep.subr.mxu0 0.0
      %1977 = vmatpush1.msra.mxu0 0.0
      %1978 = vmatprep.subr.mxu0 0.0
      %1979 = vmatpush1.msra.mxu0 0.0
      %1980 = vmatprep.subr.mxu0 0.0
      %1981 = vmatpush1.msra.mxu0 0.0
      %1982 = vmatprep.subr.mxu0 0.0
      %1983 = vmatpush1.msra.mxu0 0.0
      %1984 = vmatprep.subr.mxu0 0.0
      %1985 = vmatpush1.msra.mxu0 0.0
      %1986 = vmatprep.subr.mxu0 0.0
      %1987 = vmatpush1.msra.mxu0 0.0
      %1988 = vmatprep.subr.mxu0 0.0
      %1989 = vmatpush1.msra.mxu0 0.0
      %1990 = vmatprep.subr.mxu0 0.0
      %1991 = vmatpush1.msra.mxu0 0.0
      %1992 = vmatprep.subr.mxu0 0.0
      %1993 = vmatpush1.msra.mxu0 0.0
      %1994 = vmatprep.subr.mxu0 0.0
      %1995 = vmatpush1.msra.mxu0 0.0
      %1996 = vmatprep.subr.mxu0 0.0
      %1997 = vmatpush1.msra.mxu0 0.0
      %1998 = vmatprep.subr.mxu0 0.0
      %1999 = vmatpush1.msra.mxu0 0.0
      %2000 = vmatprep.subr.mxu0 0.0
      %2001 = vmatpush1.msra.mxu0 0.0
      %2002 = vmatprep.subr.mxu0 0.0
      %2003 = vmatpush1.msra.mxu0 0.0
      %2004 = vmatprep.subr.mxu0 0.0
      %2005 = vmatpush1.msra.mxu0 0.0
      %2006 = vmatprep.subr.mxu0 0.0
      %2007 = vmatpush1.msra.mxu0 0.0
      %2008 = vmatprep.subr.mxu0 0.0
      %2009 = vmatpush1.msra.mxu0 0.0
      %2010 = vmatprep.subr.mxu0 0.0
      %2011 = vmatpush1.msra.mxu0 0.0
      %2012 = vmatprep.subr.mxu0 0.0
      %2013 = vmatpush1.msra.mxu0 0.0
      %2014 = vmatprep.subr.mxu0 0.0
      %2015 = vmatpush1.msra.mxu0 0.0
      %2016 = vmatprep.subr.mxu0 0.0
      %2017 = vmatpush1.msra.mxu0 0.0
      %2018 = vmatprep.subr.mxu0 0.0
      %2019 = vmatpush1.msra.mxu0 0.0
      %2020 = vmatprep.subr.mxu0 0.0
      %2021 = vmatpush1.msra.mxu0 0.0
      %2022 = vmatprep.subr.mxu0 0.0
      %2023 = vmatpush1.msra.mxu0 0.0
      %2024 = vmatprep.mubr.f32.mxu0 0.0
      %2025 = vmatmul.mubr.f32.gmra.mrb[0].mxu0 %v1934
      %v2026 = vpop.f32.mrb[0].mxu0
      %v2027 = vadd.f32 0.0, %v2026
      %v2028 = vpop.f32.mrb[0].mxu0
      %2029 = vmatprep.mubr.f32.mxu0 0.0
      %2030 = vmatmul.mubr.f32.gmra.mrb[0].mxu0 %v1937
      %v2031 = vpop.f32.mrb[0].mxu0
      %v2032 = vadd.f32 0.0, %v2031
      %v2033 = vpop.f32.mrb[0].mxu0
      %2034 = vmatprep.mubr.f32.mxu0 0.0
      %2035 = vmatmul.mubr.f32.gmra.mrb[0].mxu0 %v1940
      %v2036 = vpop.f32.mrb[0].mxu0
      %v2037 = vadd.f32 0.0, %v2036
      %v2038 = vpop.f32.mrb[0].mxu0
      %2039 = vmatprep.mubr.f32.mxu0 0.0
      %2040 = vmatmul.mubr.f32.gmra.mrb[0].mxu0 %v1943
      %v2041 = vpop.f32.mrb[0].mxu0
      %v2042 = vadd.f32 0.0, %v2041
      %v2043 = vpop.f32.mrb[0].mxu0
      %2044 = vmatprep.mubr.f32.mxu0 0.0
      %2045 = vmatmul.mubr.f32.gmra.mrb[0].mxu0 %v1946
      %v2046 = vpop.f32.mrb[0].mxu0
      %v2047 = vadd.f32 0.0, %v2046
      %v2048 = vpop.f32.mrb[0].mxu0
      %2049 = vmatprep.mubr.f32.mxu0 0.0
      %2050 = vmatmul.mubr.f32.gmra.mrb[0].mxu0 %v1949
      %v2051 = vpop.f32.mrb[0].mxu0
      %v2052 = vadd.f32 0.0, %v2051
      %v2053 = vpop.f32.mrb[0].mxu0
      %2054 = vmatprep.mubr.f32.mxu0 0.0
      %2055 = vmatmul.mubr.f32.gmra.mrb[0].mxu0 %v1952
      %v2056 = vpop.f32.mrb[0].mxu0
      %v2057 = vadd.f32 0.0, %v2056
      %v2058 = vpop.f32.mrb[0].mxu0
      %2059 = vmatprep.mubr.f32.mxu0 0.0
      %2060 = vmatmul.mubr.f32.gmra.mrb[0].mxu0 %v1955
      %v2061 = vpop.f32.mrb[0].mxu0
      %v2062 = vadd.f32 0.0, %v2061
      %v2063 = vpop.f32.mrb[0].mxu0
      %2064 = vdwg.mxu0
      %v2065 = vadd.f32 %v1915, %v2027
      %v2066 = vadd.f32 %v1916, %v2032
      %v2067 = vadd.f32 %v1917, %v2037
      %v2068 = vadd.f32 %v1918, %v2042
      %v2069 = vadd.f32 %v1919, %v2047
      %v2070 = vadd.f32 %v1920, %v2052
      %v2071 = vadd.f32 %v1921, %v2057
      %v2072 = vadd.f32 %v1922, %v2062
      %s2073 = sadd.s32 16, %s1621
      %s2074 = scalar_lea.vmem %s262, %s2073
      %v2075 = vld [vmem:[%s2074] sm:$0xff]
      %v2076 = vld [vmem:[%s2074 + $0x10] sm:$0xff]
      %v2077 = vld [vmem:[%s2074 + $0x20] sm:$0xff]
      %v2078 = vld [vmem:[%s2074 + $0x30] sm:$0xff]
      %v2079 = vld [vmem:[%s2074 + $0x40] sm:$0xff]
      %v2080 = vld [vmem:[%s2074 + $0x50] sm:$0xff]
      %v2081 = vld [vmem:[%s2074 + $0x60] sm:$0xff]
      %v2082 = vld [vmem:[%s2074 + $0x70] sm:$0xff]
      %s2083 = scalar_lea.vmem %s1, 48
      %v2084 = vld [vmem:[%s2083] sm:$0xf]
      %v2086 = vsel %vm300, %v2075, 0
      %v2089 = vsel %vm300, %v2076, 0
      %v2092 = vsel %vm300, %v2077, 0
      %v2095 = vsel %vm300, %v2078, 0
      %v2098 = vsel %vm300, %v2079, 0
      %v2101 = vsel %vm300, %v2080, 0
      %v2104 = vsel %vm300, %v2081, 0
      %v2107 = vsel %vm300, %v2082, 0
      %v2110 = vsel %vm325, %v2084, 0
      %2112 = vmatprep.subr.mxu0 0.0
      %2113 = vmatpush1.msra.mxu0 %v2110
      %2114 = vmatprep.subr.mxu0 0.0
      %2115 = vmatpush1.msra.mxu0 0.0
      %2116 = vmatprep.subr.mxu0 0.0
      %2117 = vmatpush1.msra.mxu0 0.0
      %2118 = vmatprep.subr.mxu0 0.0
      %2119 = vmatpush1.msra.mxu0 0.0
      %2120 = vmatprep.subr.mxu0 0.0
      %2121 = vmatpush1.msra.mxu0 0.0
      %2122 = vmatprep.subr.mxu0 0.0
      %2123 = vmatpush1.msra.mxu0 0.0
      %2124 = vmatprep.subr.mxu0 0.0
      %2125 = vmatpush1.msra.mxu0 0.0
      %2126 = vmatprep.subr.mxu0 0.0
      %2127 = vmatpush1.msra.mxu0 0.0
      %2128 = vmatprep.subr.mxu0 0.0
      %2129 = vmatpush1.msra.mxu0 0.0
      %2130 = vmatprep.subr.mxu0 0.0
      %2131 = vmatpush1.msra.mxu0 0.0
      %2132 = vmatprep.subr.mxu0 0.0
      %2133 = vmatpush1.msra.mxu0 0.0
      %2134 = vmatprep.subr.mxu0 0.0
      %2135 = vmatpush1.msra.mxu0 0.0
      %2136 = vmatprep.subr.mxu0 0.0
      %2137 = vmatpush1.msra.mxu0 0.0
      %2138 = vmatprep.subr.mxu0 0.0
      %2139 = vmatpush1.msra.mxu0 0.0
      %2140 = vmatprep.subr.mxu0 0.0
      %2141 = vmatpush1.msra.mxu0 0.0
      %2142 = vmatprep.subr.mxu0 0.0
      %2143 = vmatpush1.msra.mxu0 0.0
      %2144 = vmatprep.subr.mxu0 0.0
      %2145 = vmatpush1.msra.mxu0 0.0
      %2146 = vmatprep.subr.mxu0 0.0
      %2147 = vmatpush1.msra.mxu0 0.0
      %2148 = vmatprep.subr.mxu0 0.0
      %2149 = vmatpush1.msra.mxu0 0.0
      %2150 = vmatprep.subr.mxu0 0.0
      %2151 = vmatpush1.msra.mxu0 0.0
      %2152 = vmatprep.subr.mxu0 0.0
      %2153 = vmatpush1.msra.mxu0 0.0
      %2154 = vmatprep.subr.mxu0 0.0
      %2155 = vmatpush1.msra.mxu0 0.0
      %2156 = vmatprep.subr.mxu0 0.0
      %2157 = vmatpush1.msra.mxu0 0.0
      %2158 = vmatprep.subr.mxu0 0.0
      %2159 = vmatpush1.msra.mxu0 0.0
      %2160 = vmatprep.subr.mxu0 0.0
      %2161 = vmatpush1.msra.mxu0 0.0
      %2162 = vmatprep.subr.mxu0 0.0
      %2163 = vmatpush1.msra.mxu0 0.0
      %2164 = vmatprep.subr.mxu0 0.0
      %2165 = vmatpush1.msra.mxu0 0.0
      %2166 = vmatprep.subr.mxu0 0.0
      %2167 = vmatpush1.msra.mxu0 0.0
      %2168 = vmatprep.subr.mxu0 0.0
      %2169 = vmatpush1.msra.mxu0 0.0
      %2170 = vmatprep.subr.mxu0 0.0
      %2171 = vmatpush1.msra.mxu0 0.0
      %2172 = vmatprep.subr.mxu0 0.0
      %2173 = vmatpush1.msra.mxu0 0.0
      %2174 = vmatprep.subr.mxu0 0.0
      %2175 = vmatpush1.msra.mxu0 0.0
      %2176 = vmatprep.mubr.f32.mxu0 0.0
      %2177 = vmatmul.mubr.f32.gmra.mrb[0].mxu0 %v2086
      %v2178 = vpop.f32.mrb[0].mxu0
      %v2179 = vadd.f32 0.0, %v2178
      %v2180 = vpop.f32.mrb[0].mxu0
      %2181 = vmatprep.mubr.f32.mxu0 0.0
      %2182 = vmatmul.mubr.f32.gmra.mrb[0].mxu0 %v2089
      %v2183 = vpop.f32.mrb[0].mxu0
      %v2184 = vadd.f32 0.0, %v2183
      %v2185 = vpop.f32.mrb[0].mxu0
      %2186 = vmatprep.mubr.f32.mxu0 0.0
      %2187 = vmatmul.mubr.f32.gmra.mrb[0].mxu0 %v2092
      %v2188 = vpop.f32.mrb[0].mxu0
      %v2189 = vadd.f32 0.0, %v2188
      %v2190 = vpop.f32.mrb[0].mxu0
      %2191 = vmatprep.mubr.f32.mxu0 0.0
      %2192 = vmatmul.mubr.f32.gmra.mrb[0].mxu0 %v2095
      %v2193 = vpop.f32.mrb[0].mxu0
      %v2194 = vadd.f32 0.0, %v2193
      %v2195 = vpop.f32.mrb[0].mxu0
      %2196 = vmatprep.mubr.f32.mxu0 0.0
      %2197 = vmatmul.mubr.f32.gmra.mrb[0].mxu0 %v2098
      %v2198 = vpop.f32.mrb[0].mxu0
      %v2199 = vadd.f32 0.0, %v2198
      %v2200 = vpop.f32.mrb[0].mxu0
      %2201 = vmatprep.mubr.f32.mxu0 0.0
      %2202 = vmatmul.mubr.f32.gmra.mrb[0].mxu0 %v2101
      %v2203 = vpop.f32.mrb[0].mxu0
      %v2204 = vadd.f32 0.0, %v2203
      %v2205 = vpop.f32.mrb[0].mxu0
      %2206 = vmatprep.mubr.f32.mxu0 0.0
      %2207 = vmatmul.mubr.f32.gmra.mrb[0].mxu0 %v2104
      %v2208 = vpop.f32.mrb[0].mxu0
      %v2209 = vadd.f32 0.0, %v2208
      %v2210 = vpop.f32.mrb[0].mxu0
      %2211 = vmatprep.mubr.f32.mxu0 0.0
      %2212 = vmatmul.mubr.f32.gmra.mrb[0].mxu0 %v2107
      %v2213 = vpop.f32.mrb[0].mxu0
      %v2214 = vadd.f32 0.0, %v2213
      %v2215 = vpop.f32.mrb[0].mxu0
      %2216 = vdwg.mxu0
      %v2217 = vadd.f32 %v2065, %v2179
      %v2218 = vadd.f32 %v2066, %v2184
      %v2219 = vadd.f32 %v2067, %v2189
      %v2220 = vadd.f32 %v2068, %v2194
      %v2221 = vadd.f32 %v2069, %v2199
      %v2222 = vadd.f32 %v2070, %v2204
      %v2223 = vadd.f32 %v2071, %v2209
      %v2224 = vadd.f32 %v2072, %v2214
      %v2225 = vld [vmem:[%s2074 + $0x1] sm:$0xff]
      %v2226 = vld [vmem:[%s2074 + $0x11] sm:$0xff]
      %v2227 = vld [vmem:[%s2074 + $0x21] sm:$0xff]
      %v2228 = vld [vmem:[%s2074 + $0x31] sm:$0xff]
      %v2229 = vld [vmem:[%s2074 + $0x41] sm:$0xff]
      %v2230 = vld [vmem:[%s2074 + $0x51] sm:$0xff]
      %v2231 = vld [vmem:[%s2074 + $0x61] sm:$0xff]
      %v2232 = vld [vmem:[%s2074 + $0x71] sm:$0xff]
      %s2233 = scalar_lea.vmem %s1, 52
      %v2234 = vld [vmem:[%s2233] sm:$0xf]
      %v2236 = vsel %vm300, %v2225, 0
      %v2239 = vsel %vm300, %v2226, 0
      %v2242 = vsel %vm300, %v2227, 0
      %v2245 = vsel %vm300, %v2228, 0
      %v2248 = vsel %vm300, %v2229, 0
      %v2251 = vsel %vm300, %v2230, 0
      %v2254 = vsel %vm300, %v2231, 0
      %v2257 = vsel %vm300, %v2232, 0
      %v2260 = vsel %vm325, %v2234, 0
      %2262 = vmatprep.subr.mxu0 0.0
      %2263 = vmatpush1.msra.mxu0 %v2260
      %2264 = vmatprep.subr.mxu0 0.0
      %2265 = vmatpush1.msra.mxu0 0.0
      %2266 = vmatprep.subr.mxu0 0.0
      %2267 = vmatpush1.msra.mxu0 0.0
      %2268 = vmatprep.subr.mxu0 0.0
      %2269 = vmatpush1.msra.mxu0 0.0
      %2270 = vmatprep.subr.mxu0 0.0
      %2271 = vmatpush1.msra.mxu0 0.0
      %2272 = vmatprep.subr.mxu0 0.0
      %2273 = vmatpush1.msra.mxu0 0.0
      %2274 = vmatprep.subr.mxu0 0.0
      %2275 = vmatpush1.msra.mxu0 0.0
      %2276 = vmatprep.subr.mxu0 0.0
      %2277 = vmatpush1.msra.mxu0 0.0
      %2278 = vmatprep.subr.mxu0 0.0
      %2279 = vmatpush1.msra.mxu0 0.0
      %2280 = vmatprep.subr.mxu0 0.0
      %2281 = vmatpush1.msra.mxu0 0.0
      %2282 = vmatprep.subr.mxu0 0.0
      %2283 = vmatpush1.msra.mxu0 0.0
      %2284 = vmatprep.subr.mxu0 0.0
      %2285 = vmatpush1.msra.mxu0 0.0
      %2286 = vmatprep.subr.mxu0 0.0
      %2287 = vmatpush1.msra.mxu0 0.0
      %2288 = vmatprep.subr.mxu0 0.0
      %2289 = vmatpush1.msra.mxu0 0.0
      %2290 = vmatprep.subr.mxu0 0.0
      %2291 = vmatpush1.msra.mxu0 0.0
      %2292 = vmatprep.subr.mxu0 0.0
      %2293 = vmatpush1.msra.mxu0 0.0
      %2294 = vmatprep.subr.mxu0 0.0
      %2295 = vmatpush1.msra.mxu0 0.0
      %2296 = vmatprep.subr.mxu0 0.0
      %2297 = vmatpush1.msra.mxu0 0.0
      %2298 = vmatprep.subr.mxu0 0.0
      %2299 = vmatpush1.msra.mxu0 0.0
      %2300 = vmatprep.subr.mxu0 0.0
      %2301 = vmatpush1.msra.mxu0 0.0
      %2302 = vmatprep.subr.mxu0 0.0
      %2303 = vmatpush1.msra.mxu0 0.0
      %2304 = vmatprep.subr.mxu0 0.0
      %2305 = vmatpush1.msra.mxu0 0.0
      %2306 = vmatprep.subr.mxu0 0.0
      %2307 = vmatpush1.msra.mxu0 0.0
      %2308 = vmatprep.subr.mxu0 0.0
      %2309 = vmatpush1.msra.mxu0 0.0
      %2310 = vmatprep.subr.mxu0 0.0
      %2311 = vmatpush1.msra.mxu0 0.0
      %2312 = vmatprep.subr.mxu0 0.0
      %2313 = vmatpush1.msra.mxu0 0.0
      %2314 = vmatprep.subr.mxu0 0.0
      %2315 = vmatpush1.msra.mxu0 0.0
      %2316 = vmatprep.subr.mxu0 0.0
      %2317 = vmatpush1.msra.mxu0 0.0
      %2318 = vmatprep.subr.mxu0 0.0
      %2319 = vmatpush1.msra.mxu0 0.0
      %2320 = vmatprep.subr.mxu0 0.0
      %2321 = vmatpush1.msra.mxu0 0.0
      %2322 = vmatprep.subr.mxu0 0.0
      %2323 = vmatpush1.msra.mxu0 0.0
      %2324 = vmatprep.subr.mxu0 0.0
      %2325 = vmatpush1.msra.mxu0 0.0
      %2326 = vmatprep.mubr.f32.mxu0 0.0
      %2327 = vmatmul.mubr.f32.gmra.mrb[0].mxu0 %v2236
      %v2328 = vpop.f32.mrb[0].mxu0
      %v2329 = vadd.f32 0.0, %v2328
      %v2330 = vpop.f32.mrb[0].mxu0
      %2331 = vmatprep.mubr.f32.mxu0 0.0
      %2332 = vmatmul.mubr.f32.gmra.mrb[0].mxu0 %v2239
      %v2333 = vpop.f32.mrb[0].mxu0
      %v2334 = vadd.f32 0.0, %v2333
      %v2335 = vpop.f32.mrb[0].mxu0
      %2336 = vmatprep.mubr.f32.mxu0 0.0
      %2337 = vmatmul.mubr.f32.gmra.mrb[0].mxu0 %v2242
      %v2338 = vpop.f32.mrb[0].mxu0
      %v2339 = vadd.f32 0.0, %v2338
      %v2340 = vpop.f32.mrb[0].mxu0
      %2341 = vmatprep.mubr.f32.mxu0 0.0
      %2342 = vmatmul.mubr.f32.gmra.mrb[0].mxu0 %v2245
      %v2343 = vpop.f32.mrb[0].mxu0
      %v2344 = vadd.f32 0.0, %v2343
      %v2345 = vpop.f32.mrb[0].mxu0
      %2346 = vmatprep.mubr.f32.mxu0 0.0
      %2347 = vmatmul.mubr.f32.gmra.mrb[0].mxu0 %v2248
      %v2348 = vpop.f32.mrb[0].mxu0
      %v2349 = vadd.f32 0.0, %v2348
      %v2350 = vpop.f32.mrb[0].mxu0
      %2351 = vmatprep.mubr.f32.mxu0 0.0
      %2352 = vmatmul.mubr.f32.gmra.mrb[0].mxu0 %v2251
      %v2353 = vpop.f32.mrb[0].mxu0
      %v2354 = vadd.f32 0.0, %v2353
      %v2355 = vpop.f32.mrb[0].mxu0
      %2356 = vmatprep.mubr.f32.mxu0 0.0
      %2357 = vmatmul.mubr.f32.gmra.mrb[0].mxu0 %v2254
      %v2358 = vpop.f32.mrb[0].mxu0
      %v2359 = vadd.f32 0.0, %v2358
      %v2360 = vpop.f32.mrb[0].mxu0
      %2361 = vmatprep.mubr.f32.mxu0 0.0
      %2362 = vmatmul.mubr.f32.gmra.mrb[0].mxu0 %v2257
      %v2363 = vpop.f32.mrb[0].mxu0
      %v2364 = vadd.f32 0.0, %v2363
      %v2365 = vpop.f32.mrb[0].mxu0
      %2366 = vdwg.mxu0
      %v2367 = vadd.f32 %v2217, %v2329
      %v2368 = vadd.f32 %v2218, %v2334
      %v2369 = vadd.f32 %v2219, %v2339
      %v2370 = vadd.f32 %v2220, %v2344
      %v2371 = vadd.f32 %v2221, %v2349
      %v2372 = vadd.f32 %v2222, %v2354
      %v2373 = vadd.f32 %v2223, %v2359
      %v2374 = vadd.f32 %v2224, %v2364
      %v2375 = vld [vmem:[%s2074 + $0x2] sm:$0xff]
      %v2376 = vld [vmem:[%s2074 + $0x12] sm:$0xff]
      %v2377 = vld [vmem:[%s2074 + $0x22] sm:$0xff]
      %v2378 = vld [vmem:[%s2074 + $0x32] sm:$0xff]
      %v2379 = vld [vmem:[%s2074 + $0x42] sm:$0xff]
      %v2380 = vld [vmem:[%s2074 + $0x52] sm:$0xff]
      %v2381 = vld [vmem:[%s2074 + $0x62] sm:$0xff]
      %v2382 = vld [vmem:[%s2074 + $0x72] sm:$0xff]
      %s2383 = scalar_lea.vmem %s1, 56
      %v2384 = vld [vmem:[%s2383] sm:$0xf]
      %v2386 = vsel %vm300, %v2375, 0
      %v2389 = vsel %vm300, %v2376, 0
      %v2392 = vsel %vm300, %v2377, 0
      %v2395 = vsel %vm300, %v2378, 0
      %v2398 = vsel %vm300, %v2379, 0
      %v2401 = vsel %vm300, %v2380, 0
      %v2404 = vsel %vm300, %v2381, 0
      %v2407 = vsel %vm300, %v2382, 0
      %v2410 = vsel %vm325, %v2384, 0
      %2412 = vmatprep.subr.mxu0 0.0
      %2413 = vmatpush1.msra.mxu0 %v2410
      %2414 = vmatprep.subr.mxu0 0.0
      %2415 = vmatpush1.msra.mxu0 0.0
      %2416 = vmatprep.subr.mxu0 0.0
      %2417 = vmatpush1.msra.mxu0 0.0
      %2418 = vmatprep.subr.mxu0 0.0
      %2419 = vmatpush1.msra.mxu0 0.0
      %2420 = vmatprep.subr.mxu0 0.0
      %2421 = vmatpush1.msra.mxu0 0.0
      %2422 = vmatprep.subr.mxu0 0.0
      %2423 = vmatpush1.msra.mxu0 0.0
      %2424 = vmatprep.subr.mxu0 0.0
      %2425 = vmatpush1.msra.mxu0 0.0
      %2426 = vmatprep.subr.mxu0 0.0
      %2427 = vmatpush1.msra.mxu0 0.0
      %2428 = vmatprep.subr.mxu0 0.0
      %2429 = vmatpush1.msra.mxu0 0.0
      %2430 = vmatprep.subr.mxu0 0.0
      %2431 = vmatpush1.msra.mxu0 0.0
      %2432 = vmatprep.subr.mxu0 0.0
      %2433 = vmatpush1.msra.mxu0 0.0
      %2434 = vmatprep.subr.mxu0 0.0
      %2435 = vmatpush1.msra.mxu0 0.0
      %2436 = vmatprep.subr.mxu0 0.0
      %2437 = vmatpush1.msra.mxu0 0.0
      %2438 = vmatprep.subr.mxu0 0.0
      %2439 = vmatpush1.msra.mxu0 0.0
      %2440 = vmatprep.subr.mxu0 0.0
      %2441 = vmatpush1.msra.mxu0 0.0
      %2442 = vmatprep.subr.mxu0 0.0
      %2443 = vmatpush1.msra.mxu0 0.0
      %2444 = vmatprep.subr.mxu0 0.0
      %2445 = vmatpush1.msra.mxu0 0.0
      %2446 = vmatprep.subr.mxu0 0.0
      %2447 = vmatpush1.msra.mxu0 0.0
      %2448 = vmatprep.subr.mxu0 0.0
      %2449 = vmatpush1.msra.mxu0 0.0
      %2450 = vmatprep.subr.mxu0 0.0
      %2451 = vmatpush1.msra.mxu0 0.0
      %2452 = vmatprep.subr.mxu0 0.0
      %2453 = vmatpush1.msra.mxu0 0.0
      %2454 = vmatprep.subr.mxu0 0.0
      %2455 = vmatpush1.msra.mxu0 0.0
      %2456 = vmatprep.subr.mxu0 0.0
      %2457 = vmatpush1.msra.mxu0 0.0
      %2458 = vmatprep.subr.mxu0 0.0
      %2459 = vmatpush1.msra.mxu0 0.0
      %2460 = vmatprep.subr.mxu0 0.0
      %2461 = vmatpush1.msra.mxu0 0.0
      %2462 = vmatprep.subr.mxu0 0.0
      %2463 = vmatpush1.msra.mxu0 0.0
      %2464 = vmatprep.subr.mxu0 0.0
      %2465 = vmatpush1.msra.mxu0 0.0
      %2466 = vmatprep.subr.mxu0 0.0
      %2467 = vmatpush1.msra.mxu0 0.0
      %2468 = vmatprep.subr.mxu0 0.0
      %2469 = vmatpush1.msra.mxu0 0.0
      %2470 = vmatprep.subr.mxu0 0.0
      %2471 = vmatpush1.msra.mxu0 0.0
      %2472 = vmatprep.subr.mxu0 0.0
      %2473 = vmatpush1.msra.mxu0 0.0
      %2474 = vmatprep.subr.mxu0 0.0
      %2475 = vmatpush1.msra.mxu0 0.0
      %2476 = vmatprep.mubr.f32.mxu0 0.0
      %2477 = vmatmul.mubr.f32.gmra.mrb[0].mxu0 %v2386
      %v2478 = vpop.f32.mrb[0].mxu0
      %v2479 = vadd.f32 0.0, %v2478
      %v2480 = vpop.f32.mrb[0].mxu0
      %2481 = vmatprep.mubr.f32.mxu0 0.0
      %2482 = vmatmul.mubr.f32.gmra.mrb[0].mxu0 %v2389
      %v2483 = vpop.f32.mrb[0].mxu0
      %v2484 = vadd.f32 0.0, %v2483
      %v2485 = vpop.f32.mrb[0].mxu0
      %2486 = vmatprep.mubr.f32.mxu0 0.0
      %2487 = vmatmul.mubr.f32.gmra.mrb[0].mxu0 %v2392
      %v2488 = vpop.f32.mrb[0].mxu0
      %v2489 = vadd.f32 0.0, %v2488
      %v2490 = vpop.f32.mrb[0].mxu0
      %2491 = vmatprep.mubr.f32.mxu0 0.0
      %2492 = vmatmul.mubr.f32.gmra.mrb[0].mxu0 %v2395
      %v2493 = vpop.f32.mrb[0].mxu0
      %v2494 = vadd.f32 0.0, %v2493
      %v2495 = vpop.f32.mrb[0].mxu0
      %2496 = vmatprep.mubr.f32.mxu0 0.0
      %2497 = vmatmul.mubr.f32.gmra.mrb[0].mxu0 %v2398
      %v2498 = vpop.f32.mrb[0].mxu0
      %v2499 = vadd.f32 0.0, %v2498
      %v2500 = vpop.f32.mrb[0].mxu0
      %2501 = vmatprep.mubr.f32.mxu0 0.0
      %2502 = vmatmul.mubr.f32.gmra.mrb[0].mxu0 %v2401
      %v2503 = vpop.f32.mrb[0].mxu0
      %v2504 = vadd.f32 0.0, %v2503
      %v2505 = vpop.f32.mrb[0].mxu0
      %2506 = vmatprep.mubr.f32.mxu0 0.0
      %2507 = vmatmul.mubr.f32.gmra.mrb[0].mxu0 %v2404
      %v2508 = vpop.f32.mrb[0].mxu0
      %v2509 = vadd.f32 0.0, %v2508
      %v2510 = vpop.f32.mrb[0].mxu0
      %2511 = vmatprep.mubr.f32.mxu0 0.0
      %2512 = vmatmul.mubr.f32.gmra.mrb[0].mxu0 %v2407
      %v2513 = vpop.f32.mrb[0].mxu0
      %v2514 = vadd.f32 0.0, %v2513
      %v2515 = vpop.f32.mrb[0].mxu0
      %2516 = vdwg.mxu0
      %v2517 = vadd.f32 %v2367, %v2479
      %v2518 = vadd.f32 %v2368, %v2484
      %v2519 = vadd.f32 %v2369, %v2489
      %v2520 = vadd.f32 %v2370, %v2494
      %v2521 = vadd.f32 %v2371, %v2499
      %v2522 = vadd.f32 %v2372, %v2504
      %v2523 = vadd.f32 %v2373, %v2509
      %v2524 = vadd.f32 %v2374, %v2514
      %s2525 = sadd.s32 32, %s1621
      %s2526 = scalar_lea.vmem %s262, %s2525
      %v2527 = vld [vmem:[%s2526] sm:$0xff]
      %v2528 = vld [vmem:[%s2526 + $0x10] sm:$0xff]
      %v2529 = vld [vmem:[%s2526 + $0x20] sm:$0xff]
      %v2530 = vld [vmem:[%s2526 + $0x30] sm:$0xff]
      %v2531 = vld [vmem:[%s2526 + $0x40] sm:$0xff]
      %v2532 = vld [vmem:[%s2526 + $0x50] sm:$0xff]
      %v2533 = vld [vmem:[%s2526 + $0x60] sm:$0xff]
      %v2534 = vld [vmem:[%s2526 + $0x70] sm:$0xff]
      %s2535 = scalar_lea.vmem %s1, 60
      %v2536 = vld [vmem:[%s2535] sm:$0xf]
      %v2538 = vsel %vm300, %v2527, 0
      %v2541 = vsel %vm300, %v2528, 0
      %v2544 = vsel %vm300, %v2529, 0
      %v2547 = vsel %vm300, %v2530, 0
      %v2550 = vsel %vm300, %v2531, 0
      %v2553 = vsel %vm300, %v2532, 0
      %v2556 = vsel %vm300, %v2533, 0
      %v2559 = vsel %vm300, %v2534, 0
      %v2562 = vsel %vm325, %v2536, 0
      %2564 = vmatprep.subr.mxu0 0.0
      %2565 = vmatpush1.msra.mxu0 %v2562
      %2566 = vmatprep.subr.mxu0 0.0
      %2567 = vmatpush1.msra.mxu0 0.0
      %2568 = vmatprep.subr.mxu0 0.0
      %2569 = vmatpush1.msra.mxu0 0.0
      %2570 = vmatprep.subr.mxu0 0.0
      %2571 = vmatpush1.msra.mxu0 0.0
      %2572 = vmatprep.subr.mxu0 0.0
      %2573 = vmatpush1.msra.mxu0 0.0
      %2574 = vmatprep.subr.mxu0 0.0
      %2575 = vmatpush1.msra.mxu0 0.0
      %2576 = vmatprep.subr.mxu0 0.0
      %2577 = vmatpush1.msra.mxu0 0.0
      %2578 = vmatprep.subr.mxu0 0.0
      %2579 = vmatpush1.msra.mxu0 0.0
      %2580 = vmatprep.subr.mxu0 0.0
      %2581 = vmatpush1.msra.mxu0 0.0
      %2582 = vmatprep.subr.mxu0 0.0
      %2583 = vmatpush1.msra.mxu0 0.0
      %2584 = vmatprep.subr.mxu0 0.0
      %2585 = vmatpush1.msra.mxu0 0.0
      %2586 = vmatprep.subr.mxu0 0.0
      %2587 = vmatpush1.msra.mxu0 0.0
      %2588 = vmatprep.subr.mxu0 0.0
      %2589 = vmatpush1.msra.mxu0 0.0
      %2590 = vmatprep.subr.mxu0 0.0
      %2591 = vmatpush1.msra.mxu0 0.0
      %2592 = vmatprep.subr.mxu0 0.0
      %2593 = vmatpush1.msra.mxu0 0.0
      %2594 = vmatprep.subr.mxu0 0.0
      %2595 = vmatpush1.msra.mxu0 0.0
      %2596 = vmatprep.subr.mxu0 0.0
      %2597 = vmatpush1.msra.mxu0 0.0
      %2598 = vmatprep.subr.mxu0 0.0
      %2599 = vmatpush1.msra.mxu0 0.0
      %2600 = vmatprep.subr.mxu0 0.0
      %2601 = vmatpush1.msra.mxu0 0.0
      %2602 = vmatprep.subr.mxu0 0.0
      %2603 = vmatpush1.msra.mxu0 0.0
      %2604 = vmatprep.subr.mxu0 0.0
      %2605 = vmatpush1.msra.mxu0 0.0
      %2606 = vmatprep.subr.mxu0 0.0
      %2607 = vmatpush1.msra.mxu0 0.0
      %2608 = vmatprep.subr.mxu0 0.0
      %2609 = vmatpush1.msra.mxu0 0.0
      %2610 = vmatprep.subr.mxu0 0.0
      %2611 = vmatpush1.msra.mxu0 0.0
      %2612 = vmatprep.subr.mxu0 0.0
      %2613 = vmatpush1.msra.mxu0 0.0
      %2614 = vmatprep.subr.mxu0 0.0
      %2615 = vmatpush1.msra.mxu0 0.0
      %2616 = vmatprep.subr.mxu0 0.0
      %2617 = vmatpush1.msra.mxu0 0.0
      %2618 = vmatprep.subr.mxu0 0.0
      %2619 = vmatpush1.msra.mxu0 0.0
      %2620 = vmatprep.subr.mxu0 0.0
      %2621 = vmatpush1.msra.mxu0 0.0
      %2622 = vmatprep.subr.mxu0 0.0
      %2623 = vmatpush1.msra.mxu0 0.0
      %2624 = vmatprep.subr.mxu0 0.0
      %2625 = vmatpush1.msra.mxu0 0.0
      %2626 = vmatprep.subr.mxu0 0.0
      %2627 = vmatpush1.msra.mxu0 0.0
      %2628 = vmatprep.mubr.f32.mxu0 0.0
      %2629 = vmatmul.mubr.f32.gmra.mrb[0].mxu0 %v2538
      %v2630 = vpop.f32.mrb[0].mxu0
      %v2631 = vadd.f32 0.0, %v2630
      %v2632 = vpop.f32.mrb[0].mxu0
      %2633 = vmatprep.mubr.f32.mxu0 0.0
      %2634 = vmatmul.mubr.f32.gmra.mrb[0].mxu0 %v2541
      %v2635 = vpop.f32.mrb[0].mxu0
      %v2636 = vadd.f32 0.0, %v2635
      %v2637 = vpop.f32.mrb[0].mxu0
      %2638 = vmatprep.mubr.f32.mxu0 0.0
      %2639 = vmatmul.mubr.f32.gmra.mrb[0].mxu0 %v2544
      %v2640 = vpop.f32.mrb[0].mxu0
      %v2641 = vadd.f32 0.0, %v2640
      %v2642 = vpop.f32.mrb[0].mxu0
      %2643 = vmatprep.mubr.f32.mxu0 0.0
      %2644 = vmatmul.mubr.f32.gmra.mrb[0].mxu0 %v2547
      %v2645 = vpop.f32.mrb[0].mxu0
      %v2646 = vadd.f32 0.0, %v2645
      %v2647 = vpop.f32.mrb[0].mxu0
      %2648 = vmatprep.mubr.f32.mxu0 0.0
      %2649 = vmatmul.mubr.f32.gmra.mrb[0].mxu0 %v2550
      %v2650 = vpop.f32.mrb[0].mxu0
      %v2651 = vadd.f32 0.0, %v2650
      %v2652 = vpop.f32.mrb[0].mxu0
      %2653 = vmatprep.mubr.f32.mxu0 0.0
      %2654 = vmatmul.mubr.f32.gmra.mrb[0].mxu0 %v2553
      %v2655 = vpop.f32.mrb[0].mxu0
      %v2656 = vadd.f32 0.0, %v2655
      %v2657 = vpop.f32.mrb[0].mxu0
      %2658 = vmatprep.mubr.f32.mxu0 0.0
      %2659 = vmatmul.mubr.f32.gmra.mrb[0].mxu0 %v2556
      %v2660 = vpop.f32.mrb[0].mxu0
      %v2661 = vadd.f32 0.0, %v2660
      %v2662 = vpop.f32.mrb[0].mxu0
      %2663 = vmatprep.mubr.f32.mxu0 0.0
      %2664 = vmatmul.mubr.f32.gmra.mrb[0].mxu0 %v2559
      %v2665 = vpop.f32.mrb[0].mxu0
      %v2666 = vadd.f32 0.0, %v2665
      %v2667 = vpop.f32.mrb[0].mxu0
      %2668 = vdwg.mxu0
      %v2669 = vadd.f32 %v2517, %v2631
      %v2670 = vadd.f32 %v2518, %v2636
      %v2671 = vadd.f32 %v2519, %v2641
      %v2672 = vadd.f32 %v2520, %v2646
      %v2673 = vadd.f32 %v2521, %v2651
      %v2674 = vadd.f32 %v2522, %v2656
      %v2675 = vadd.f32 %v2523, %v2661
      %v2676 = vadd.f32 %v2524, %v2666
      %v2677 = vld [vmem:[%s2526 + $0x1] sm:$0xff]
      %v2678 = vld [vmem:[%s2526 + $0x11] sm:$0xff]
      %v2679 = vld [vmem:[%s2526 + $0x21] sm:$0xff]
      %v2680 = vld [vmem:[%s2526 + $0x31] sm:$0xff]
      %v2681 = vld [vmem:[%s2526 + $0x41] sm:$0xff]
      %v2682 = vld [vmem:[%s2526 + $0x51] sm:$0xff]
      %v2683 = vld [vmem:[%s2526 + $0x61] sm:$0xff]
      %v2684 = vld [vmem:[%s2526 + $0x71] sm:$0xff]
      %s2685 = scalar_lea.vmem %s1, 64
      %v2686 = vld [vmem:[%s2685] sm:$0xf]
      %v2688 = vsel %vm300, %v2677, 0
      %v2691 = vsel %vm300, %v2678, 0
      %v2694 = vsel %vm300, %v2679, 0
      %v2697 = vsel %vm300, %v2680, 0
      %v2700 = vsel %vm300, %v2681, 0
      %v2703 = vsel %vm300, %v2682, 0
      %v2706 = vsel %vm300, %v2683, 0
      %v2709 = vsel %vm300, %v2684, 0
      %v2712 = vsel %vm325, %v2686, 0
      %2714 = vmatprep.subr.mxu0 0.0
      %2715 = vmatpush1.msra.mxu0 %v2712
      %2716 = vmatprep.subr.mxu0 0.0
      %2717 = vmatpush1.msra.mxu0 0.0
      %2718 = vmatprep.subr.mxu0 0.0
      %2719 = vmatpush1.msra.mxu0 0.0
      %2720 = vmatprep.subr.mxu0 0.0
      %2721 = vmatpush1.msra.mxu0 0.0
      %2722 = vmatprep.subr.mxu0 0.0
      %2723 = vmatpush1.msra.mxu0 0.0
      %2724 = vmatprep.subr.mxu0 0.0
      %2725 = vmatpush1.msra.mxu0 0.0
      %2726 = vmatprep.subr.mxu0 0.0
      %2727 = vmatpush1.msra.mxu0 0.0
      %2728 = vmatprep.subr.mxu0 0.0
      %2729 = vmatpush1.msra.mxu0 0.0
      %2730 = vmatprep.subr.mxu0 0.0
      %2731 = vmatpush1.msra.mxu0 0.0
      %2732 = vmatprep.subr.mxu0 0.0
      %2733 = vmatpush1.msra.mxu0 0.0
      %2734 = vmatprep.subr.mxu0 0.0
      %2735 = vmatpush1.msra.mxu0 0.0
      %2736 = vmatprep.subr.mxu0 0.0
      %2737 = vmatpush1.msra.mxu0 0.0
      %2738 = vmatprep.subr.mxu0 0.0
      %2739 = vmatpush1.msra.mxu0 0.0
      %2740 = vmatprep.subr.mxu0 0.0
      %2741 = vmatpush1.msra.mxu0 0.0
      %2742 = vmatprep.subr.mxu0 0.0
      %2743 = vmatpush1.msra.mxu0 0.0
      %2744 = vmatprep.subr.mxu0 0.0
      %2745 = vmatpush1.msra.mxu0 0.0
      %2746 = vmatprep.subr.mxu0 0.0
      %2747 = vmatpush1.msra.mxu0 0.0
      %2748 = vmatprep.subr.mxu0 0.0
      %2749 = vmatpush1.msra.mxu0 0.0
      %2750 = vmatprep.subr.mxu0 0.0
      %2751 = vmatpush1.msra.mxu0 0.0
      %2752 = vmatprep.subr.mxu0 0.0
      %2753 = vmatpush1.msra.mxu0 0.0
      %2754 = vmatprep.subr.mxu0 0.0
      %2755 = vmatpush1.msra.mxu0 0.0
      %2756 = vmatprep.subr.mxu0 0.0
      %2757 = vmatpush1.msra.mxu0 0.0
      %2758 = vmatprep.subr.mxu0 0.0
      %2759 = vmatpush1.msra.mxu0 0.0
      %2760 = vmatprep.subr.mxu0 0.0
      %2761 = vmatpush1.msra.mxu0 0.0
      %2762 = vmatprep.subr.mxu0 0.0
      %2763 = vmatpush1.msra.mxu0 0.0
      %2764 = vmatprep.subr.mxu0 0.0
      %2765 = vmatpush1.msra.mxu0 0.0
      %2766 = vmatprep.subr.mxu0 0.0
      %2767 = vmatpush1.msra.mxu0 0.0
      %2768 = vmatprep.subr.mxu0 0.0
      %2769 = vmatpush1.msra.mxu0 0.0
      %2770 = vmatprep.subr.mxu0 0.0
      %2771 = vmatpush1.msra.mxu0 0.0
      %2772 = vmatprep.subr.mxu0 0.0
      %2773 = vmatpush1.msra.mxu0 0.0
      %2774 = vmatprep.subr.mxu0 0.0
      %2775 = vmatpush1.msra.mxu0 0.0
      %2776 = vmatprep.subr.mxu0 0.0
      %2777 = vmatpush1.msra.mxu0 0.0
      %2778 = vmatprep.mubr.f32.mxu0 0.0
      %2779 = vmatmul.mubr.f32.gmra.mrb[0].mxu0 %v2688
      %v2780 = vpop.f32.mrb[0].mxu0
      %v2781 = vadd.f32 0.0, %v2780
      %v2782 = vpop.f32.mrb[0].mxu0
      %2783 = vmatprep.mubr.f32.mxu0 0.0
      %2784 = vmatmul.mubr.f32.gmra.mrb[0].mxu0 %v2691
      %v2785 = vpop.f32.mrb[0].mxu0
      %v2786 = vadd.f32 0.0, %v2785
      %v2787 = vpop.f32.mrb[0].mxu0
      %2788 = vmatprep.mubr.f32.mxu0 0.0
      %2789 = vmatmul.mubr.f32.gmra.mrb[0].mxu0 %v2694
      %v2790 = vpop.f32.mrb[0].mxu0
      %v2791 = vadd.f32 0.0, %v2790
      %v2792 = vpop.f32.mrb[0].mxu0
      %2793 = vmatprep.mubr.f32.mxu0 0.0
      %2794 = vmatmul.mubr.f32.gmra.mrb[0].mxu0 %v2697
      %v2795 = vpop.f32.mrb[0].mxu0
      %v2796 = vadd.f32 0.0, %v2795
      %v2797 = vpop.f32.mrb[0].mxu0
      %2798 = vmatprep.mubr.f32.mxu0 0.0
      %2799 = vmatmul.mubr.f32.gmra.mrb[0].mxu0 %v2700
      %v2800 = vpop.f32.mrb[0].mxu0
      %v2801 = vadd.f32 0.0, %v2800
      %v2802 = vpop.f32.mrb[0].mxu0
      %2803 = vmatprep.mubr.f32.mxu0 0.0
      %2804 = vmatmul.mubr.f32.gmra.mrb[0].mxu0 %v2703
      %v2805 = vpop.f32.mrb[0].mxu0
      %v2806 = vadd.f32 0.0, %v2805
      %v2807 = vpop.f32.mrb[0].mxu0
      %2808 = vmatprep.mubr.f32.mxu0 0.0
      %2809 = vmatmul.mubr.f32.gmra.mrb[0].mxu0 %v2706
      %v2810 = vpop.f32.mrb[0].mxu0
      %v2811 = vadd.f32 0.0, %v2810
      %v2812 = vpop.f32.mrb[0].mxu0
      %2813 = vmatprep.mubr.f32.mxu0 0.0
      %2814 = vmatmul.mubr.f32.gmra.mrb[0].mxu0 %v2709
      %v2815 = vpop.f32.mrb[0].mxu0
      %v2816 = vadd.f32 0.0, %v2815
      %v2817 = vpop.f32.mrb[0].mxu0
      %2818 = vdwg.mxu0
      %v2819 = vadd.f32 %v2669, %v2781
      %v2820 = vadd.f32 %v2670, %v2786
      %v2821 = vadd.f32 %v2671, %v2791
      %v2822 = vadd.f32 %v2672, %v2796
      %v2823 = vadd.f32 %v2673, %v2801
      %v2824 = vadd.f32 %v2674, %v2806
      %v2825 = vadd.f32 %v2675, %v2811
      %v2826 = vadd.f32 %v2676, %v2816
      %v2827 = vld [vmem:[%s2526 + $0x2] sm:$0xff]
      %v2828 = vld [vmem:[%s2526 + $0x12] sm:$0xff]
      %v2829 = vld [vmem:[%s2526 + $0x22] sm:$0xff]
      %v2830 = vld [vmem:[%s2526 + $0x32] sm:$0xff]
      %v2831 = vld [vmem:[%s2526 + $0x42] sm:$0xff]
      %v2832 = vld [vmem:[%s2526 + $0x52] sm:$0xff]
      %v2833 = vld [vmem:[%s2526 + $0x62] sm:$0xff]
      %v2834 = vld [vmem:[%s2526 + $0x72] sm:$0xff]
      %s2835 = scalar_lea.vmem %s1, 68
      %v2836 = vld [vmem:[%s2835] sm:$0xf]
      %v2838 = vsel %vm300, %v2827, 0
      %v2841 = vsel %vm300, %v2828, 0
      %v2844 = vsel %vm300, %v2829, 0
      %v2847 = vsel %vm300, %v2830, 0
      %v2850 = vsel %vm300, %v2831, 0
      %v2853 = vsel %vm300, %v2832, 0
      %v2856 = vsel %vm300, %v2833, 0
      %v2859 = vsel %vm300, %v2834, 0
      %v2862 = vsel %vm325, %v2836, 0
      %2864 = vmatprep.subr.mxu0 0.0
      %2865 = vmatpush1.msra.mxu0 %v2862
      %2866 = vmatprep.subr.mxu0 0.0
      %2867 = vmatpush1.msra.mxu0 0.0
      %2868 = vmatprep.subr.mxu0 0.0
      %2869 = vmatpush1.msra.mxu0 0.0
      %2870 = vmatprep.subr.mxu0 0.0
      %2871 = vmatpush1.msra.mxu0 0.0
      %2872 = vmatprep.subr.mxu0 0.0
      %2873 = vmatpush1.msra.mxu0 0.0
      %2874 = vmatprep.subr.mxu0 0.0
      %2875 = vmatpush1.msra.mxu0 0.0
      %2876 = vmatprep.subr.mxu0 0.0
      %2877 = vmatpush1.msra.mxu0 0.0
      %2878 = vmatprep.subr.mxu0 0.0
      %2879 = vmatpush1.msra.mxu0 0.0
      %2880 = vmatprep.subr.mxu0 0.0
      %2881 = vmatpush1.msra.mxu0 0.0
      %2882 = vmatprep.subr.mxu0 0.0
      %2883 = vmatpush1.msra.mxu0 0.0
      %2884 = vmatprep.subr.mxu0 0.0
      %2885 = vmatpush1.msra.mxu0 0.0
      %2886 = vmatprep.subr.mxu0 0.0
      %2887 = vmatpush1.msra.mxu0 0.0
      %2888 = vmatprep.subr.mxu0 0.0
      %2889 = vmatpush1.msra.mxu0 0.0
      %2890 = vmatprep.subr.mxu0 0.0
      %2891 = vmatpush1.msra.mxu0 0.0
      %2892 = vmatprep.subr.mxu0 0.0
      %2893 = vmatpush1.msra.mxu0 0.0
      %2894 = vmatprep.subr.mxu0 0.0
      %2895 = vmatpush1.msra.mxu0 0.0
      %2896 = vmatprep.subr.mxu0 0.0
      %2897 = vmatpush1.msra.mxu0 0.0
      %2898 = vmatprep.subr.mxu0 0.0
      %2899 = vmatpush1.msra.mxu0 0.0
      %2900 = vmatprep.subr.mxu0 0.0
      %2901 = vmatpush1.msra.mxu0 0.0
      %2902 = vmatprep.subr.mxu0 0.0
      %2903 = vmatpush1.msra.mxu0 0.0
      %2904 = vmatprep.subr.mxu0 0.0
      %2905 = vmatpush1.msra.mxu0 0.0
      %2906 = vmatprep.subr.mxu0 0.0
      %2907 = vmatpush1.msra.mxu0 0.0
      %2908 = vmatprep.subr.mxu0 0.0
      %2909 = vmatpush1.msra.mxu0 0.0
      %2910 = vmatprep.subr.mxu0 0.0
      %2911 = vmatpush1.msra.mxu0 0.0
      %2912 = vmatprep.subr.mxu0 0.0
      %2913 = vmatpush1.msra.mxu0 0.0
      %2914 = vmatprep.subr.mxu0 0.0
      %2915 = vmatpush1.msra.mxu0 0.0
      %2916 = vmatprep.subr.mxu0 0.0
      %2917 = vmatpush1.msra.mxu0 0.0
      %2918 = vmatprep.subr.mxu0 0.0
      %2919 = vmatpush1.msra.mxu0 0.0
      %2920 = vmatprep.subr.mxu0 0.0
      %2921 = vmatpush1.msra.mxu0 0.0
      %2922 = vmatprep.subr.mxu0 0.0
      %2923 = vmatpush1.msra.mxu0 0.0
      %2924 = vmatprep.subr.mxu0 0.0
      %2925 = vmatpush1.msra.mxu0 0.0
      %2926 = vmatprep.subr.mxu0 0.0
      %2927 = vmatpush1.msra.mxu0 0.0
      %2928 = vmatprep.mubr.f32.mxu0 0.0
      %2929 = vmatmul.mubr.f32.gmra.mrb[0].mxu0 %v2838
      %v2930 = vpop.f32.mrb[0].mxu0
      %v2931 = vadd.f32 0.0, %v2930
      %v2932 = vpop.f32.mrb[0].mxu0
      %2933 = vmatprep.mubr.f32.mxu0 0.0
      %2934 = vmatmul.mubr.f32.gmra.mrb[0].mxu0 %v2841
      %v2935 = vpop.f32.mrb[0].mxu0
      %v2936 = vadd.f32 0.0, %v2935
      %v2937 = vpop.f32.mrb[0].mxu0
      %2938 = vmatprep.mubr.f32.mxu0 0.0
      %2939 = vmatmul.mubr.f32.gmra.mrb[0].mxu0 %v2844
      %v2940 = vpop.f32.mrb[0].mxu0
      %v2941 = vadd.f32 0.0, %v2940
      %v2942 = vpop.f32.mrb[0].mxu0
      %2943 = vmatprep.mubr.f32.mxu0 0.0
      %2944 = vmatmul.mubr.f32.gmra.mrb[0].mxu0 %v2847
      %v2945 = vpop.f32.mrb[0].mxu0
      %v2946 = vadd.f32 0.0, %v2945
      %v2947 = vpop.f32.mrb[0].mxu0
      %2948 = vmatprep.mubr.f32.mxu0 0.0
      %2949 = vmatmul.mubr.f32.gmra.mrb[0].mxu0 %v2850
      %v2950 = vpop.f32.mrb[0].mxu0
      %v2951 = vadd.f32 0.0, %v2950
      %v2952 = vpop.f32.mrb[0].mxu0
      %2953 = vmatprep.mubr.f32.mxu0 0.0
      %2954 = vmatmul.mubr.f32.gmra.mrb[0].mxu0 %v2853
      %v2955 = vpop.f32.mrb[0].mxu0
      %v2956 = vadd.f32 0.0, %v2955
      %v2957 = vpop.f32.mrb[0].mxu0
      %2958 = vmatprep.mubr.f32.mxu0 0.0
      %2959 = vmatmul.mubr.f32.gmra.mrb[0].mxu0 %v2856
      %v2960 = vpop.f32.mrb[0].mxu0
      %v2961 = vadd.f32 0.0, %v2960
      %v2962 = vpop.f32.mrb[0].mxu0
      %2963 = vmatprep.mubr.f32.mxu0 0.0
      %2964 = vmatmul.mubr.f32.gmra.mrb[0].mxu0 %v2859
      %v2965 = vpop.f32.mrb[0].mxu0
      %v2966 = vadd.f32 0.0, %v2965
      %v2967 = vpop.f32.mrb[0].mxu0
      %2968 = vdwg.mxu0
      %v2969 = vadd.f32 %v2819, %v2931
      %v2970 = vadd.f32 %v2820, %v2936
      %v2971 = vadd.f32 %v2821, %v2941
      %v2972 = vadd.f32 %v2822, %v2946
      %v2973 = vadd.f32 %v2823, %v2951
      %v2974 = vadd.f32 %v2824, %v2956
      %v2975 = vadd.f32 %v2825, %v2961
      %v2976 = vadd.f32 %v2826, %v2966
      %s2977 = sadd.s32 %s23, 2
      %s2978 = smul.u32 %s2977, 160
      %s2979 = scalar_lea.vmem %s262, %s2978
      %v2980 = vld [vmem:[%s2979] sm:$0xff]
      %v2981 = vld [vmem:[%s2979 + $0x10] sm:$0xff]
      %v2982 = vld [vmem:[%s2979 + $0x20] sm:$0xff]
      %v2983 = vld [vmem:[%s2979 + $0x30] sm:$0xff]
      %v2984 = vld [vmem:[%s2979 + $0x40] sm:$0xff]
      %v2985 = vld [vmem:[%s2979 + $0x50] sm:$0xff]
      %v2986 = vld [vmem:[%s2979 + $0x60] sm:$0xff]
      %v2987 = vld [vmem:[%s2979 + $0x70] sm:$0xff]
      %s2988 = scalar_lea.vmem %s1, 72
      %v2989 = vld [vmem:[%s2988] sm:$0xf]
      %v2991 = vsel %vm300, %v2980, 0
      %v2994 = vsel %vm300, %v2981, 0
      %v2997 = vsel %vm300, %v2982, 0
      %v3000 = vsel %vm300, %v2983, 0
      %v3003 = vsel %vm300, %v2984, 0
      %v3006 = vsel %vm300, %v2985, 0
      %v3009 = vsel %vm300, %v2986, 0
      %v3012 = vsel %vm300, %v2987, 0
      %v3015 = vsel %vm325, %v2989, 0
      %3017 = vmatprep.subr.mxu0 0.0
      %3018 = vmatpush1.msra.mxu0 %v3015
      %3019 = vmatprep.subr.mxu0 0.0
      %3020 = vmatpush1.msra.mxu0 0.0
      %3021 = vmatprep.subr.mxu0 0.0
      %3022 = vmatpush1.msra.mxu0 0.0
      %3023 = vmatprep.subr.mxu0 0.0
      %3024 = vmatpush1.msra.mxu0 0.0
      %3025 = vmatprep.subr.mxu0 0.0
      %3026 = vmatpush1.msra.mxu0 0.0
      %3027 = vmatprep.subr.mxu0 0.0
      %3028 = vmatpush1.msra.mxu0 0.0
      %3029 = vmatprep.subr.mxu0 0.0
      %3030 = vmatpush1.msra.mxu0 0.0
      %3031 = vmatprep.subr.mxu0 0.0
      %3032 = vmatpush1.msra.mxu0 0.0
      %3033 = vmatprep.subr.mxu0 0.0
      %3034 = vmatpush1.msra.mxu0 0.0
      %3035 = vmatprep.subr.mxu0 0.0
      %3036 = vmatpush1.msra.mxu0 0.0
      %3037 = vmatprep.subr.mxu0 0.0
      %3038 = vmatpush1.msra.mxu0 0.0
      %3039 = vmatprep.subr.mxu0 0.0
      %3040 = vmatpush1.msra.mxu0 0.0
      %3041 = vmatprep.subr.mxu0 0.0
      %3042 = vmatpush1.msra.mxu0 0.0
      %3043 = vmatprep.subr.mxu0 0.0
      %3044 = vmatpush1.msra.mxu0 0.0
      %3045 = vmatprep.subr.mxu0 0.0
      %3046 = vmatpush1.msra.mxu0 0.0
      %3047 = vmatprep.subr.mxu0 0.0
      %3048 = vmatpush1.msra.mxu0 0.0
      %3049 = vmatprep.subr.mxu0 0.0
      %3050 = vmatpush1.msra.mxu0 0.0
      %3051 = vmatprep.subr.mxu0 0.0
      %3052 = vmatpush1.msra.mxu0 0.0
      %3053 = vmatprep.subr.mxu0 0.0
      %3054 = vmatpush1.msra.mxu0 0.0
      %3055 = vmatprep.subr.mxu0 0.0
      %3056 = vmatpush1.msra.mxu0 0.0
      %3057 = vmatprep.subr.mxu0 0.0
      %3058 = vmatpush1.msra.mxu0 0.0
      %3059 = vmatprep.subr.mxu0 0.0
      %3060 = vmatpush1.msra.mxu0 0.0
      %3061 = vmatprep.subr.mxu0 0.0
      %3062 = vmatpush1.msra.mxu0 0.0
      %3063 = vmatprep.subr.mxu0 0.0
      %3064 = vmatpush1.msra.mxu0 0.0
      %3065 = vmatprep.subr.mxu0 0.0
      %3066 = vmatpush1.msra.mxu0 0.0
      %3067 = vmatprep.subr.mxu0 0.0
      %3068 = vmatpush1.msra.mxu0 0.0
      %3069 = vmatprep.subr.mxu0 0.0
      %3070 = vmatpush1.msra.mxu0 0.0
      %3071 = vmatprep.subr.mxu0 0.0
      %3072 = vmatpush1.msra.mxu0 0.0
      %3073 = vmatprep.subr.mxu0 0.0
      %3074 = vmatpush1.msra.mxu0 0.0
      %3075 = vmatprep.subr.mxu0 0.0
      %3076 = vmatpush1.msra.mxu0 0.0
      %3077 = vmatprep.subr.mxu0 0.0
      %3078 = vmatpush1.msra.mxu0 0.0
      %3079 = vmatprep.subr.mxu0 0.0
      %3080 = vmatpush1.msra.mxu0 0.0
      %3081 = vmatprep.mubr.f32.mxu0 0.0
      %3082 = vmatmul.mubr.f32.gmra.mrb[0].mxu0 %v2991
      %v3083 = vpop.f32.mrb[0].mxu0
      %v3084 = vadd.f32 0.0, %v3083
      %v3085 = vpop.f32.mrb[0].mxu0
      %3086 = vmatprep.mubr.f32.mxu0 0.0
      %3087 = vmatmul.mubr.f32.gmra.mrb[0].mxu0 %v2994
      %v3088 = vpop.f32.mrb[0].mxu0
      %v3089 = vadd.f32 0.0, %v3088
      %v3090 = vpop.f32.mrb[0].mxu0
      %3091 = vmatprep.mubr.f32.mxu0 0.0
      %3092 = vmatmul.mubr.f32.gmra.mrb[0].mxu0 %v2997
      %v3093 = vpop.f32.mrb[0].mxu0
      %v3094 = vadd.f32 0.0, %v3093
      %v3095 = vpop.f32.mrb[0].mxu0
      %3096 = vmatprep.mubr.f32.mxu0 0.0
      %3097 = vmatmul.mubr.f32.gmra.mrb[0].mxu0 %v3000
      %v3098 = vpop.f32.mrb[0].mxu0
      %v3099 = vadd.f32 0.0, %v3098
      %v3100 = vpop.f32.mrb[0].mxu0
      %3101 = vmatprep.mubr.f32.mxu0 0.0
      %3102 = vmatmul.mubr.f32.gmra.mrb[0].mxu0 %v3003
      %v3103 = vpop.f32.mrb[0].mxu0
      %v3104 = vadd.f32 0.0, %v3103
      %v3105 = vpop.f32.mrb[0].mxu0
      %3106 = vmatprep.mubr.f32.mxu0 0.0
      %3107 = vmatmul.mubr.f32.gmra.mrb[0].mxu0 %v3006
      %v3108 = vpop.f32.mrb[0].mxu0
      %v3109 = vadd.f32 0.0, %v3108
      %v3110 = vpop.f32.mrb[0].mxu0
      %3111 = vmatprep.mubr.f32.mxu0 0.0
      %3112 = vmatmul.mubr.f32.gmra.mrb[0].mxu0 %v3009
      %v3113 = vpop.f32.mrb[0].mxu0
      %v3114 = vadd.f32 0.0, %v3113
      %v3115 = vpop.f32.mrb[0].mxu0
      %3116 = vmatprep.mubr.f32.mxu0 0.0
      %3117 = vmatmul.mubr.f32.gmra.mrb[0].mxu0 %v3012
      %v3118 = vpop.f32.mrb[0].mxu0
      %v3119 = vadd.f32 0.0, %v3118
      %v3120 = vpop.f32.mrb[0].mxu0
      %3121 = vdwg.mxu0
      %v3122 = vadd.f32 %v2969, %v3084
      %v3123 = vadd.f32 %v2970, %v3089
      %v3124 = vadd.f32 %v2971, %v3094
      %v3125 = vadd.f32 %v2972, %v3099
      %v3126 = vadd.f32 %v2973, %v3104
      %v3127 = vadd.f32 %v2974, %v3109
      %v3128 = vadd.f32 %v2975, %v3114
      %v3129 = vadd.f32 %v2976, %v3119
      %v3130 = vld [vmem:[%s2979 + $0x1] sm:$0xff]
      %v3131 = vld [vmem:[%s2979 + $0x11] sm:$0xff]
      %v3132 = vld [vmem:[%s2979 + $0x21] sm:$0xff]
      %v3133 = vld [vmem:[%s2979 + $0x31] sm:$0xff]
      %v3134 = vld [vmem:[%s2979 + $0x41] sm:$0xff]
      %v3135 = vld [vmem:[%s2979 + $0x51] sm:$0xff]
      %v3136 = vld [vmem:[%s2979 + $0x61] sm:$0xff]
      %v3137 = vld [vmem:[%s2979 + $0x71] sm:$0xff]
      %s3138 = scalar_lea.vmem %s1, 76
      %v3139 = vld [vmem:[%s3138] sm:$0xf]
      %v3141 = vsel %vm300, %v3130, 0
      %v3144 = vsel %vm300, %v3131, 0
      %v3147 = vsel %vm300, %v3132, 0
      %v3150 = vsel %vm300, %v3133, 0
      %v3153 = vsel %vm300, %v3134, 0
      %v3156 = vsel %vm300, %v3135, 0
      %v3159 = vsel %vm300, %v3136, 0
      %v3162 = vsel %vm300, %v3137, 0
      %v3165 = vsel %vm325, %v3139, 0
      %3167 = vmatprep.subr.mxu0 0.0
      %3168 = vmatpush1.msra.mxu0 %v3165
      %3169 = vmatprep.subr.mxu0 0.0
      %3170 = vmatpush1.msra.mxu0 0.0
      %3171 = vmatprep.subr.mxu0 0.0
      %3172 = vmatpush1.msra.mxu0 0.0
      %3173 = vmatprep.subr.mxu0 0.0
      %3174 = vmatpush1.msra.mxu0 0.0
      %3175 = vmatprep.subr.mxu0 0.0
      %3176 = vmatpush1.msra.mxu0 0.0
      %3177 = vmatprep.subr.mxu0 0.0
      %3178 = vmatpush1.msra.mxu0 0.0
      %3179 = vmatprep.subr.mxu0 0.0
      %3180 = vmatpush1.msra.mxu0 0.0
      %3181 = vmatprep.subr.mxu0 0.0
      %3182 = vmatpush1.msra.mxu0 0.0
      %3183 = vmatprep.subr.mxu0 0.0
      %3184 = vmatpush1.msra.mxu0 0.0
      %3185 = vmatprep.subr.mxu0 0.0
      %3186 = vmatpush1.msra.mxu0 0.0
      %3187 = vmatprep.subr.mxu0 0.0
      %3188 = vmatpush1.msra.mxu0 0.0
      %3189 = vmatprep.subr.mxu0 0.0
      %3190 = vmatpush1.msra.mxu0 0.0
      %3191 = vmatprep.subr.mxu0 0.0
      %3192 = vmatpush1.msra.mxu0 0.0
      %3193 = vmatprep.subr.mxu0 0.0
      %3194 = vmatpush1.msra.mxu0 0.0
      %3195 = vmatprep.subr.mxu0 0.0
      %3196 = vmatpush1.msra.mxu0 0.0
      %3197 = vmatprep.subr.mxu0 0.0
      %3198 = vmatpush1.msra.mxu0 0.0
      %3199 = vmatprep.subr.mxu0 0.0
      %3200 = vmatpush1.msra.mxu0 0.0
      %3201 = vmatprep.subr.mxu0 0.0
      %3202 = vmatpush1.msra.mxu0 0.0
      %3203 = vmatprep.subr.mxu0 0.0
      %3204 = vmatpush1.msra.mxu0 0.0
      %3205 = vmatprep.subr.mxu0 0.0
      %3206 = vmatpush1.msra.mxu0 0.0
      %3207 = vmatprep.subr.mxu0 0.0
      %3208 = vmatpush1.msra.mxu0 0.0
      %3209 = vmatprep.subr.mxu0 0.0
      %3210 = vmatpush1.msra.mxu0 0.0
      %3211 = vmatprep.subr.mxu0 0.0
      %3212 = vmatpush1.msra.mxu0 0.0
      %3213 = vmatprep.subr.mxu0 0.0
      %3214 = vmatpush1.msra.mxu0 0.0
      %3215 = vmatprep.subr.mxu0 0.0
      %3216 = vmatpush1.msra.mxu0 0.0
      %3217 = vmatprep.subr.mxu0 0.0
      %3218 = vmatpush1.msra.mxu0 0.0
      %3219 = vmatprep.subr.mxu0 0.0
      %3220 = vmatpush1.msra.mxu0 0.0
      %3221 = vmatprep.subr.mxu0 0.0
      %3222 = vmatpush1.msra.mxu0 0.0
      %3223 = vmatprep.subr.mxu0 0.0
      %3224 = vmatpush1.msra.mxu0 0.0
      %3225 = vmatprep.subr.mxu0 0.0
      %3226 = vmatpush1.msra.mxu0 0.0
      %3227 = vmatprep.subr.mxu0 0.0
      %3228 = vmatpush1.msra.mxu0 0.0
      %3229 = vmatprep.subr.mxu0 0.0
      %3230 = vmatpush1.msra.mxu0 0.0
      %3231 = vmatprep.mubr.f32.mxu0 0.0
      %3232 = vmatmul.mubr.f32.gmra.mrb[0].mxu0 %v3141
      %v3233 = vpop.f32.mrb[0].mxu0
      %v3234 = vadd.f32 0.0, %v3233
      %v3235 = vpop.f32.mrb[0].mxu0
      %3236 = vmatprep.mubr.f32.mxu0 0.0
      %3237 = vmatmul.mubr.f32.gmra.mrb[0].mxu0 %v3144
      %v3238 = vpop.f32.mrb[0].mxu0
      %v3239 = vadd.f32 0.0, %v3238
      %v3240 = vpop.f32.mrb[0].mxu0
      %3241 = vmatprep.mubr.f32.mxu0 0.0
      %3242 = vmatmul.mubr.f32.gmra.mrb[0].mxu0 %v3147
      %v3243 = vpop.f32.mrb[0].mxu0
      %v3244 = vadd.f32 0.0, %v3243
      %v3245 = vpop.f32.mrb[0].mxu0
      %3246 = vmatprep.mubr.f32.mxu0 0.0
      %3247 = vmatmul.mubr.f32.gmra.mrb[0].mxu0 %v3150
      %v3248 = vpop.f32.mrb[0].mxu0
      %v3249 = vadd.f32 0.0, %v3248
      %v3250 = vpop.f32.mrb[0].mxu0
      %3251 = vmatprep.mubr.f32.mxu0 0.0
      %3252 = vmatmul.mubr.f32.gmra.mrb[0].mxu0 %v3153
      %v3253 = vpop.f32.mrb[0].mxu0
      %v3254 = vadd.f32 0.0, %v3253
      %v3255 = vpop.f32.mrb[0].mxu0
      %3256 = vmatprep.mubr.f32.mxu0 0.0
      %3257 = vmatmul.mubr.f32.gmra.mrb[0].mxu0 %v3156
      %v3258 = vpop.f32.mrb[0].mxu0
      %v3259 = vadd.f32 0.0, %v3258
      %v3260 = vpop.f32.mrb[0].mxu0
      %3261 = vmatprep.mubr.f32.mxu0 0.0
      %3262 = vmatmul.mubr.f32.gmra.mrb[0].mxu0 %v3159
      %v3263 = vpop.f32.mrb[0].mxu0
      %v3264 = vadd.f32 0.0, %v3263
      %v3265 = vpop.f32.mrb[0].mxu0
      %3266 = vmatprep.mubr.f32.mxu0 0.0
      %3267 = vmatmul.mubr.f32.gmra.mrb[0].mxu0 %v3162
      %v3268 = vpop.f32.mrb[0].mxu0
      %v3269 = vadd.f32 0.0, %v3268
      %v3270 = vpop.f32.mrb[0].mxu0
      %3271 = vdwg.mxu0
      %v3272 = vadd.f32 %v3122, %v3234
      %v3273 = vadd.f32 %v3123, %v3239
      %v3274 = vadd.f32 %v3124, %v3244
      %v3275 = vadd.f32 %v3125, %v3249
      %v3276 = vadd.f32 %v3126, %v3254
      %v3277 = vadd.f32 %v3127, %v3259
      %v3278 = vadd.f32 %v3128, %v3264
      %v3279 = vadd.f32 %v3129, %v3269
      %v3280 = vld [vmem:[%s2979 + $0x2] sm:$0xff]
      %v3281 = vld [vmem:[%s2979 + $0x12] sm:$0xff]
      %v3282 = vld [vmem:[%s2979 + $0x22] sm:$0xff]
      %v3283 = vld [vmem:[%s2979 + $0x32] sm:$0xff]
      %v3284 = vld [vmem:[%s2979 + $0x42] sm:$0xff]
      %v3285 = vld [vmem:[%s2979 + $0x52] sm:$0xff]
      %v3286 = vld [vmem:[%s2979 + $0x62] sm:$0xff]
      %v3287 = vld [vmem:[%s2979 + $0x72] sm:$0xff]
      %s3288 = scalar_lea.vmem %s1, 80
      %v3289 = vld [vmem:[%s3288] sm:$0xf]
      %v3291 = vsel %vm300, %v3280, 0
      %v3294 = vsel %vm300, %v3281, 0
      %v3297 = vsel %vm300, %v3282, 0
      %v3300 = vsel %vm300, %v3283, 0
      %v3303 = vsel %vm300, %v3284, 0
      %v3306 = vsel %vm300, %v3285, 0
      %v3309 = vsel %vm300, %v3286, 0
      %v3312 = vsel %vm300, %v3287, 0
      %v3315 = vsel %vm325, %v3289, 0
      %3317 = vmatprep.subr.mxu0 0.0
      %3318 = vmatpush1.msra.mxu0 %v3315
      %3319 = vmatprep.subr.mxu0 0.0
      %3320 = vmatpush1.msra.mxu0 0.0
      %3321 = vmatprep.subr.mxu0 0.0
      %3322 = vmatpush1.msra.mxu0 0.0
      %3323 = vmatprep.subr.mxu0 0.0
      %3324 = vmatpush1.msra.mxu0 0.0
      %3325 = vmatprep.subr.mxu0 0.0
      %3326 = vmatpush1.msra.mxu0 0.0
      %3327 = vmatprep.subr.mxu0 0.0
      %3328 = vmatpush1.msra.mxu0 0.0
      %3329 = vmatprep.subr.mxu0 0.0
      %3330 = vmatpush1.msra.mxu0 0.0
      %3331 = vmatprep.subr.mxu0 0.0
      %3332 = vmatpush1.msra.mxu0 0.0
      %3333 = vmatprep.subr.mxu0 0.0
      %3334 = vmatpush1.msra.mxu0 0.0
      %3335 = vmatprep.subr.mxu0 0.0
      %3336 = vmatpush1.msra.mxu0 0.0
      %3337 = vmatprep.subr.mxu0 0.0
      %3338 = vmatpush1.msra.mxu0 0.0
      %3339 = vmatprep.subr.mxu0 0.0
      %3340 = vmatpush1.msra.mxu0 0.0
      %3341 = vmatprep.subr.mxu0 0.0
      %3342 = vmatpush1.msra.mxu0 0.0
      %3343 = vmatprep.subr.mxu0 0.0
      %3344 = vmatpush1.msra.mxu0 0.0
      %3345 = vmatprep.subr.mxu0 0.0
      %3346 = vmatpush1.msra.mxu0 0.0
      %3347 = vmatprep.subr.mxu0 0.0
      %3348 = vmatpush1.msra.mxu0 0.0
      %3349 = vmatprep.subr.mxu0 0.0
      %3350 = vmatpush1.msra.mxu0 0.0
      %3351 = vmatprep.subr.mxu0 0.0
      %3352 = vmatpush1.msra.mxu0 0.0
      %3353 = vmatprep.subr.mxu0 0.0
      %3354 = vmatpush1.msra.mxu0 0.0
      %3355 = vmatprep.subr.mxu0 0.0
      %3356 = vmatpush1.msra.mxu0 0.0
      %3357 = vmatprep.subr.mxu0 0.0
      %3358 = vmatpush1.msra.mxu0 0.0
      %3359 = vmatprep.subr.mxu0 0.0
      %3360 = vmatpush1.msra.mxu0 0.0
      %3361 = vmatprep.subr.mxu0 0.0
      %3362 = vmatpush1.msra.mxu0 0.0
      %3363 = vmatprep.subr.mxu0 0.0
      %3364 = vmatpush1.msra.mxu0 0.0
      %3365 = vmatprep.subr.mxu0 0.0
      %3366 = vmatpush1.msra.mxu0 0.0
      %3367 = vmatprep.subr.mxu0 0.0
      %3368 = vmatpush1.msra.mxu0 0.0
      %3369 = vmatprep.subr.mxu0 0.0
      %3370 = vmatpush1.msra.mxu0 0.0
      %3371 = vmatprep.subr.mxu0 0.0
      %3372 = vmatpush1.msra.mxu0 0.0
      %3373 = vmatprep.subr.mxu0 0.0
      %3374 = vmatpush1.msra.mxu0 0.0
      %3375 = vmatprep.subr.mxu0 0.0
      %3376 = vmatpush1.msra.mxu0 0.0
      %3377 = vmatprep.subr.mxu0 0.0
      %3378 = vmatpush1.msra.mxu0 0.0
      %3379 = vmatprep.subr.mxu0 0.0
      %3380 = vmatpush1.msra.mxu0 0.0
      %3381 = vmatprep.mubr.f32.mxu0 0.0
      %3382 = vmatmul.mubr.f32.gmra.mrb[0].mxu0 %v3291
      %v3383 = vpop.f32.mrb[0].mxu0
      %v3384 = vadd.f32 0.0, %v3383
      %v3385 = vpop.f32.mrb[0].mxu0
      %3386 = vmatprep.mubr.f32.mxu0 0.0
      %3387 = vmatmul.mubr.f32.gmra.mrb[0].mxu0 %v3294
      %v3388 = vpop.f32.mrb[0].mxu0
      %v3389 = vadd.f32 0.0, %v3388
      %v3390 = vpop.f32.mrb[0].mxu0
      %3391 = vmatprep.mubr.f32.mxu0 0.0
      %3392 = vmatmul.mubr.f32.gmra.mrb[0].mxu0 %v3297
      %v3393 = vpop.f32.mrb[0].mxu0
      %v3394 = vadd.f32 0.0, %v3393
      %v3395 = vpop.f32.mrb[0].mxu0
      %3396 = vmatprep.mubr.f32.mxu0 0.0
      %3397 = vmatmul.mubr.f32.gmra.mrb[0].mxu0 %v3300
      %v3398 = vpop.f32.mrb[0].mxu0
      %v3399 = vadd.f32 0.0, %v3398
      %v3400 = vpop.f32.mrb[0].mxu0
      %3401 = vmatprep.mubr.f32.mxu0 0.0
      %3402 = vmatmul.mubr.f32.gmra.mrb[0].mxu0 %v3303
      %v3403 = vpop.f32.mrb[0].mxu0
      %v3404 = vadd.f32 0.0, %v3403
      %v3405 = vpop.f32.mrb[0].mxu0
      %3406 = vmatprep.mubr.f32.mxu0 0.0
      %3407 = vmatmul.mubr.f32.gmra.mrb[0].mxu0 %v3306
      %v3408 = vpop.f32.mrb[0].mxu0
      %v3409 = vadd.f32 0.0, %v3408
      %v3410 = vpop.f32.mrb[0].mxu0
      %3411 = vmatprep.mubr.f32.mxu0 0.0
      %3412 = vmatmul.mubr.f32.gmra.mrb[0].mxu0 %v3309
      %v3413 = vpop.f32.mrb[0].mxu0
      %v3414 = vadd.f32 0.0, %v3413
      %v3415 = vpop.f32.mrb[0].mxu0
      %3416 = vmatprep.mubr.f32.mxu0 0.0
      %3417 = vmatmul.mubr.f32.gmra.mrb[0].mxu0 %v3312
      %v3418 = vpop.f32.mrb[0].mxu0
      %v3419 = vadd.f32 0.0, %v3418
      %v3420 = vpop.f32.mrb[0].mxu0
      %3421 = vdwg.mxu0
      %v3422 = vadd.f32 %v3272, %v3384
      %v3423 = vadd.f32 %v3273, %v3389
      %v3424 = vadd.f32 %v3274, %v3394
      %v3425 = vadd.f32 %v3275, %v3399
      %v3426 = vadd.f32 %v3276, %v3404
      %v3427 = vadd.f32 %v3277, %v3409
      %v3428 = vadd.f32 %v3278, %v3414
      %v3429 = vadd.f32 %v3279, %v3419
      %s3430 = sadd.s32 16, %s2978
      %s3431 = scalar_lea.vmem %s262, %s3430
      %v3432 = vld [vmem:[%s3431] sm:$0xff]
      %v3433 = vld [vmem:[%s3431 + $0x10] sm:$0xff]
      %v3434 = vld [vmem:[%s3431 + $0x20] sm:$0xff]
      %v3435 = vld [vmem:[%s3431 + $0x30] sm:$0xff]
      %v3436 = vld [vmem:[%s3431 + $0x40] sm:$0xff]
      %v3437 = vld [vmem:[%s3431 + $0x50] sm:$0xff]
      %v3438 = vld [vmem:[%s3431 + $0x60] sm:$0xff]
      %v3439 = vld [vmem:[%s3431 + $0x70] sm:$0xff]
      %s3440 = scalar_lea.vmem %s1, 84
      %v3441 = vld [vmem:[%s3440] sm:$0xf]
      %v3443 = vsel %vm300, %v3432, 0
      %v3446 = vsel %vm300, %v3433, 0
      %v3449 = vsel %vm300, %v3434, 0
      %v3452 = vsel %vm300, %v3435, 0
      %v3455 = vsel %vm300, %v3436, 0
      %v3458 = vsel %vm300, %v3437, 0
      %v3461 = vsel %vm300, %v3438, 0
      %v3464 = vsel %vm300, %v3439, 0
      %v3467 = vsel %vm325, %v3441, 0
      %3469 = vmatprep.subr.mxu0 0.0
      %3470 = vmatpush1.msra.mxu0 %v3467
      %3471 = vmatprep.subr.mxu0 0.0
      %3472 = vmatpush1.msra.mxu0 0.0
      %3473 = vmatprep.subr.mxu0 0.0
      %3474 = vmatpush1.msra.mxu0 0.0
      %3475 = vmatprep.subr.mxu0 0.0
      %3476 = vmatpush1.msra.mxu0 0.0
      %3477 = vmatprep.subr.mxu0 0.0
      %3478 = vmatpush1.msra.mxu0 0.0
      %3479 = vmatprep.subr.mxu0 0.0
      %3480 = vmatpush1.msra.mxu0 0.0
      %3481 = vmatprep.subr.mxu0 0.0
      %3482 = vmatpush1.msra.mxu0 0.0
      %3483 = vmatprep.subr.mxu0 0.0
      %3484 = vmatpush1.msra.mxu0 0.0
      %3485 = vmatprep.subr.mxu0 0.0
      %3486 = vmatpush1.msra.mxu0 0.0
      %3487 = vmatprep.subr.mxu0 0.0
      %3488 = vmatpush1.msra.mxu0 0.0
      %3489 = vmatprep.subr.mxu0 0.0
      %3490 = vmatpush1.msra.mxu0 0.0
      %3491 = vmatprep.subr.mxu0 0.0
      %3492 = vmatpush1.msra.mxu0 0.0
      %3493 = vmatprep.subr.mxu0 0.0
      %3494 = vmatpush1.msra.mxu0 0.0
      %3495 = vmatprep.subr.mxu0 0.0
      %3496 = vmatpush1.msra.mxu0 0.0
      %3497 = vmatprep.subr.mxu0 0.0
      %3498 = vmatpush1.msra.mxu0 0.0
      %3499 = vmatprep.subr.mxu0 0.0
      %3500 = vmatpush1.msra.mxu0 0.0
      %3501 = vmatprep.subr.mxu0 0.0
      %3502 = vmatpush1.msra.mxu0 0.0
      %3503 = vmatprep.subr.mxu0 0.0
      %3504 = vmatpush1.msra.mxu0 0.0
      %3505 = vmatprep.subr.mxu0 0.0
      %3506 = vmatpush1.msra.mxu0 0.0
      %3507 = vmatprep.subr.mxu0 0.0
      %3508 = vmatpush1.msra.mxu0 0.0
      %3509 = vmatprep.subr.mxu0 0.0
      %3510 = vmatpush1.msra.mxu0 0.0
      %3511 = vmatprep.subr.mxu0 0.0
      %3512 = vmatpush1.msra.mxu0 0.0
      %3513 = vmatprep.subr.mxu0 0.0
      %3514 = vmatpush1.msra.mxu0 0.0
      %3515 = vmatprep.subr.mxu0 0.0
      %3516 = vmatpush1.msra.mxu0 0.0
      %3517 = vmatprep.subr.mxu0 0.0
      %3518 = vmatpush1.msra.mxu0 0.0
      %3519 = vmatprep.subr.mxu0 0.0
      %3520 = vmatpush1.msra.mxu0 0.0
      %3521 = vmatprep.subr.mxu0 0.0
      %3522 = vmatpush1.msra.mxu0 0.0
      %3523 = vmatprep.subr.mxu0 0.0
      %3524 = vmatpush1.msra.mxu0 0.0
      %3525 = vmatprep.subr.mxu0 0.0
      %3526 = vmatpush1.msra.mxu0 0.0
      %3527 = vmatprep.subr.mxu0 0.0
      %3528 = vmatpush1.msra.mxu0 0.0
      %3529 = vmatprep.subr.mxu0 0.0
      %3530 = vmatpush1.msra.mxu0 0.0
      %3531 = vmatprep.subr.mxu0 0.0
      %3532 = vmatpush1.msra.mxu0 0.0
      %3533 = vmatprep.mubr.f32.mxu0 0.0
      %3534 = vmatmul.mubr.f32.gmra.mrb[0].mxu0 %v3443
      %v3535 = vpop.f32.mrb[0].mxu0
      %v3536 = vadd.f32 0.0, %v3535
      %v3537 = vpop.f32.mrb[0].mxu0
      %3538 = vmatprep.mubr.f32.mxu0 0.0
      %3539 = vmatmul.mubr.f32.gmra.mrb[0].mxu0 %v3446
      %v3540 = vpop.f32.mrb[0].mxu0
      %v3541 = vadd.f32 0.0, %v3540
      %v3542 = vpop.f32.mrb[0].mxu0
      %3543 = vmatprep.mubr.f32.mxu0 0.0
      %3544 = vmatmul.mubr.f32.gmra.mrb[0].mxu0 %v3449
      %v3545 = vpop.f32.mrb[0].mxu0
      %v3546 = vadd.f32 0.0, %v3545
      %v3547 = vpop.f32.mrb[0].mxu0
      %3548 = vmatprep.mubr.f32.mxu0 0.0
      %3549 = vmatmul.mubr.f32.gmra.mrb[0].mxu0 %v3452
      %v3550 = vpop.f32.mrb[0].mxu0
      %v3551 = vadd.f32 0.0, %v3550
      %v3552 = vpop.f32.mrb[0].mxu0
      %3553 = vmatprep.mubr.f32.mxu0 0.0
      %3554 = vmatmul.mubr.f32.gmra.mrb[0].mxu0 %v3455
      %v3555 = vpop.f32.mrb[0].mxu0
      %v3556 = vadd.f32 0.0, %v3555
      %v3557 = vpop.f32.mrb[0].mxu0
      %3558 = vmatprep.mubr.f32.mxu0 0.0
      %3559 = vmatmul.mubr.f32.gmra.mrb[0].mxu0 %v3458
      %v3560 = vpop.f32.mrb[0].mxu0
      %v3561 = vadd.f32 0.0, %v3560
      %v3562 = vpop.f32.mrb[0].mxu0
      %3563 = vmatprep.mubr.f32.mxu0 0.0
      %3564 = vmatmul.mubr.f32.gmra.mrb[0].mxu0 %v3461
      %v3565 = vpop.f32.mrb[0].mxu0
      %v3566 = vadd.f32 0.0, %v3565
      %v3567 = vpop.f32.mrb[0].mxu0
      %3568 = vmatprep.mubr.f32.mxu0 0.0
      %3569 = vmatmul.mubr.f32.gmra.mrb[0].mxu0 %v3464
      %v3570 = vpop.f32.mrb[0].mxu0
      %v3571 = vadd.f32 0.0, %v3570
      %v3572 = vpop.f32.mrb[0].mxu0
      %3573 = vdwg.mxu0
      %v3574 = vadd.f32 %v3422, %v3536
      %v3575 = vadd.f32 %v3423, %v3541
      %v3576 = vadd.f32 %v3424, %v3546
      %v3577 = vadd.f32 %v3425, %v3551
      %v3578 = vadd.f32 %v3426, %v3556
      %v3579 = vadd.f32 %v3427, %v3561
      %v3580 = vadd.f32 %v3428, %v3566
      %v3581 = vadd.f32 %v3429, %v3571
      %v3582 = vld [vmem:[%s3431 + $0x1] sm:$0xff]
      %v3583 = vld [vmem:[%s3431 + $0x11] sm:$0xff]
      %v3584 = vld [vmem:[%s3431 + $0x21] sm:$0xff]
      %v3585 = vld [vmem:[%s3431 + $0x31] sm:$0xff]
      %v3586 = vld [vmem:[%s3431 + $0x41] sm:$0xff]
      %v3587 = vld [vmem:[%s3431 + $0x51] sm:$0xff]
      %v3588 = vld [vmem:[%s3431 + $0x61] sm:$0xff]
      %v3589 = vld [vmem:[%s3431 + $0x71] sm:$0xff]
      %s3590 = scalar_lea.vmem %s1, 88
      %v3591 = vld [vmem:[%s3590] sm:$0xf]
      %v3593 = vsel %vm300, %v3582, 0
      %v3596 = vsel %vm300, %v3583, 0
      %v3599 = vsel %vm300, %v3584, 0
      %v3602 = vsel %vm300, %v3585, 0
      %v3605 = vsel %vm300, %v3586, 0
      %v3608 = vsel %vm300, %v3587, 0
      %v3611 = vsel %vm300, %v3588, 0
      %v3614 = vsel %vm300, %v3589, 0
      %v3617 = vsel %vm325, %v3591, 0
      %3619 = vmatprep.subr.mxu0 0.0
      %3620 = vmatpush1.msra.mxu0 %v3617
      %3621 = vmatprep.subr.mxu0 0.0
      %3622 = vmatpush1.msra.mxu0 0.0
      %3623 = vmatprep.subr.mxu0 0.0
      %3624 = vmatpush1.msra.mxu0 0.0
      %3625 = vmatprep.subr.mxu0 0.0
      %3626 = vmatpush1.msra.mxu0 0.0
      %3627 = vmatprep.subr.mxu0 0.0
      %3628 = vmatpush1.msra.mxu0 0.0
      %3629 = vmatprep.subr.mxu0 0.0
      %3630 = vmatpush1.msra.mxu0 0.0
      %3631 = vmatprep.subr.mxu0 0.0
      %3632 = vmatpush1.msra.mxu0 0.0
      %3633 = vmatprep.subr.mxu0 0.0
      %3634 = vmatpush1.msra.mxu0 0.0
      %3635 = vmatprep.subr.mxu0 0.0
      %3636 = vmatpush1.msra.mxu0 0.0
      %3637 = vmatprep.subr.mxu0 0.0
      %3638 = vmatpush1.msra.mxu0 0.0
      %3639 = vmatprep.subr.mxu0 0.0
      %3640 = vmatpush1.msra.mxu0 0.0
      %3641 = vmatprep.subr.mxu0 0.0
      %3642 = vmatpush1.msra.mxu0 0.0
      %3643 = vmatprep.subr.mxu0 0.0
      %3644 = vmatpush1.msra.mxu0 0.0
      %3645 = vmatprep.subr.mxu0 0.0
      %3646 = vmatpush1.msra.mxu0 0.0
      %3647 = vmatprep.subr.mxu0 0.0
      %3648 = vmatpush1.msra.mxu0 0.0
      %3649 = vmatprep.subr.mxu0 0.0
      %3650 = vmatpush1.msra.mxu0 0.0
      %3651 = vmatprep.subr.mxu0 0.0
      %3652 = vmatpush1.msra.mxu0 0.0
      %3653 = vmatprep.subr.mxu0 0.0
      %3654 = vmatpush1.msra.mxu0 0.0
      %3655 = vmatprep.subr.mxu0 0.0
      %3656 = vmatpush1.msra.mxu0 0.0
      %3657 = vmatprep.subr.mxu0 0.0
      %3658 = vmatpush1.msra.mxu0 0.0
      %3659 = vmatprep.subr.mxu0 0.0
      %3660 = vmatpush1.msra.mxu0 0.0
      %3661 = vmatprep.subr.mxu0 0.0
      %3662 = vmatpush1.msra.mxu0 0.0
      %3663 = vmatprep.subr.mxu0 0.0
      %3664 = vmatpush1.msra.mxu0 0.0
      %3665 = vmatprep.subr.mxu0 0.0
      %3666 = vmatpush1.msra.mxu0 0.0
      %3667 = vmatprep.subr.mxu0 0.0
      %3668 = vmatpush1.msra.mxu0 0.0
      %3669 = vmatprep.subr.mxu0 0.0
      %3670 = vmatpush1.msra.mxu0 0.0
      %3671 = vmatprep.subr.mxu0 0.0
      %3672 = vmatpush1.msra.mxu0 0.0
      %3673 = vmatprep.subr.mxu0 0.0
      %3674 = vmatpush1.msra.mxu0 0.0
      %3675 = vmatprep.subr.mxu0 0.0
      %3676 = vmatpush1.msra.mxu0 0.0
      %3677 = vmatprep.subr.mxu0 0.0
      %3678 = vmatpush1.msra.mxu0 0.0
      %3679 = vmatprep.subr.mxu0 0.0
      %3680 = vmatpush1.msra.mxu0 0.0
      %3681 = vmatprep.subr.mxu0 0.0
      %3682 = vmatpush1.msra.mxu0 0.0
      %3683 = vmatprep.mubr.f32.mxu0 0.0
      %3684 = vmatmul.mubr.f32.gmra.mrb[0].mxu0 %v3593
      %v3685 = vpop.f32.mrb[0].mxu0
      %v3686 = vadd.f32 0.0, %v3685
      %v3687 = vpop.f32.mrb[0].mxu0
      %3688 = vmatprep.mubr.f32.mxu0 0.0
      %3689 = vmatmul.mubr.f32.gmra.mrb[0].mxu0 %v3596
      %v3690 = vpop.f32.mrb[0].mxu0
      %v3691 = vadd.f32 0.0, %v3690
      %v3692 = vpop.f32.mrb[0].mxu0
      %3693 = vmatprep.mubr.f32.mxu0 0.0
      %3694 = vmatmul.mubr.f32.gmra.mrb[0].mxu0 %v3599
      %v3695 = vpop.f32.mrb[0].mxu0
      %v3696 = vadd.f32 0.0, %v3695
      %v3697 = vpop.f32.mrb[0].mxu0
      %3698 = vmatprep.mubr.f32.mxu0 0.0
      %3699 = vmatmul.mubr.f32.gmra.mrb[0].mxu0 %v3602
      %v3700 = vpop.f32.mrb[0].mxu0
      %v3701 = vadd.f32 0.0, %v3700
      %v3702 = vpop.f32.mrb[0].mxu0
      %3703 = vmatprep.mubr.f32.mxu0 0.0
      %3704 = vmatmul.mubr.f32.gmra.mrb[0].mxu0 %v3605
      %v3705 = vpop.f32.mrb[0].mxu0
      %v3706 = vadd.f32 0.0, %v3705
      %v3707 = vpop.f32.mrb[0].mxu0
      %3708 = vmatprep.mubr.f32.mxu0 0.0
      %3709 = vmatmul.mubr.f32.gmra.mrb[0].mxu0 %v3608
      %v3710 = vpop.f32.mrb[0].mxu0
      %v3711 = vadd.f32 0.0, %v3710
      %v3712 = vpop.f32.mrb[0].mxu0
      %3713 = vmatprep.mubr.f32.mxu0 0.0
      %3714 = vmatmul.mubr.f32.gmra.mrb[0].mxu0 %v3611
      %v3715 = vpop.f32.mrb[0].mxu0
      %v3716 = vadd.f32 0.0, %v3715
      %v3717 = vpop.f32.mrb[0].mxu0
      %3718 = vmatprep.mubr.f32.mxu0 0.0
      %3719 = vmatmul.mubr.f32.gmra.mrb[0].mxu0 %v3614
      %v3720 = vpop.f32.mrb[0].mxu0
      %v3721 = vadd.f32 0.0, %v3720
      %v3722 = vpop.f32.mrb[0].mxu0
      %3723 = vdwg.mxu0
      %v3724 = vadd.f32 %v3574, %v3686
      %v3725 = vadd.f32 %v3575, %v3691
      %v3726 = vadd.f32 %v3576, %v3696
      %v3727 = vadd.f32 %v3577, %v3701
      %v3728 = vadd.f32 %v3578, %v3706
      %v3729 = vadd.f32 %v3579, %v3711
      %v3730 = vadd.f32 %v3580, %v3716
      %v3731 = vadd.f32 %v3581, %v3721
      %v3732 = vld [vmem:[%s3431 + $0x2] sm:$0xff]
      %v3733 = vld [vmem:[%s3431 + $0x12] sm:$0xff]
      %v3734 = vld [vmem:[%s3431 + $0x22] sm:$0xff]
      %v3735 = vld [vmem:[%s3431 + $0x32] sm:$0xff]
      %v3736 = vld [vmem:[%s3431 + $0x42] sm:$0xff]
      %v3737 = vld [vmem:[%s3431 + $0x52] sm:$0xff]
      %v3738 = vld [vmem:[%s3431 + $0x62] sm:$0xff]
      %v3739 = vld [vmem:[%s3431 + $0x72] sm:$0xff]
      %s3740 = scalar_lea.vmem %s1, 92
      %v3741 = vld [vmem:[%s3740] sm:$0xf]
      %v3743 = vsel %vm300, %v3732, 0
      %v3746 = vsel %vm300, %v3733, 0
      %v3749 = vsel %vm300, %v3734, 0
      %v3752 = vsel %vm300, %v3735, 0
      %v3755 = vsel %vm300, %v3736, 0
      %v3758 = vsel %vm300, %v3737, 0
      %v3761 = vsel %vm300, %v3738, 0
      %v3764 = vsel %vm300, %v3739, 0
      %v3767 = vsel %vm325, %v3741, 0
      %3769 = vmatprep.subr.mxu0 0.0
      %3770 = vmatpush1.msra.mxu0 %v3767
      %3771 = vmatprep.subr.mxu0 0.0
      %3772 = vmatpush1.msra.mxu0 0.0
      %3773 = vmatprep.subr.mxu0 0.0
      %3774 = vmatpush1.msra.mxu0 0.0
      %3775 = vmatprep.subr.mxu0 0.0
      %3776 = vmatpush1.msra.mxu0 0.0
      %3777 = vmatprep.subr.mxu0 0.0
      %3778 = vmatpush1.msra.mxu0 0.0
      %3779 = vmatprep.subr.mxu0 0.0
      %3780 = vmatpush1.msra.mxu0 0.0
      %3781 = vmatprep.subr.mxu0 0.0
      %3782 = vmatpush1.msra.mxu0 0.0
      %3783 = vmatprep.subr.mxu0 0.0
      %3784 = vmatpush1.msra.mxu0 0.0
      %3785 = vmatprep.subr.mxu0 0.0
      %3786 = vmatpush1.msra.mxu0 0.0
      %3787 = vmatprep.subr.mxu0 0.0
      %3788 = vmatpush1.msra.mxu0 0.0
      %3789 = vmatprep.subr.mxu0 0.0
      %3790 = vmatpush1.msra.mxu0 0.0
      %3791 = vmatprep.subr.mxu0 0.0
      %3792 = vmatpush1.msra.mxu0 0.0
      %3793 = vmatprep.subr.mxu0 0.0
      %3794 = vmatpush1.msra.mxu0 0.0
      %3795 = vmatprep.subr.mxu0 0.0
      %3796 = vmatpush1.msra.mxu0 0.0
      %3797 = vmatprep.subr.mxu0 0.0
      %3798 = vmatpush1.msra.mxu0 0.0
      %3799 = vmatprep.subr.mxu0 0.0
      %3800 = vmatpush1.msra.mxu0 0.0
      %3801 = vmatprep.subr.mxu0 0.0
      %3802 = vmatpush1.msra.mxu0 0.0
      %3803 = vmatprep.subr.mxu0 0.0
      %3804 = vmatpush1.msra.mxu0 0.0
      %3805 = vmatprep.subr.mxu0 0.0
      %3806 = vmatpush1.msra.mxu0 0.0
      %3807 = vmatprep.subr.mxu0 0.0
      %3808 = vmatpush1.msra.mxu0 0.0
      %3809 = vmatprep.subr.mxu0 0.0
      %3810 = vmatpush1.msra.mxu0 0.0
      %3811 = vmatprep.subr.mxu0 0.0
      %3812 = vmatpush1.msra.mxu0 0.0
      %3813 = vmatprep.subr.mxu0 0.0
      %3814 = vmatpush1.msra.mxu0 0.0
      %3815 = vmatprep.subr.mxu0 0.0
      %3816 = vmatpush1.msra.mxu0 0.0
      %3817 = vmatprep.subr.mxu0 0.0
      %3818 = vmatpush1.msra.mxu0 0.0
      %3819 = vmatprep.subr.mxu0 0.0
      %3820 = vmatpush1.msra.mxu0 0.0
      %3821 = vmatprep.subr.mxu0 0.0
      %3822 = vmatpush1.msra.mxu0 0.0
      %3823 = vmatprep.subr.mxu0 0.0
      %3824 = vmatpush1.msra.mxu0 0.0
      %3825 = vmatprep.subr.mxu0 0.0
      %3826 = vmatpush1.msra.mxu0 0.0
      %3827 = vmatprep.subr.mxu0 0.0
      %3828 = vmatpush1.msra.mxu0 0.0
      %3829 = vmatprep.subr.mxu0 0.0
      %3830 = vmatpush1.msra.mxu0 0.0
      %3831 = vmatprep.subr.mxu0 0.0
      %3832 = vmatpush1.msra.mxu0 0.0
      %3833 = vmatprep.mubr.f32.mxu0 0.0
      %3834 = vmatmul.mubr.f32.gmra.mrb[0].mxu0 %v3743
      %v3835 = vpop.f32.mrb[0].mxu0
      %v3836 = vadd.f32 0.0, %v3835
      %v3837 = vpop.f32.mrb[0].mxu0
      %3838 = vmatprep.mubr.f32.mxu0 0.0
      %3839 = vmatmul.mubr.f32.gmra.mrb[0].mxu0 %v3746
      %v3840 = vpop.f32.mrb[0].mxu0
      %v3841 = vadd.f32 0.0, %v3840
      %v3842 = vpop.f32.mrb[0].mxu0
      %3843 = vmatprep.mubr.f32.mxu0 0.0
      %3844 = vmatmul.mubr.f32.gmra.mrb[0].mxu0 %v3749
      %v3845 = vpop.f32.mrb[0].mxu0
      %v3846 = vadd.f32 0.0, %v3845
      %v3847 = vpop.f32.mrb[0].mxu0
      %3848 = vmatprep.mubr.f32.mxu0 0.0
      %3849 = vmatmul.mubr.f32.gmra.mrb[0].mxu0 %v3752
      %v3850 = vpop.f32.mrb[0].mxu0
      %v3851 = vadd.f32 0.0, %v3850
      %v3852 = vpop.f32.mrb[0].mxu0
      %3853 = vmatprep.mubr.f32.mxu0 0.0
      %3854 = vmatmul.mubr.f32.gmra.mrb[0].mxu0 %v3755
      %v3855 = vpop.f32.mrb[0].mxu0
      %v3856 = vadd.f32 0.0, %v3855
      %v3857 = vpop.f32.mrb[0].mxu0
      %3858 = vmatprep.mubr.f32.mxu0 0.0
      %3859 = vmatmul.mubr.f32.gmra.mrb[0].mxu0 %v3758
      %v3860 = vpop.f32.mrb[0].mxu0
      %v3861 = vadd.f32 0.0, %v3860
      %v3862 = vpop.f32.mrb[0].mxu0
      %3863 = vmatprep.mubr.f32.mxu0 0.0
      %3864 = vmatmul.mubr.f32.gmra.mrb[0].mxu0 %v3761
      %v3865 = vpop.f32.mrb[0].mxu0
      %v3866 = vadd.f32 0.0, %v3865
      %v3867 = vpop.f32.mrb[0].mxu0
      %3868 = vmatprep.mubr.f32.mxu0 0.0
      %3869 = vmatmul.mubr.f32.gmra.mrb[0].mxu0 %v3764
      %v3870 = vpop.f32.mrb[0].mxu0
      %v3871 = vadd.f32 0.0, %v3870
      %v3872 = vpop.f32.mrb[0].mxu0
      %3873 = vdwg.mxu0
      %v3874 = vadd.f32 %v3724, %v3836
      %v3875 = vadd.f32 %v3725, %v3841
      %v3876 = vadd.f32 %v3726, %v3846
      %v3877 = vadd.f32 %v3727, %v3851
      %v3878 = vadd.f32 %v3728, %v3856
      %v3879 = vadd.f32 %v3729, %v3861
      %v3880 = vadd.f32 %v3730, %v3866
      %v3881 = vadd.f32 %v3731, %v3871
      %s3882 = sadd.s32 32, %s2978
      %s3883 = scalar_lea.vmem %s262, %s3882
      %v3884 = vld [vmem:[%s3883] sm:$0xff]
      %v3885 = vld [vmem:[%s3883 + $0x10] sm:$0xff]
      %v3886 = vld [vmem:[%s3883 + $0x20] sm:$0xff]
      %v3887 = vld [vmem:[%s3883 + $0x30] sm:$0xff]
      %v3888 = vld [vmem:[%s3883 + $0x40] sm:$0xff]
      %v3889 = vld [vmem:[%s3883 + $0x50] sm:$0xff]
      %v3890 = vld [vmem:[%s3883 + $0x60] sm:$0xff]
      %v3891 = vld [vmem:[%s3883 + $0x70] sm:$0xff]
      %s3892 = scalar_lea.vmem %s1, 96
      %v3893 = vld [vmem:[%s3892] sm:$0xf]
      %v3895 = vsel %vm300, %v3884, 0
      %v3898 = vsel %vm300, %v3885, 0
      %v3901 = vsel %vm300, %v3886, 0
      %v3904 = vsel %vm300, %v3887, 0
      %v3907 = vsel %vm300, %v3888, 0
      %v3910 = vsel %vm300, %v3889, 0
      %v3913 = vsel %vm300, %v3890, 0
      %v3916 = vsel %vm300, %v3891, 0
      %v3919 = vsel %vm325, %v3893, 0
      %3921 = vmatprep.subr.mxu0 0.0
      %3922 = vmatpush1.msra.mxu0 %v3919
      %3923 = vmatprep.subr.mxu0 0.0
      %3924 = vmatpush1.msra.mxu0 0.0
      %3925 = vmatprep.subr.mxu0 0.0
      %3926 = vmatpush1.msra.mxu0 0.0
      %3927 = vmatprep.subr.mxu0 0.0
      %3928 = vmatpush1.msra.mxu0 0.0
      %3929 = vmatprep.subr.mxu0 0.0
      %3930 = vmatpush1.msra.mxu0 0.0
      %3931 = vmatprep.subr.mxu0 0.0
      %3932 = vmatpush1.msra.mxu0 0.0
      %3933 = vmatprep.subr.mxu0 0.0
      %3934 = vmatpush1.msra.mxu0 0.0
      %3935 = vmatprep.subr.mxu0 0.0
      %3936 = vmatpush1.msra.mxu0 0.0
      %3937 = vmatprep.subr.mxu0 0.0
      %3938 = vmatpush1.msra.mxu0 0.0
      %3939 = vmatprep.subr.mxu0 0.0
      %3940 = vmatpush1.msra.mxu0 0.0
      %3941 = vmatprep.subr.mxu0 0.0
      %3942 = vmatpush1.msra.mxu0 0.0
      %3943 = vmatprep.subr.mxu0 0.0
      %3944 = vmatpush1.msra.mxu0 0.0
      %3945 = vmatprep.subr.mxu0 0.0
      %3946 = vmatpush1.msra.mxu0 0.0
      %3947 = vmatprep.subr.mxu0 0.0
      %3948 = vmatpush1.msra.mxu0 0.0
      %3949 = vmatprep.subr.mxu0 0.0
      %3950 = vmatpush1.msra.mxu0 0.0
      %3951 = vmatprep.subr.mxu0 0.0
      %3952 = vmatpush1.msra.mxu0 0.0
      %3953 = vmatprep.subr.mxu0 0.0
      %3954 = vmatpush1.msra.mxu0 0.0
      %3955 = vmatprep.subr.mxu0 0.0
      %3956 = vmatpush1.msra.mxu0 0.0
      %3957 = vmatprep.subr.mxu0 0.0
      %3958 = vmatpush1.msra.mxu0 0.0
      %3959 = vmatprep.subr.mxu0 0.0
      %3960 = vmatpush1.msra.mxu0 0.0
      %3961 = vmatprep.subr.mxu0 0.0
      %3962 = vmatpush1.msra.mxu0 0.0
      %3963 = vmatprep.subr.mxu0 0.0
      %3964 = vmatpush1.msra.mxu0 0.0
      %3965 = vmatprep.subr.mxu0 0.0
      %3966 = vmatpush1.msra.mxu0 0.0
      %3967 = vmatprep.subr.mxu0 0.0
      %3968 = vmatpush1.msra.mxu0 0.0
      %3969 = vmatprep.subr.mxu0 0.0
      %3970 = vmatpush1.msra.mxu0 0.0
      %3971 = vmatprep.subr.mxu0 0.0
      %3972 = vmatpush1.msra.mxu0 0.0
      %3973 = vmatprep.subr.mxu0 0.0
      %3974 = vmatpush1.msra.mxu0 0.0
      %3975 = vmatprep.subr.mxu0 0.0
      %3976 = vmatpush1.msra.mxu0 0.0
      %3977 = vmatprep.subr.mxu0 0.0
      %3978 = vmatpush1.msra.mxu0 0.0
      %3979 = vmatprep.subr.mxu0 0.0
      %3980 = vmatpush1.msra.mxu0 0.0
      %3981 = vmatprep.subr.mxu0 0.0
      %3982 = vmatpush1.msra.mxu0 0.0
      %3983 = vmatprep.subr.mxu0 0.0
      %3984 = vmatpush1.msra.mxu0 0.0
      %3985 = vmatprep.mubr.f32.mxu0 0.0
      %3986 = vmatmul.mubr.f32.gmra.mrb[0].mxu0 %v3895
      %v3987 = vpop.f32.mrb[0].mxu0
      %v3988 = vadd.f32 0.0, %v3987
      %v3989 = vpop.f32.mrb[0].mxu0
      %3990 = vmatprep.mubr.f32.mxu0 0.0
      %3991 = vmatmul.mubr.f32.gmra.mrb[0].mxu0 %v3898
      %v3992 = vpop.f32.mrb[0].mxu0
      %v3993 = vadd.f32 0.0, %v3992
      %v3994 = vpop.f32.mrb[0].mxu0
      %3995 = vmatprep.mubr.f32.mxu0 0.0
      %3996 = vmatmul.mubr.f32.gmra.mrb[0].mxu0 %v3901
      %v3997 = vpop.f32.mrb[0].mxu0
      %v3998 = vadd.f32 0.0, %v3997
      %v3999 = vpop.f32.mrb[0].mxu0
      %4000 = vmatprep.mubr.f32.mxu0 0.0
      %4001 = vmatmul.mubr.f32.gmra.mrb[0].mxu0 %v3904
      %v4002 = vpop.f32.mrb[0].mxu0
      %v4003 = vadd.f32 0.0, %v4002
      %v4004 = vpop.f32.mrb[0].mxu0
      %4005 = vmatprep.mubr.f32.mxu0 0.0
      %4006 = vmatmul.mubr.f32.gmra.mrb[0].mxu0 %v3907
      %v4007 = vpop.f32.mrb[0].mxu0
      %v4008 = vadd.f32 0.0, %v4007
      %v4009 = vpop.f32.mrb[0].mxu0
      %4010 = vmatprep.mubr.f32.mxu0 0.0
      %4011 = vmatmul.mubr.f32.gmra.mrb[0].mxu0 %v3910
      %v4012 = vpop.f32.mrb[0].mxu0
      %v4013 = vadd.f32 0.0, %v4012
      %v4014 = vpop.f32.mrb[0].mxu0
      %4015 = vmatprep.mubr.f32.mxu0 0.0
      %4016 = vmatmul.mubr.f32.gmra.mrb[0].mxu0 %v3913
      %v4017 = vpop.f32.mrb[0].mxu0
      %v4018 = vadd.f32 0.0, %v4017
      %v4019 = vpop.f32.mrb[0].mxu0
      %4020 = vmatprep.mubr.f32.mxu0 0.0
      %4021 = vmatmul.mubr.f32.gmra.mrb[0].mxu0 %v3916
      %v4022 = vpop.f32.mrb[0].mxu0
      %v4023 = vadd.f32 0.0, %v4022
      %v4024 = vpop.f32.mrb[0].mxu0
      %4025 = vdwg.mxu0
      %v4026 = vadd.f32 %v3874, %v3988
      %v4027 = vadd.f32 %v3875, %v3993
      %v4028 = vadd.f32 %v3876, %v3998
      %v4029 = vadd.f32 %v3877, %v4003
      %v4030 = vadd.f32 %v3878, %v4008
      %v4031 = vadd.f32 %v3879, %v4013
      %v4032 = vadd.f32 %v3880, %v4018
      %v4033 = vadd.f32 %v3881, %v4023
      %v4034 = vld [vmem:[%s3883 + $0x1] sm:$0xff]
      %v4035 = vld [vmem:[%s3883 + $0x11] sm:$0xff]
      %v4036 = vld [vmem:[%s3883 + $0x21] sm:$0xff]
      %v4037 = vld [vmem:[%s3883 + $0x31] sm:$0xff]
      %v4038 = vld [vmem:[%s3883 + $0x41] sm:$0xff]
      %v4039 = vld [vmem:[%s3883 + $0x51] sm:$0xff]
      %v4040 = vld [vmem:[%s3883 + $0x61] sm:$0xff]
      %v4041 = vld [vmem:[%s3883 + $0x71] sm:$0xff]
      %s4042 = scalar_lea.vmem %s1, 100
      %v4043 = vld [vmem:[%s4042] sm:$0xf]
      %v4045 = vsel %vm300, %v4034, 0
      %v4048 = vsel %vm300, %v4035, 0
      %v4051 = vsel %vm300, %v4036, 0
      %v4054 = vsel %vm300, %v4037, 0
      %v4057 = vsel %vm300, %v4038, 0
      %v4060 = vsel %vm300, %v4039, 0
      %v4063 = vsel %vm300, %v4040, 0
      %v4066 = vsel %vm300, %v4041, 0
      %v4069 = vsel %vm325, %v4043, 0
      %4071 = vmatprep.subr.mxu0 0.0
      %4072 = vmatpush1.msra.mxu0 %v4069
      %4073 = vmatprep.subr.mxu0 0.0
      %4074 = vmatpush1.msra.mxu0 0.0
      %4075 = vmatprep.subr.mxu0 0.0
      %4076 = vmatpush1.msra.mxu0 0.0
      %4077 = vmatprep.subr.mxu0 0.0
      %4078 = vmatpush1.msra.mxu0 0.0
      %4079 = vmatprep.subr.mxu0 0.0
      %4080 = vmatpush1.msra.mxu0 0.0
      %4081 = vmatprep.subr.mxu0 0.0
      %4082 = vmatpush1.msra.mxu0 0.0
      %4083 = vmatprep.subr.mxu0 0.0
      %4084 = vmatpush1.msra.mxu0 0.0
      %4085 = vmatprep.subr.mxu0 0.0
      %4086 = vmatpush1.msra.mxu0 0.0
      %4087 = vmatprep.subr.mxu0 0.0
      %4088 = vmatpush1.msra.mxu0 0.0
      %4089 = vmatprep.subr.mxu0 0.0
      %4090 = vmatpush1.msra.mxu0 0.0
      %4091 = vmatprep.subr.mxu0 0.0
      %4092 = vmatpush1.msra.mxu0 0.0
      %4093 = vmatprep.subr.mxu0 0.0
      %4094 = vmatpush1.msra.mxu0 0.0
      %4095 = vmatprep.subr.mxu0 0.0
      %4096 = vmatpush1.msra.mxu0 0.0
      %4097 = vmatprep.subr.mxu0 0.0
      %4098 = vmatpush1.msra.mxu0 0.0
      %4099 = vmatprep.subr.mxu0 0.0
      %4100 = vmatpush1.msra.mxu0 0.0
      %4101 = vmatprep.subr.mxu0 0.0
      %4102 = vmatpush1.msra.mxu0 0.0
      %4103 = vmatprep.subr.mxu0 0.0
      %4104 = vmatpush1.msra.mxu0 0.0
      %4105 = vmatprep.subr.mxu0 0.0
      %4106 = vmatpush1.msra.mxu0 0.0
      %4107 = vmatprep.subr.mxu0 0.0
      %4108 = vmatpush1.msra.mxu0 0.0
      %4109 = vmatprep.subr.mxu0 0.0
      %4110 = vmatpush1.msra.mxu0 0.0
      %4111 = vmatprep.subr.mxu0 0.0
      %4112 = vmatpush1.msra.mxu0 0.0
      %4113 = vmatprep.subr.mxu0 0.0
      %4114 = vmatpush1.msra.mxu0 0.0
      %4115 = vmatprep.subr.mxu0 0.0
      %4116 = vmatpush1.msra.mxu0 0.0
      %4117 = vmatprep.subr.mxu0 0.0
      %4118 = vmatpush1.msra.mxu0 0.0
      %4119 = vmatprep.subr.mxu0 0.0
      %4120 = vmatpush1.msra.mxu0 0.0
      %4121 = vmatprep.subr.mxu0 0.0
      %4122 = vmatpush1.msra.mxu0 0.0
      %4123 = vmatprep.subr.mxu0 0.0
      %4124 = vmatpush1.msra.mxu0 0.0
      %4125 = vmatprep.subr.mxu0 0.0
      %4126 = vmatpush1.msra.mxu0 0.0
      %4127 = vmatprep.subr.mxu0 0.0
      %4128 = vmatpush1.msra.mxu0 0.0
      %4129 = vmatprep.subr.mxu0 0.0
      %4130 = vmatpush1.msra.mxu0 0.0
      %4131 = vmatprep.subr.mxu0 0.0
      %4132 = vmatpush1.msra.mxu0 0.0
      %4133 = vmatprep.subr.mxu0 0.0
      %4134 = vmatpush1.msra.mxu0 0.0
      %4135 = vmatprep.mubr.f32.mxu0 0.0
      %4136 = vmatmul.mubr.f32.gmra.mrb[0].mxu0 %v4045
      %v4137 = vpop.f32.mrb[0].mxu0
      %v4138 = vadd.f32 0.0, %v4137
      %v4139 = vpop.f32.mrb[0].mxu0
      %4140 = vmatprep.mubr.f32.mxu0 0.0
      %4141 = vmatmul.mubr.f32.gmra.mrb[0].mxu0 %v4048
      %v4142 = vpop.f32.mrb[0].mxu0
      %v4143 = vadd.f32 0.0, %v4142
      %v4144 = vpop.f32.mrb[0].mxu0
      %4145 = vmatprep.mubr.f32.mxu0 0.0
      %4146 = vmatmul.mubr.f32.gmra.mrb[0].mxu0 %v4051
      %v4147 = vpop.f32.mrb[0].mxu0
      %v4148 = vadd.f32 0.0, %v4147
      %v4149 = vpop.f32.mrb[0].mxu0
      %4150 = vmatprep.mubr.f32.mxu0 0.0
      %4151 = vmatmul.mubr.f32.gmra.mrb[0].mxu0 %v4054
      %v4152 = vpop.f32.mrb[0].mxu0
      %v4153 = vadd.f32 0.0, %v4152
      %v4154 = vpop.f32.mrb[0].mxu0
      %4155 = vmatprep.mubr.f32.mxu0 0.0
      %4156 = vmatmul.mubr.f32.gmra.mrb[0].mxu0 %v4057
      %v4157 = vpop.f32.mrb[0].mxu0
      %v4158 = vadd.f32 0.0, %v4157
      %v4159 = vpop.f32.mrb[0].mxu0
      %4160 = vmatprep.mubr.f32.mxu0 0.0
      %4161 = vmatmul.mubr.f32.gmra.mrb[0].mxu0 %v4060
      %v4162 = vpop.f32.mrb[0].mxu0
      %v4163 = vadd.f32 0.0, %v4162
      %v4164 = vpop.f32.mrb[0].mxu0
      %4165 = vmatprep.mubr.f32.mxu0 0.0
      %4166 = vmatmul.mubr.f32.gmra.mrb[0].mxu0 %v4063
      %v4167 = vpop.f32.mrb[0].mxu0
      %v4168 = vadd.f32 0.0, %v4167
      %v4169 = vpop.f32.mrb[0].mxu0
      %4170 = vmatprep.mubr.f32.mxu0 0.0
      %4171 = vmatmul.mubr.f32.gmra.mrb[0].mxu0 %v4066
      %v4172 = vpop.f32.mrb[0].mxu0
      %v4173 = vadd.f32 0.0, %v4172
      %v4174 = vpop.f32.mrb[0].mxu0
      %4175 = vdwg.mxu0
      %v4176 = vadd.f32 %v4026, %v4138
      %v4177 = vadd.f32 %v4027, %v4143
      %v4178 = vadd.f32 %v4028, %v4148
      %v4179 = vadd.f32 %v4029, %v4153
      %v4180 = vadd.f32 %v4030, %v4158
      %v4181 = vadd.f32 %v4031, %v4163
      %v4182 = vadd.f32 %v4032, %v4168
      %v4183 = vadd.f32 %v4033, %v4173
      %v4184 = vld [vmem:[%s3883 + $0x2] sm:$0xff]
      %v4185 = vld [vmem:[%s3883 + $0x12] sm:$0xff]
      %v4186 = vld [vmem:[%s3883 + $0x22] sm:$0xff]
      %v4187 = vld [vmem:[%s3883 + $0x32] sm:$0xff]
      %v4188 = vld [vmem:[%s3883 + $0x42] sm:$0xff]
      %v4189 = vld [vmem:[%s3883 + $0x52] sm:$0xff]
      %v4190 = vld [vmem:[%s3883 + $0x62] sm:$0xff]
      %v4191 = vld [vmem:[%s3883 + $0x72] sm:$0xff]
      %s4192 = scalar_lea.vmem %s1, 104
      %v4193 = vld [vmem:[%s4192] sm:$0xf]
      %v4195 = vsel %vm300, %v4184, 0
      %v4198 = vsel %vm300, %v4185, 0
      %v4201 = vsel %vm300, %v4186, 0
      %v4204 = vsel %vm300, %v4187, 0
      %v4207 = vsel %vm300, %v4188, 0
      %v4210 = vsel %vm300, %v4189, 0
      %v4213 = vsel %vm300, %v4190, 0
      %v4216 = vsel %vm300, %v4191, 0
      %v4219 = vsel %vm325, %v4193, 0
      %4221 = vmatprep.subr.mxu0 0.0
      %4222 = vmatpush1.msra.mxu0 %v4219
      %4223 = vmatprep.subr.mxu0 0.0
      %4224 = vmatpush1.msra.mxu0 0.0
      %4225 = vmatprep.subr.mxu0 0.0
      %4226 = vmatpush1.msra.mxu0 0.0
      %4227 = vmatprep.subr.mxu0 0.0
      %4228 = vmatpush1.msra.mxu0 0.0
      %4229 = vmatprep.subr.mxu0 0.0
      %4230 = vmatpush1.msra.mxu0 0.0
      %4231 = vmatprep.subr.mxu0 0.0
      %4232 = vmatpush1.msra.mxu0 0.0
      %4233 = vmatprep.subr.mxu0 0.0
      %4234 = vmatpush1.msra.mxu0 0.0
      %4235 = vmatprep.subr.mxu0 0.0
      %4236 = vmatpush1.msra.mxu0 0.0
      %4237 = vmatprep.subr.mxu0 0.0
      %4238 = vmatpush1.msra.mxu0 0.0
      %4239 = vmatprep.subr.mxu0 0.0
      %4240 = vmatpush1.msra.mxu0 0.0
      %4241 = vmatprep.subr.mxu0 0.0
      %4242 = vmatpush1.msra.mxu0 0.0
      %4243 = vmatprep.subr.mxu0 0.0
      %4244 = vmatpush1.msra.mxu0 0.0
      %4245 = vmatprep.subr.mxu0 0.0
      %4246 = vmatpush1.msra.mxu0 0.0
      %4247 = vmatprep.subr.mxu0 0.0
      %4248 = vmatpush1.msra.mxu0 0.0
      %4249 = vmatprep.subr.mxu0 0.0
      %4250 = vmatpush1.msra.mxu0 0.0
      %4251 = vmatprep.subr.mxu0 0.0
      %4252 = vmatpush1.msra.mxu0 0.0
      %4253 = vmatprep.subr.mxu0 0.0
      %4254 = vmatpush1.msra.mxu0 0.0
      %4255 = vmatprep.subr.mxu0 0.0
      %4256 = vmatpush1.msra.mxu0 0.0
      %4257 = vmatprep.subr.mxu0 0.0
      %4258 = vmatpush1.msra.mxu0 0.0
      %4259 = vmatprep.subr.mxu0 0.0
      %4260 = vmatpush1.msra.mxu0 0.0
      %4261 = vmatprep.subr.mxu0 0.0
      %4262 = vmatpush1.msra.mxu0 0.0
      %4263 = vmatprep.subr.mxu0 0.0
      %4264 = vmatpush1.msra.mxu0 0.0
      %4265 = vmatprep.subr.mxu0 0.0
      %4266 = vmatpush1.msra.mxu0 0.0
      %4267 = vmatprep.subr.mxu0 0.0
      %4268 = vmatpush1.msra.mxu0 0.0
      %4269 = vmatprep.subr.mxu0 0.0
      %4270 = vmatpush1.msra.mxu0 0.0
      %4271 = vmatprep.subr.mxu0 0.0
      %4272 = vmatpush1.msra.mxu0 0.0
      %4273 = vmatprep.subr.mxu0 0.0
      %4274 = vmatpush1.msra.mxu0 0.0
      %4275 = vmatprep.subr.mxu0 0.0
      %4276 = vmatpush1.msra.mxu0 0.0
      %4277 = vmatprep.subr.mxu0 0.0
      %4278 = vmatpush1.msra.mxu0 0.0
      %4279 = vmatprep.subr.mxu0 0.0
      %4280 = vmatpush1.msra.mxu0 0.0
      %4281 = vmatprep.subr.mxu0 0.0
      %4282 = vmatpush1.msra.mxu0 0.0
      %4283 = vmatprep.subr.mxu0 0.0
      %4284 = vmatpush1.msra.mxu0 0.0
      %4285 = vmatprep.mubr.f32.mxu0 0.0
      %4286 = vmatmul.mubr.f32.gmra.mrb[0].mxu0 %v4195
      %v4287 = vpop.f32.mrb[0].mxu0
      %v4288 = vadd.f32 0.0, %v4287
      %v4289 = vpop.f32.mrb[0].mxu0
      %4290 = vmatprep.mubr.f32.mxu0 0.0
      %4291 = vmatmul.mubr.f32.gmra.mrb[0].mxu0 %v4198
      %v4292 = vpop.f32.mrb[0].mxu0
      %v4293 = vadd.f32 0.0, %v4292
      %v4294 = vpop.f32.mrb[0].mxu0
      %4295 = vmatprep.mubr.f32.mxu0 0.0
      %4296 = vmatmul.mubr.f32.gmra.mrb[0].mxu0 %v4201
      %v4297 = vpop.f32.mrb[0].mxu0
      %v4298 = vadd.f32 0.0, %v4297
      %v4299 = vpop.f32.mrb[0].mxu0
      %4300 = vmatprep.mubr.f32.mxu0 0.0
      %4301 = vmatmul.mubr.f32.gmra.mrb[0].mxu0 %v4204
      %v4302 = vpop.f32.mrb[0].mxu0
      %v4303 = vadd.f32 0.0, %v4302
      %v4304 = vpop.f32.mrb[0].mxu0
      %4305 = vmatprep.mubr.f32.mxu0 0.0
      %4306 = vmatmul.mubr.f32.gmra.mrb[0].mxu0 %v4207
      %v4307 = vpop.f32.mrb[0].mxu0
      %v4308 = vadd.f32 0.0, %v4307
      %v4309 = vpop.f32.mrb[0].mxu0
      %4310 = vmatprep.mubr.f32.mxu0 0.0
      %4311 = vmatmul.mubr.f32.gmra.mrb[0].mxu0 %v4210
      %v4312 = vpop.f32.mrb[0].mxu0
      %v4313 = vadd.f32 0.0, %v4312
      %v4314 = vpop.f32.mrb[0].mxu0
      %4315 = vmatprep.mubr.f32.mxu0 0.0
      %4316 = vmatmul.mubr.f32.gmra.mrb[0].mxu0 %v4213
      %v4317 = vpop.f32.mrb[0].mxu0
      %v4318 = vadd.f32 0.0, %v4317
      %v4319 = vpop.f32.mrb[0].mxu0
      %4320 = vmatprep.mubr.f32.mxu0 0.0
      %4321 = vmatmul.mubr.f32.gmra.mrb[0].mxu0 %v4216
      %v4322 = vpop.f32.mrb[0].mxu0
      %v4323 = vadd.f32 0.0, %v4322
      %v4324 = vpop.f32.mrb[0].mxu0
      %4325 = vdwg.mxu0
      %v4326 = vadd.f32 %v4176, %v4288
      %v4327 = vadd.f32 %v4177, %v4293
      %v4328 = vadd.f32 %v4178, %v4298
      %v4329 = vadd.f32 %v4179, %v4303
      %v4330 = vadd.f32 %v4180, %v4308
      %v4331 = vadd.f32 %v4181, %v4313
      %v4332 = vadd.f32 %v4182, %v4318
      %v4333 = vadd.f32 %v4183, %v4323
      %v4334 = vld [vmem:[%s2] sm:$0x1]
      %v4336 = vlaneseq
      %v4337 = vshrl.u32 %v4336, 7
      %v4338 = vsub.s32 0, %v4337
      %v4339 = vrot.slane %v4334, %v4338
      %v4341 = vadd.f32 %v4326, %v4339
      %v4342 = vadd.f32 %v4327, %v4339
      %v4343 = vadd.f32 %v4328, %v4339
      %v4344 = vadd.f32 %v4329, %v4339
      %v4345 = vadd.f32 %v4330, %v4339
      %v4346 = vadd.f32 %v4331, %v4339
      %v4347 = vadd.f32 %v4332, %v4339
      %v4348 = vadd.f32 %v4333, %v4339
      %4349 = vst [vmem:[%s269] sm:$0xff] %v4341
      %4350 = vst [vmem:[%s269 + $0x8] sm:$0xff] %v4342
      %4351 = vst [vmem:[%s269 + $0x10] sm:$0xff] %v4343
      %4352 = vst [vmem:[%s269 + $0x18] sm:$0xff] %v4344
      %4353 = vst [vmem:[%s269 + $0x20] sm:$0xff] %v4345
      %4354 = vst [vmem:[%s269 + $0x28] sm:$0xff] %v4346
      %4355 = vst [vmem:[%s269 + $0x30] sm:$0xff] %v4347
      %4356 = vst [vmem:[%s269 + $0x38] sm:$0xff] %v4348
      %v4357 = vld [vmem:[%s6] sm:$0x1]
      %v4358 = vadd.f32 %v4341, %v4342
      %v4359 = vadd.f32 %v4358, %v4343
      %v4360 = vadd.f32 %v4359, %v4344
      %v4361 = vadd.f32 %v4360, %v4345
      %v4362 = vadd.f32 %v4361, %v4346
      %v4363 = vadd.f32 %v4362, %v4347
      %v4364 = vadd.f32 %v4363, %v4348
      %v4365 = vrot.slane %v4364, 4
      %v4366 = vadd.f32 %v4364, %v4365
      %v4367 = vrot.slane %v4366, 2
      %v4368 = vadd.f32 %v4366, %v4367
      %v4369 = vrot.slane %v4368, 1
      %v4370 = vadd.f32 %v4368, %v4369
      %v4371 = vadd.f32 %v4357, %v4370
      %4372 = vst [vmem:[%s6] sm:$0x1] %v4371
      %v4373 = vld [vmem:[%s6 + $0x1] sm:$0x1]
      %v4374 = vmul.f32 %v4341, %v4341
      %v4375 = vmul.f32 %v4342, %v4342
      %v4376 = vmul.f32 %v4343, %v4343
      %v4377 = vmul.f32 %v4344, %v4344
      %v4378 = vmul.f32 %v4345, %v4345
      %v4379 = vmul.f32 %v4346, %v4346
      %v4380 = vmul.f32 %v4347, %v4347
      %v4381 = vmul.f32 %v4348, %v4348
      %v4382 = vadd.f32 %v4374, %v4375
      %v4383 = vadd.f32 %v4382, %v4376
      %v4384 = vadd.f32 %v4383, %v4377
      %v4385 = vadd.f32 %v4384, %v4378
      %v4386 = vadd.f32 %v4385, %v4379
      %v4387 = vadd.f32 %v4386, %v4380
      %v4388 = vadd.f32 %v4387, %v4381
      %v4389 = vrot.slane %v4388, 4
      %v4390 = vadd.f32 %v4388, %v4389
      %v4391 = vrot.slane %v4390, 2
      %v4392 = vadd.f32 %v4390, %v4391
      %v4393 = vrot.slane %v4392, 1
      %v4394 = vadd.f32 %v4392, %v4393
      %v4395 = vadd.f32 %v4373, %v4394
      %4396 = vst [vmem:[%s6 + $0x1] sm:$0x1] %v4395
      %p4397 = scmp.eq.s32.totalorder %s22, 1
      %p4398 = scmp.eq.s32.totalorder %s23, 7
      %p4399 = pnand %p4397, %p4398
      %p4400 = pneg %p4399
      // Predicated region
      $region45: #{conv_dropout_norm_nonlin.2} parent=39 // pred_check
        _
      $region46: #{conv_dropout_norm_nonlin.2} parent=39 // pred_check_branch
        %4402 = sbr.rel (%p4399) target = $region48
      $region47: #{conv_dropout_norm_nonlin.2} parent=39 // pred_region
        %v4403 = vld [vmem:[%s6] sm:$0x1]
        %v4404 = vmul.f32 %v4403, 0.0009765625
        %v4405 = vld [vmem:[%s6 + $0x1] sm:$0x1]
        %v4406 = vmul.f32 %v4405, 0.0009765625
        %v4407 = vmul.f32 %v4404, %v4404
        %v4408 = vsub.f32 %v4406, %v4407
        %v4409 = vld [vmem:[%s3] sm:$0x1]
        %v4410 = vadd.f32 %v4408, 1e-05
        %v4411 = vrsqrt.pop %v4410
        %v4412 = vmul.f32 %v4409, %v4411
        %v4413 = vld [vmem:[%s4] sm:$0x1]
        %v4414 = vmul.f32 %v4404, %v4412
        %v4415 = vsub.f32 %v4413, %v4414
        %4416 = vst [vmem:[%s6] sm:$0x1] %v4412
        %4417 = vst [vmem:[%s6 + $0x1] sm:$0x1] %v4415
      $region48: #{conv_dropout_norm_nonlin.2} parent=39 // pred_fallthru
        _
      %s4418 = smul.u32 %s22, 8
      %s4419 = sadd.s32 %s4418, %s23
      %p4420 = scmp.lt.s32.totalorder %s4419, 15
      %s4421 = scalar_select %p4420, %s4419, 15
      %s4422 = smul.addr %s4421, 8
      %s4423 = smul.addr %s4422, 8
      %s4424 = scalar_lea.vmem %s5, %s4423
      // Predicated region
      $region49: #{conv_dropout_norm_nonlin.2} parent=39 // pred_check
        %p4425 = pneg %p162
      $region50: #{conv_dropout_norm_nonlin.2} parent=39 // pred_check_branch
        %4427 = sbr.rel (%p4425) target = $region52
      $region51: #{conv_dropout_norm_nonlin.2} parent=39 // pred_region
        %s4428 = smul.u32 %s22, 8
        %s4429 = sadd.s32 %s4428, %s23
      $region52: #{conv_dropout_norm_nonlin.2} parent=39 // pred_fallthru
        _
      // Predicated region
      $region53: #{conv_dropout_norm_nonlin.2} parent=39 // pred_check
        %p4430 = pneg %p183
      $region54: #{conv_dropout_norm_nonlin.2} parent=39 // pred_check_branch
        %4432 = sbr.rel (%p4430) target = $region56
      $region55: #{conv_dropout_norm_nonlin.2} parent=39 // pred_region
        _
      $region56: #{conv_dropout_norm_nonlin.2} parent=39 // pred_fallthru
        _
      // Predicated region
      $region57: #{conv_dropout_norm_nonlin.2} parent=39 // pred_check
        %p4433 = pneg %p183
      $region58: #{conv_dropout_norm_nonlin.2} parent=39 // pred_check_branch
        %4435 = sbr.rel (%p4433) target = $region60
      $region59: #{conv_dropout_norm_nonlin.2} parent=39 // pred_region
        _
      $region60: #{conv_dropout_norm_nonlin.2} parent=39 // pred_fallthru
        _
    $region40: #{conv_dropout_norm_nonlin.2} parent=5 // pred_fallthru
      _
    %p4436 = scmp.le.s32.totalorder 2, %s13
    // Predicated region
    $region61: #{conv_dropout_norm_nonlin.2} parent=5 // pred_check
      %p4437 = pneg %p4436
    $region62: #{conv_dropout_norm_nonlin.2} parent=5 // pred_check_branch
      %4439 = sbr.rel (%p4437) target = $region64
    $region63: #{conv_dropout_norm_nonlin.2} parent=5 // pred_region
      %s4440 = ssub.s32 %s13, 2
      // Predicated region
      $region65: #{conv_dropout_norm_nonlin.2} parent=63 // pred_check
        %p4441 = pneg %p168
      $region66: #{conv_dropout_norm_nonlin.2} parent=63 // pred_check_branch
        %4443 = sbr.rel (%p4441) target = $region68
      $region67: #{conv_dropout_norm_nonlin.2} parent=63 // pred_region
        %s4444 = smul.u32 %s24, 8
        %s4445 = sadd.s32 %s4444, %s25
        %p4446 = scmp.lt.s32.totalorder %s4445, 15
        %s4447 = scalar_select %p4446, %s4445, 15
        %s4448 = smul.addr %s4447, 8
        %s4449 = smul.addr %s4448, 8
        %s4450 = scalar_lea.vmem %s5, %s4449
      $region68: #{conv_dropout_norm_nonlin.2} parent=63 // pred_fallthru
        _
    $region64: #{conv_dropout_norm_nonlin.2} parent=5 // pred_fallthru
      _
  $region6: #{conv_dropout_norm_nonlin.2} parent=0 // loop_footer
    %s17 = sadd.s32 1, %s13
  $region7: #{conv_dropout_norm_nonlin.2} parent=0 // loop_footer_branch
    %12 = sbr.rel target = $region3
  $region8: #{conv_dropout_norm_nonlin.2} parent=0 // loop_exit
    _

</llo_original>
